<compile_context>
chip_gen: v5e
topology: v5e:2x2
jax: 0.10.0
libtpu: 0.0.40
codegen_flags: <defaults>
</compile_context>

<pallas_src>
import jax
import jax.numpy as jnp
from jax.experimental import pallas as pl
from jax.experimental.pallas import tpu as pltpu

LANE = 128          # vreg lane width
_DEFAULT_TB = 512   # MXU-aligned default batch tile; fits scoped VMEM on all gens

# Sticky flag: whether this build accepts pipeline_mode=pl.Buffered(1) on
# grid-invariant inputs of the main pallas_call pipeline.
_SINGLE_BUFFER_WEIGHTS = [True]


def _round_up(x, m):
    return (x + m - 1) // m * m


def _sublane_rows(dtype):
    """Rows per sublane-packed vreg tile: 8 (f32), 16 (bf16), 32 (int8/fp8)."""
    return 8 * max(1, 4 // jnp.dtype(dtype).itemsize)


def _num_tensorcores():
    """Best-effort TensorCore count per chip (2 on v7x, else 1). Defensive."""
    try:
        info = pltpu.get_tpu_info()
        for attr in ("num_cores", "tensorcores_per_chip", "num_tensorcores",
                     "cores_per_chip"):
            n = getattr(info, attr, None)
            if isinstance(n, int) and n >= 1:
                return n
    except Exception:
        pass
    return 1


def mlp_kernel(x_ref, w1_ref, b1_ref, w2_ref, b2_ref, w3_ref, b3_ref, o_ref):
    # fc1 + ReLU.  Matmul operands may be bf16 (MXU rate); accumulation and
    # the bias/ReLU math are always f32 on the VPU.
    h1 = jnp.dot(x_ref[...], w1_ref[...],
                 preferred_element_type=jnp.float32) + b1_ref[...]
    h1 = jnp.maximum(h1, 0.0)
    # fc2 + ReLU (cast the f32 activation back to the weight dtype so the MXU
    # sees matching low-precision operands when bf16 is enabled).
    h2 = jnp.dot(h1.astype(w2_ref.dtype), w2_ref[...],
                 preferred_element_type=jnp.float32) + b2_ref[...]
    h2 = jnp.maximum(h2, 0.0)
    # fc3 (lane-padded output width, no activation).
    out = jnp.dot(h2.astype(w3_ref.dtype), w3_ref[...],
                  preferred_element_type=jnp.float32) + b3_ref[...]
    o_ref[...] = out.astype(o_ref.dtype)


def prepare_params(params, *, mxu_dtype=None):
    """One-time weight prep (hoisted out of the per-call path).

    Pads the final layer to a lane-dense width (num_classes -> multiple of 128,
    exact: padded columns are zero) and optionally casts the three weight
    matrices to a low-precision MXU operand dtype (e.g. bf16 on v6e/v7x).
    Biases stay f32 (bias-add / ReLU run on the VPU in f32).
    Returns (prepared_params, num_classes).
    """
    w1, b1, w2, b2, w3, b3 = params
    num_classes = w3.shape[1]
    c_pad = _round_up(num_classes, LANE)
    if c_pad != num_classes:
        w3 = jnp.pad(w3, ((0, 0), (0, c_pad - num_classes)))
        b3 = jnp.pad(b3, ((0, 0), (0, c_pad - num_classes)))
    if mxu_dtype is not None:
        w1 = w1.astype(mxu_dtype)
        w2 = w2.astype(mxu_dtype)
        w3 = w3.astype(mxu_dtype)
        # TODO(synk): fp8 (e4m3) weights for w1/w2 on v7x would halve the
        # weight HBM stream again; keep w3 and accumulation in >= bf16.
    return (w1, b1, w2, b2, w3, b3), num_classes


def similarity_network_forward(x, prepared, num_classes, *, tb=_DEFAULT_TB,
                               num_cores=None):
    """Fused 3-layer MLP forward. `prepared` comes from prepare_params()."""
    w1, b1, w2, b2, w3, b3 = prepared
    B, D = x.shape
    assert D == w1.shape[0], "input feature dim mismatch"
    H1, H2, C_pad = w1.shape[1], w2.shape[1], w3.shape[1]
    out_dtype = x.dtype

    # Per-call activation cast only (weights were cast once in prepare_params).
    if x.dtype != w1.dtype:
        x = x.astype(w1.dtype)

    sub = _sublane_rows(x.dtype)
    cores = _num_tensorcores() if num_cores is None else num_cores

    # ---- batch tiling: single pad, sublane-packed, MXU/TC aware ------------
    tb = min(max(tb, sub), 1024)
    B_sub = _round_up(B, sub)
    tb_eff = min(tb, B_sub)
    if cores >= 2 and B_sub >= 2 * 256:
        # One 256-aligned M tile per TensorCore (v7x); never applied on 1-TC chips.
        tb_eff = min(tb_eff, _round_up(pl.cdiv(B_sub, 2), 256))
    tb_eff = _round_up(tb_eff, sub)
    B_pad = _round_up(B, tb_eff)
    if B_pad != B:
        x = jnp.pad(x, ((0, B_pad - B), (0, 0)))   # single per-call pad (batch only)
    grid = B_pad // tb_eff

    flops = 2 * B_pad * (D * H1 + H1 * H2 + H2 * C_pad)
    bytes_accessed = sum(int(a.size) * a.dtype.itemsize
                         for a in (x, w1, b1, w2, b2, w3, b3))
    bytes_accessed += B_pad * C_pad * jnp.dtype(out_dtype).itemsize

    def call(single_buffer_weights):
        def wspec(shape):
            # Grid-invariant weights/biases: fetched once, stay VMEM-resident.
            if single_buffer_weights:
                return pl.BlockSpec(shape, lambda i: (0, 0),
                                    pipeline_mode=pl.Buffered(1))
            return pl.BlockSpec(shape, lambda i: (0, 0))

        return pl.pallas_call(
            mlp_kernel,
            out_shape=jax.ShapeDtypeStruct((B_pad, C_pad), out_dtype),
            grid_spec=pltpu.PrefetchScalarGridSpec(
                num_scalar_prefetch=0,
                grid=(grid,),
                in_specs=[
                    pl.BlockSpec((tb_eff, D), lambda i: (i, 0)),  # x tile
                    wspec((D, H1)), wspec((1, H1)),               # fc1
                    wspec((H1, H2)), wspec((1, H2)),              # fc2
                    wspec((H2, C_pad)), wspec((1, C_pad)),        # fc3
                ],
                out_specs=pl.BlockSpec((tb_eff, C_pad), lambda i: (i, 0)),
            ),
            compiler_params=pltpu.CompilerParams(
                dimension_semantics=("parallel",)),
            cost_estimate=pl.CostEstimate(
                flops=flops, transcendentals=0,
                bytes_accessed=bytes_accessed),
        )(x, w1, b1, w2, b2, w3, b3)

    if _SINGLE_BUFFER_WEIGHTS[0]:
        try:
            out = call(True)
        except Exception:
            # This build's main pipeline rejects Buffered(1); fall back to the
            # default double-buffered weight specs (correctness identical).
            _SINGLE_BUFFER_WEIGHTS[0] = False
            out = call(False)
    else:
        out = call(False)

    return out[:B, :num_classes]


def init_params(key, input_size, num_classes):
    """Deterministic init mimicking nn.Linear's default U(-1/sqrt(in), 1/sqrt(in))."""
    def linear(key, fan_in, fan_out):
        kw, kb = jax.random.split(key)
        bound = 1.0 / jnp.sqrt(fan_in)
        w = jax.random.uniform(kw, (fan_in, fan_out), jnp.float32, -bound, bound)
        b = jax.random.uniform(kb, (1, fan_out), jnp.float32, -bound, bound)
        return w, b

    k1, k2, k3 = jax.random.split(key, 3)
    w1, b1 = linear(k1, input_size, 1024)
    w2, b2 = linear(k2, 1024, 512)
    w3, b3 = linear(k3, 512, num_classes)
    return (w1, b1, w2, b2, w3, b3)


def reference_forward(x, params):
    w1, b1, w2, b2, w3, b3 = params
    h1 = jnp.maximum(x @ w1 + b1, 0.0)
    h2 = jnp.maximum(h1 @ w2 + b2, 0.0)
    return h2 @ w3 + b3


if __name__ == "__main__":
    input_size = 64
    num_classes = 10
    batch = 16

    key = jax.random.PRNGKey(0)
    kx, kp = jax.random.split(key)
    x = jax.random.normal(kx, (batch, input_size), jnp.float32)
    params = init_params(kp, input_size, num_classes)

    ref = reference_forward(x, params)

    # One-time weight prep (hoisted): f32 path and bf16-MXU-operand path.
    prep_f32, nc = prepare_params(params)
    prep_bf16, _ = prepare_params(params, mxu_dtype=jnp.bfloat16)

    # f32 path (exact vs reference).
    out = jax.block_until_ready(similarity_network_forward(x, prep_f32, nc))
    assert out.shape == (batch, num_classes)
    assert jnp.allclose(out, ref, atol=1e-4, rtol=1e-4), "f32 mismatch vs reference"

    # bf16 MXU-operand path (v6e/v7x) — f32 accumulation, looser tolerance.
    out_bf16 = jax.block_until_ready(
        similarity_network_forward(x, prep_bf16, nc))
    assert out_bf16.shape == (batch, num_classes)
    assert jnp.allclose(out_bf16, ref, atol=3e-2, rtol=3e-2), "bf16 mismatch vs reference"

    # Non-tile-multiple batch exercises the zero-pad + slice path.
    x_odd = jax.random.normal(kx, (batch - 3, input_size), jnp.float32)
    out_odd = jax.block_until_ready(
        similarity_network_forward(x_odd, prep_f32, nc))
    assert out_odd.shape == (batch - 3, num_classes)
    assert jnp.allclose(out_odd, reference_forward(x_odd, params),
                        atol=1e-4, rtol=1e-4), "odd-batch mismatch vs reference"

    # Forced 2-TC heuristic path (simulates v7x split) for shape coverage.
    x_big = jax.random.normal(kx, (640, input_size), jnp.float32)
    out_big = jax.block_until_ready(
        similarity_network_forward(x_big, prep_f32, nc, num_cores=2))
    assert out_big.shape == (640, num_classes)
    assert jnp.allclose(out_big, reference_forward(x_big, params),
                        atol=1e-4, rtol=1e-4), "big-batch mismatch vs reference"

    print("KERNEL_OK")
</pallas_src>

<mosaic_0001>
module attributes {stable_mosaic.version = 11 : i64} {
  func.func @mlp_kernel(%arg0: i32, %arg1: memref<16x64xf32, #tpu.memory_space<vmem>>, %arg2: memref<64x1024xf32, #tpu.memory_space<vmem>>, %arg3: memref<1x1024xf32, #tpu.memory_space<vmem>>, %arg4: memref<1024x512xf32, #tpu.memory_space<vmem>>, %arg5: memref<1x512xf32, #tpu.memory_space<vmem>>, %arg6: memref<512x128xf32, #tpu.memory_space<vmem>>, %arg7: memref<1x128xf32, #tpu.memory_space<vmem>>, %arg8: memref<16x128xf32, #tpu.memory_space<vmem>>) attributes {dimension_semantics = [#tpu.dimension_semantics<parallel>], iteration_bounds = array<i64: 1>, scalar_prefetch = 0 : i64, scratch_operands = 0 : i64, tpu.core_type = #tpu.core_type<tc>, window_params = [{transform_indices = @transform_0, window_bounds = array<i64: 16, 64>}, {pipeline_mode = #tpu.pipeline_mode<synchronous>, transform_indices = @transform_1, window_bounds = array<i64: 64, 1024>}, {pipeline_mode = #tpu.pipeline_mode<synchronous>, transform_indices = @transform_2, window_bounds = array<i64: 1, 1024>}, {pipeline_mode = #tpu.pipeline_mode<synchronous>, transform_indices = @transform_3, window_bounds = array<i64: 1024, 512>}, {pipeline_mode = #tpu.pipeline_mode<synchronous>, transform_indices = @transform_4, window_bounds = array<i64: 1, 512>}, {pipeline_mode = #tpu.pipeline_mode<synchronous>, transform_indices = @transform_5, window_bounds = array<i64: 512, 128>}, {pipeline_mode = #tpu.pipeline_mode<synchronous>, transform_indices = @transform_6, window_bounds = array<i64: 1, 128>}, {transform_indices = @transform_7, window_bounds = array<i64: 16, 128>}]} {
    %c0 = arith.constant 0 : index
    %c0_0 = arith.constant 0 : index
    %0 = vector.load %arg1[%c0, %c0_0] : memref<16x64xf32, #tpu.memory_space<vmem>>, vector<16x64xf32>
    %c0_1 = arith.constant 0 : index
    %c0_2 = arith.constant 0 : index
    %1 = vector.load %arg2[%c0_1, %c0_2] : memref<64x1024xf32, #tpu.memory_space<vmem>>, vector<64x1024xf32>
    %cst = arith.constant dense<0.000000e+00> : vector<16x1024xf32>
    %2 = tpu.matmul %0, %1, %cst {dimension_numbers = #tpu.dot_dimension_numbers<[1], [0], [0], [1], [0, 0, 1, 1], [], []>} : vector<16x64xf32>, vector<64x1024xf32>, vector<16x1024xf32> -> vector<16x1024xf32>
    %c0_3 = arith.constant 0 : index
    %c0_4 = arith.constant 0 : index
    %3 = vector.load %arg3[%c0_3, %c0_4] : memref<1x1024xf32, #tpu.memory_space<vmem>>, vector<1x1024xf32>
    %4 = vector.broadcast %3 : vector<1x1024xf32> to vector<16x1024xf32>
    %5 = arith.addf %2, %4 : vector<16x1024xf32>
    %cst_5 = arith.constant 0.000000e+00 : f32
    %6 = vector.broadcast %cst_5 : f32 to vector<16x1024xf32>
    %7 = arith.maximumf %5, %6 : vector<16x1024xf32>
    %c0_6 = arith.constant 0 : index
    %c0_7 = arith.constant 0 : index
    %8 = vector.load %arg4[%c0_6, %c0_7] : memref<1024x512xf32, #tpu.memory_space<vmem>>, vector<1024x512xf32>
    %cst_8 = arith.constant dense<0.000000e+00> : vector<16x512xf32>
    %9 = tpu.matmul %7, %8, %cst_8 {dimension_numbers = #tpu.dot_dimension_numbers<[1], [0], [0], [1], [0, 0, 1, 1], [], []>} : vector<16x1024xf32>, vector<1024x512xf32>, vector<16x512xf32> -> vector<16x512xf32>
    %c0_9 = arith.constant 0 : index
    %c0_10 = arith.constant 0 : index
    %10 = vector.load %arg5[%c0_9, %c0_10] : memref<1x512xf32, #tpu.memory_space<vmem>>, vector<1x512xf32>
    %11 = vector.broadcast %10 : vector<1x512xf32> to vector<16x512xf32>
    %12 = arith.addf %9, %11 : vector<16x512xf32>
    %cst_11 = arith.constant 0.000000e+00 : f32
    %13 = vector.broadcast %cst_11 : f32 to vector<16x512xf32>
    %14 = arith.maximumf %12, %13 : vector<16x512xf32>
    %c0_12 = arith.constant 0 : index
    %c0_13 = arith.constant 0 : index
    %15 = vector.load %arg6[%c0_12, %c0_13] : memref<512x128xf32, #tpu.memory_space<vmem>>, vector<512x128xf32>
    %cst_14 = arith.constant dense<0.000000e+00> : vector<16x128xf32>
    %16 = tpu.matmul %14, %15, %cst_14 {dimension_numbers = #tpu.dot_dimension_numbers<[1], [0], [0], [1], [0, 0, 1, 1], [], []>} : vector<16x512xf32>, vector<512x128xf32>, vector<16x128xf32> -> vector<16x128xf32>
    %c0_15 = arith.constant 0 : index
    %c0_16 = arith.constant 0 : index
    %17 = vector.load %arg7[%c0_15, %c0_16] : memref<1x128xf32, #tpu.memory_space<vmem>>, vector<1x128xf32>
    %18 = vector.broadcast %17 : vector<1x128xf32> to vector<16x128xf32>
    %19 = arith.addf %16, %18 : vector<16x128xf32>
    %c0_17 = arith.constant 0 : index
    %c0_18 = arith.constant 0 : index
    %20 = vector.load %arg8[%c0_17, %c0_18] : memref<16x128xf32, #tpu.memory_space<vmem>>, vector<16x128xf32>
    tpu.vector_store %arg8[%c0_17, %c0_18], %19 {strides = array<i32>} : memref<16x128xf32, #tpu.memory_space<vmem>>, vector<16x128xf32>,
    return
  }
  func.func @transform_0(%arg0: i32) -> (i32, i32) {
    %c0_i32 = arith.constant 0 : i32
    %c0_i32_0 = arith.constant 0 : i32
    return %arg0, %c0_i32 : i32, i32
  }
  func.func @transform_1(%arg0: i32) -> (i32, i32) {
    %c0_i32 = arith.constant 0 : i32
    %c0_i32_0 = arith.constant 0 : i32
    %c0_i32_1 = arith.constant 0 : i32
    return %c0_i32, %c0_i32_0 : i32, i32
  }
  func.func @transform_2(%arg0: i32) -> (i32, i32) {
    %c0_i32 = arith.constant 0 : i32
    %c0_i32_0 = arith.constant 0 : i32
    %c0_i32_1 = arith.constant 0 : i32
    return %c0_i32, %c0_i32_0 : i32, i32
  }
  func.func @transform_3(%arg0: i32) -> (i32, i32) {
    %c0_i32 = arith.constant 0 : i32
    %c0_i32_0 = arith.constant 0 : i32
    %c0_i32_1 = arith.constant 0 : i32
    return %c0_i32, %c0_i32_0 : i32, i32
  }
  func.func @transform_4(%arg0: i32) -> (i32, i32) {
    %c0_i32 = arith.constant 0 : i32
    %c0_i32_0 = arith.constant 0 : i32
    %c0_i32_1 = arith.constant 0 : i32
    return %c0_i32, %c0_i32_0 : i32, i32
  }
  func.func @transform_5(%arg0: i32) -> (i32, i32) {
    %c0_i32 = arith.constant 0 : i32
    %c0_i32_0 = arith.constant 0 : i32
    %c0_i32_1 = arith.constant 0 : i32
    return %c0_i32, %c0_i32_0 : i32, i32
  }
  func.func @transform_6(%arg0: i32) -> (i32, i32) {
    %c0_i32 = arith.constant 0 : i32
    %c0_i32_0 = arith.constant 0 : i32
    %c0_i32_1 = arith.constant 0 : i32
    return %c0_i32, %c0_i32_0 : i32, i32
  }
  func.func @transform_7(%arg0: i32) -> (i32, i32) {
    %c0_i32 = arith.constant 0 : i32
    %c0_i32_0 = arith.constant 0 : i32
    return %arg0, %c0_i32 : i32, i32
  }
}

module attributes {stable_mosaic.version = 11 : i64} {
  func.func @mlp_kernel(%arg0: i32, %arg1: memref<16x64xf32, #tpu.memory_space<vmem>>, %arg2: memref<64x1024xf32, #tpu.memory_space<vmem>>, %arg3: memref<1x1024xf32, #tpu.memory_space<vmem>>, %arg4: memref<1024x512xf32, #tpu.memory_space<vmem>>, %arg5: memref<1x512xf32, #tpu.memory_space<vmem>>, %arg6: memref<512x128xf32, #tpu.memory_space<vmem>>, %arg7: memref<1x128xf32, #tpu.memory_space<vmem>>, %arg8: memref<16x128xf32, #tpu.memory_space<vmem>>) attributes {dimension_semantics = [#tpu.dimension_semantics<parallel>], iteration_bounds = array<i64: 1>, scalar_prefetch = 0 : i64, scratch_operands = 0 : i64, tpu.core_type = #tpu.core_type<tc>, window_params = [{transform_indices = @transform_0, window_bounds = array<i64: 16, 64>}, {pipeline_mode = #tpu.pipeline_mode<synchronous>, transform_indices = @transform_1, window_bounds = array<i64: 64, 1024>}, {pipeline_mode = #tpu.pipeline_mode<synchronous>, transform_indices = @transform_2, window_bounds = array<i64: 1, 1024>}, {pipeline_mode = #tpu.pipeline_mode<synchronous>, transform_indices = @transform_3, window_bounds = array<i64: 1024, 512>}, {pipeline_mode = #tpu.pipeline_mode<synchronous>, transform_indices = @transform_4, window_bounds = array<i64: 1, 512>}, {pipeline_mode = #tpu.pipeline_mode<synchronous>, transform_indices = @transform_5, window_bounds = array<i64: 512, 128>}, {pipeline_mode = #tpu.pipeline_mode<synchronous>, transform_indices = @transform_6, window_bounds = array<i64: 1, 128>}, {transform_indices = @transform_7, window_bounds = array<i64: 16, 128>}]} {
    %c0 = arith.constant 0 : index
    %c0_0 = arith.constant 0 : index
    %0 = vector.load %arg1[%c0, %c0_0] : memref<16x64xf32, #tpu.memory_space<vmem>>, vector<16x64xf32>
    %c0_1 = arith.constant 0 : index
    %c0_2 = arith.constant 0 : index
    %1 = vector.load %arg2[%c0_1, %c0_2] : memref<64x1024xf32, #tpu.memory_space<vmem>>, vector<64x1024xf32>
    %cst = arith.constant dense<0.000000e+00> : vector<16x1024xf32>
    %2 = tpu.matmul %0, %1, %cst {dimension_numbers = #tpu.dot_dimension_numbers<[1], [0], [0], [1], [0, 0, 1, 1], [], []>} : vector<16x64xf32>, vector<64x1024xf32>, vector<16x1024xf32> -> vector<16x1024xf32>
    %c0_3 = arith.constant 0 : index
    %c0_4 = arith.constant 0 : index
    %3 = vector.load %arg3[%c0_3, %c0_4] : memref<1x1024xf32, #tpu.memory_space<vmem>>, vector<1x1024xf32>
    %4 = vector.broadcast %3 : vector<1x1024xf32> to vector<16x1024xf32>
    %5 = arith.addf %2, %4 : vector<16x1024xf32>
    %cst_5 = arith.constant 0.000000e+00 : f32
    %6 = vector.broadcast %cst_5 : f32 to vector<16x1024xf32>
    %7 = arith.maximumf %5, %6 : vector<16x1024xf32>
    %c0_6 = arith.constant 0 : index
    %c0_7 = arith.constant 0 : index
    %8 = vector.load %arg4[%c0_6, %c0_7] : memref<1024x512xf32, #tpu.memory_space<vmem>>, vector<1024x512xf32>
    %cst_8 = arith.constant dense<0.000000e+00> : vector<16x512xf32>
    %9 = tpu.matmul %7, %8, %cst_8 {dimension_numbers = #tpu.dot_dimension_numbers<[1], [0], [0], [1], [0, 0, 1, 1], [], []>} : vector<16x1024xf32>, vector<1024x512xf32>, vector<16x512xf32> -> vector<16x512xf32>
    %c0_9 = arith.constant 0 : index
    %c0_10 = arith.constant 0 : index
    %10 = vector.load %arg5[%c0_9, %c0_10] : memref<1x512xf32, #tpu.memory_space<vmem>>, vector<1x512xf32>
    %11 = vector.broadcast %10 : vector<1x512xf32> to vector<16x512xf32>
    %12 = arith.addf %9, %11 : vector<16x512xf32>
    %cst_11 = arith.constant 0.000000e+00 : f32
    %13 = vector.broadcast %cst_11 : f32 to vector<16x512xf32>
    %14 = arith.maximumf %12, %13 : vector<16x512xf32>
    %c0_12 = arith.constant 0 : index
    %c0_13 = arith.constant 0 : index
    %15 = vector.load %arg6[%c0_12, %c0_13] : memref<512x128xf32, #tpu.memory_space<vmem>>, vector<512x128xf32>
    %cst_14 = arith.constant dense<0.000000e+00> : vector<16x128xf32>
    %16 = tpu.matmul %14, %15, %cst_14 {dimension_numbers = #tpu.dot_dimension_numbers<[1], [0], [0], [1], [0, 0, 1, 1], [], []>} : vector<16x512xf32>, vector<512x128xf32>, vector<16x128xf32> -> vector<16x128xf32>
    %c0_15 = arith.constant 0 : index
    %c0_16 = arith.constant 0 : index
    %17 = vector.load %arg7[%c0_15, %c0_16] : memref<1x128xf32, #tpu.memory_space<vmem>>, vector<1x128xf32>
    %18 = vector.broadcast %17 : vector<1x128xf32> to vector<16x128xf32>
    %19 = arith.addf %16, %18 : vector<16x128xf32>
    %c0_17 = arith.constant 0 : index
    %c0_18 = arith.constant 0 : index
    %20 = vector.load %arg8[%c0_17, %c0_18] : memref<16x128xf32, #tpu.memory_space<vmem>>, vector<16x128xf32>
    tpu.vector_store %arg8[%c0_17, %c0_18], %19 {strides = array<i32>} : memref<16x128xf32, #tpu.memory_space<vmem>>, vector<16x128xf32>,
    return
  }
  func.func @transform_0(%arg0: i32) -> (i32, i32) {
    %c0_i32 = arith.constant 0 : i32
    %c0_i32_0 = arith.constant 0 : i32
    return %arg0, %c0_i32 : i32, i32
  }
  func.func @transform_1(%arg0: i32) -> (i32, i32) {
    %c0_i32 = arith.constant 0 : i32
    %c0_i32_0 = arith.constant 0 : i32
    %c0_i32_1 = arith.constant 0 : i32
    return %c0_i32, %c0_i32_0 : i32, i32
  }
  func.func @transform_2(%arg0: i32) -> (i32, i32) {
    %c0_i32 = arith.constant 0 : i32
    %c0_i32_0 = arith.constant 0 : i32
    %c0_i32_1 = arith.constant 0 : i32
    return %c0_i32, %c0_i32_0 : i32, i32
  }
  func.func @transform_3(%arg0: i32) -> (i32, i32) {
    %c0_i32 = arith.constant 0 : i32
    %c0_i32_0 = arith.constant 0 : i32
    %c0_i32_1 = arith.constant 0 : i32
    return %c0_i32, %c0_i32_0 : i32, i32
  }
  func.func @transform_4(%arg0: i32) -> (i32, i32) {
    %c0_i32 = arith.constant 0 : i32
    %c0_i32_0 = arith.constant 0 : i32
    %c0_i32_1 = arith.constant 0 : i32
    return %c0_i32, %c0_i32_0 : i32, i32
  }
  func.func @transform_5(%arg0: i32) -> (i32, i32) {
    %c0_i32 = arith.constant 0 : i32
    %c0_i32_0 = arith.constant 0 : i32
    %c0_i32_1 = arith.constant 0 : i32
    return %c0_i32, %c0_i32_0 : i32, i32
  }
  func.func @transform_6(%arg0: i32) -> (i32, i32) {
    %c0_i32 = arith.constant 0 : i32
    %c0_i32_0 = arith.constant 0 : i32
    %c0_i32_1 = arith.constant 0 : i32
    return %c0_i32, %c0_i32_0 : i32, i32
  }
  func.func @transform_7(%arg0: i32) -> (i32, i32) {
    %c0_i32 = arith.constant 0 : i32
    %c0_i32_0 = arith.constant 0 : i32
    return %arg0, %c0_i32 : i32, i32
  }
}

</mosaic_0001>

<llo_original>
// kernel: tpu_custom_call.1
$region0: #{tpu_custom_call.1}
  #allocation0 [shape = 'u32[]', space=smem, size = 0x4, offset = 0x4, fixed_abs, tag = 'smem constant byte address 0x4 - core index']
  #allocation1 [shape = 'u32[72,128]{1,0:T(1,128)}', space=vmem, size = 0x9000, scoped, tag = 'internal scratch']
  %s0 = inlined_call_operand.hbm [shape: f32[16,64], index: 0, kind: input, shape index: {}]
  %s1 = inlined_call_operand.hbm [shape: f32[64,1024], index: 1, kind: input, shape index: {}]
  %s2 = inlined_call_operand.hbm [shape: f32[1,1024], index: 2, kind: input, shape index: {}]
  %s3 = inlined_call_operand.hbm [shape: f32[1024,512], index: 3, kind: input, shape index: {}]
  %s4 = inlined_call_operand.hbm [shape: f32[1,512], index: 4, kind: input, shape index: {}]
  %s5 = inlined_call_operand.hbm [shape: f32[512,128], index: 5, kind: input, shape index: {}]
  %s6 = inlined_call_operand.hbm [shape: f32[1,128], index: 6, kind: input, shape index: {}]
  %s7 = inlined_call_operand.hbm [shape: f32[16,128], index: 7, kind: output, shape index: {}]
  %s8 = sld [smem:[#allocation0]]
  $region66: #{tpu_custom_call.1} parent=0
    _
  %s10 = ssub.s32 1, %s8
  %s11 = scalar_select 0, %s10, %s8
  $region1: #{tpu_custom_call.1} parent=0
    #allocation2 [shape = 'u8[8192]{0}', space=vmem, size = 0x2000, scoped, tag = 'input window, operand 0, single buffered']
    #allocation3 [shape = 's32[1]{0}', space=sflag, size = 0x4, scoped, tag = 'scoped memory for tpu_custom_call.1']
    #allocation4 [shape = 's32[1]{0}', space=sflag, size = 0x4, scoped, tag = 'scoped memory for tpu_custom_call.1']
    #allocation5 [shape = 'u8[262144]{0}', space=vmem, size = 0x40000, scoped, tag = 'input window, operand 1, single buffered']
    #allocation6 [shape = 's32[1]{0}', space=sflag, size = 0x4, scoped, tag = 'scoped memory for tpu_custom_call.1']
    #allocation7 [shape = 'u8[4096]{0}', space=vmem, size = 0x1000, scoped, tag = 'input window, operand 2, single buffered']
    #allocation8 [shape = 'u8[2097152]{0}', space=vmem, size = 0x200000, scoped, tag = 'input window, operand 3, single buffered']
    #allocation9 [shape = 's32[1]{0}', space=sflag, size = 0x4, scoped, tag = 'scoped memory for tpu_custom_call.1']
    #allocation10 [shape = 'u8[2048]{0}', space=vmem, size = 0x800, scoped, tag = 'input window, operand 4, single buffered']
    #allocation11 [shape = 'u8[262144]{0}', space=vmem, size = 0x40000, scoped, tag = 'input window, operand 5, single buffered']
    #allocation12 [shape = 's32[1]{0}', space=sflag, size = 0x4, scoped, tag = 'scoped memory for tpu_custom_call.1']
    #allocation13 [shape = 'u8[512]{0}', space=vmem, size = 0x400, scoped, tag = 'input window, operand 6, single buffered']
    #allocation14 [shape = 'u8[8192]{0}', space=vmem, size = 0x2000, scoped, tag = 'output window, operand 0, single buffered']
    %12 = vsyncpa [#allocation3], 0
    %13 = vsyncpa [#allocation6], 0
    %14 = vsyncpa [#allocation9], 0
    %15 = vsyncpa [#allocation12], 0
    %16 = vsyncpa [#allocation4], 0
    // Predicated region
    $region2: #{tpu_custom_call.1} parent=1 // pred_check
      _
    $region3: #{tpu_custom_call.1} parent=1 // pred_check_branch
      %18 = sbr.rel (0) target = $region5
    $region4: #{tpu_custom_call.1} parent=1 // pred_region
      %20 = vsyncadd [#allocation3], 0
      %s21 = sshll.u32 %s0, 4
      %s22 = int_to_ptr.hbm [resolvable:$true] %s21
      %s23 = sshll.u32 [#allocation2], 4
      %s24 = int_to_ptr.vmem [resolvable:$true] %s23
      %29 = dma.hbm_to_vmem [thread:$0]  %s22, 256, %s24, [#allocation3], 128, 128, 8
    $region5: #{tpu_custom_call.1} parent=1 // pred_fallthru
      _
    // Predicated region
    $region6: #{tpu_custom_call.1} parent=1 // pred_check
      _
    $region7: #{tpu_custom_call.1} parent=1 // pred_check_branch
      %31 = sbr.rel (0) target = $region9
    $region8: #{tpu_custom_call.1} parent=1 // pred_region
      %33 = vsyncadd [#allocation6], 0
      %s34 = sshll.u32 %s1, 4
      %s35 = int_to_ptr.hbm [resolvable:$true] %s34
      %s36 = sshll.u32 [#allocation5], 4
      %s37 = int_to_ptr.vmem [resolvable:$true] %s36
      %42 = dma.hbm_to_vmem [thread:$0]  %s35, 8192, %s37, [#allocation6], 1024, 1024, 64
    $region9: #{tpu_custom_call.1} parent=1 // pred_fallthru
      _
    // Predicated region
    $region10: #{tpu_custom_call.1} parent=1 // pred_check
      _
    $region11: #{tpu_custom_call.1} parent=1 // pred_check_branch
      %44 = sbr.rel (0) target = $region13
    $region12: #{tpu_custom_call.1} parent=1 // pred_region
      %46 = vsyncadd [#allocation6], 0
      %s48 = sshll.u32 %s2, 4
      %s49 = int_to_ptr.hbm [resolvable:$true] %s48
      %s50 = sshll.u32 [#allocation7], 4
      %s51 = int_to_ptr.vmem [resolvable:$true] %s50
      %53 = dma.hbm_to_vmem [thread:$0]  %s49, 128, %s51, [#allocation6]
    $region13: #{tpu_custom_call.1} parent=1 // pred_fallthru
      _
    // Predicated region
    $region14: #{tpu_custom_call.1} parent=1 // pred_check
      _
    $region15: #{tpu_custom_call.1} parent=1 // pred_check_branch
      %55 = sbr.rel (0) target = $region17
    $region16: #{tpu_custom_call.1} parent=1 // pred_region
      %57 = vsyncadd [#allocation9], 0
      %s58 = sshll.u32 %s3, 4
      %s59 = int_to_ptr.hbm [resolvable:$true] %s58
      %s60 = sshll.u32 [#allocation8], 4
      %s61 = int_to_ptr.vmem [resolvable:$true] %s60
      %66 = dma.hbm_to_vmem [thread:$0]  %s59, 65536, %s61, [#allocation9], 512, 512, 32
    $region17: #{tpu_custom_call.1} parent=1 // pred_fallthru
      _
    // Predicated region
    $region18: #{tpu_custom_call.1} parent=1 // pred_check
      _
    $region19: #{tpu_custom_call.1} parent=1 // pred_check_branch
      %68 = sbr.rel (0) target = $region21
    $region20: #{tpu_custom_call.1} parent=1 // pred_region
      %70 = vsyncadd [#allocation9], 0
      %s72 = sshll.u32 %s4, 4
      %s73 = int_to_ptr.hbm [resolvable:$true] %s72
      %s74 = sshll.u32 [#allocation10], 4
      %s75 = int_to_ptr.vmem [resolvable:$true] %s74
      %77 = dma.hbm_to_vmem [thread:$0]  %s73, 64, %s75, [#allocation9]
    $region21: #{tpu_custom_call.1} parent=1 // pred_fallthru
      _
    // Predicated region
    $region22: #{tpu_custom_call.1} parent=1 // pred_check
      _
    $region23: #{tpu_custom_call.1} parent=1 // pred_check_branch
      %79 = sbr.rel (0) target = $region25
    $region24: #{tpu_custom_call.1} parent=1 // pred_region
      %81 = vsyncadd [#allocation12], 0
      %s82 = sshll.u32 %s5, 4
      %s83 = int_to_ptr.hbm [resolvable:$true] %s82
      %s84 = sshll.u32 [#allocation11], 4
      %s85 = int_to_ptr.vmem [resolvable:$true] %s84
      %90 = dma.hbm_to_vmem [thread:$0]  %s83, 8192, %s85, [#allocation12], 128, 128, 8
    $region25: #{tpu_custom_call.1} parent=1 // pred_fallthru
      _
    // Predicated region
    $region26: #{tpu_custom_call.1} parent=1 // pred_check
      _
    $region27: #{tpu_custom_call.1} parent=1 // pred_check_branch
      %92 = sbr.rel (0) target = $region29
    $region28: #{tpu_custom_call.1} parent=1 // pred_region
      %94 = vsyncadd [#allocation12], 0
      %s96 = sshll.u32 %s6, 4
      %s97 = int_to_ptr.hbm [resolvable:$true] %s96
      %s98 = sshll.u32 [#allocation13], 4
      %s99 = int_to_ptr.vmem [resolvable:$true] %s98
      %101 = dma.hbm_to_vmem [thread:$0]  %s97, 16, %s99, [#allocation12]
    $region29: #{tpu_custom_call.1} parent=1 // pred_fallthru
      _
    // Predicated region
    $region30: #{tpu_custom_call.1} parent=1 // pred_check
      _
    $region31: #{tpu_custom_call.1} parent=1 // pred_check_branch
      %103 = sbr.rel (0) target = $region33
    $region32: #{tpu_custom_call.1} parent=1 // pred_region
      %105 = dma.done [#allocation3], 256
    $region33: #{tpu_custom_call.1} parent=1 // pred_fallthru
      _
    // Predicated region
    $region34: #{tpu_custom_call.1} parent=1 // pred_check
      _
    $region35: #{tpu_custom_call.1} parent=1 // pred_check_branch
      %107 = sbr.rel (0) target = $region37
    $region36: #{tpu_custom_call.1} parent=1 // pred_region
      %109 = dma.done [#allocation6], 8192
    $region37: #{tpu_custom_call.1} parent=1 // pred_fallthru
      _
    // Predicated region
    $region38: #{tpu_custom_call.1} parent=1 // pred_check
      _
    $region39: #{tpu_custom_call.1} parent=1 // pred_check_branch
      %111 = sbr.rel (0) target = $region41
    $region40: #{tpu_custom_call.1} parent=1 // pred_region
      %113 = dma.done [#allocation6], 128
    $region41: #{tpu_custom_call.1} parent=1 // pred_fallthru
      _
    // Predicated region
    $region42: #{tpu_custom_call.1} parent=1 // pred_check
      _
    $region43: #{tpu_custom_call.1} parent=1 // pred_check_branch
      %115 = sbr.rel (0) target = $region45
    $region44: #{tpu_custom_call.1} parent=1 // pred_region
      %117 = dma.done [#allocation9], 65536
    $region45: #{tpu_custom_call.1} parent=1 // pred_fallthru
      _
    // Predicated region
    $region46: #{tpu_custom_call.1} parent=1 // pred_check
      _
    $region47: #{tpu_custom_call.1} parent=1 // pred_check_branch
      %119 = sbr.rel (0) target = $region49
    $region48: #{tpu_custom_call.1} parent=1 // pred_region
      %121 = dma.done [#allocation9], 64
    $region49: #{tpu_custom_call.1} parent=1 // pred_fallthru
      _
    // Predicated region
    $region50: #{tpu_custom_call.1} parent=1 // pred_check
      _
    $region51: #{tpu_custom_call.1} parent=1 // pred_check_branch
      %123 = sbr.rel (0) target = $region53
    $region52: #{tpu_custom_call.1} parent=1 // pred_region
      %125 = dma.done [#allocation12], 8192
    $region53: #{tpu_custom_call.1} parent=1 // pred_fallthru
      _
    // Predicated region
    $region54: #{tpu_custom_call.1} parent=1 // pred_check
      _
    $region55: #{tpu_custom_call.1} parent=1 // pred_check_branch
      %127 = sbr.rel (0) target = $region57
    $region56: #{tpu_custom_call.1} parent=1 // pred_region
      %129 = dma.done [#allocation12], 16
    $region57: #{tpu_custom_call.1} parent=1 // pred_fallthru
      _
    %v130 = vld [vmem:[#allocation2] sm:$0xff]
    %v131 = vld [vmem:[#allocation2 + $0x8] sm:$0xff]
    %v132 = vld [vmem:[#allocation5] sm:$0xff]
    %v133 = vld [vmem:[#allocation5 + $0x8] sm:$0xff]
    %v134 = vld [vmem:[#allocation5 + $0x10] sm:$0xff]
    %v135 = vld [vmem:[#allocation5 + $0x18] sm:$0xff]
    %v136 = vld [vmem:[#allocation5 + $0x20] sm:$0xff]
    %v137 = vld [vmem:[#allocation5 + $0x28] sm:$0xff]
    %v138 = vld [vmem:[#allocation5 + $0x30] sm:$0xff]
    %v139 = vld [vmem:[#allocation5 + $0x38] sm:$0xff]
    %v140 = vld [vmem:[#allocation5 + $0x40] sm:$0xff]
    %v141 = vld [vmem:[#allocation5 + $0x48] sm:$0xff]
    %v142 = vld [vmem:[#allocation5 + $0x50] sm:$0xff]
    %v143 = vld [vmem:[#allocation5 + $0x58] sm:$0xff]
    %v144 = vld [vmem:[#allocation5 + $0x60] sm:$0xff]
    %v145 = vld [vmem:[#allocation5 + $0x68] sm:$0xff]
    %v146 = vld [vmem:[#allocation5 + $0x70] sm:$0xff]
    %v147 = vld [vmem:[#allocation5 + $0x78] sm:$0xff]
    %v148 = vld [vmem:[#allocation5 + $0x80] sm:$0xff]
    %v149 = vld [vmem:[#allocation5 + $0x88] sm:$0xff]
    %v150 = vld [vmem:[#allocation5 + $0x90] sm:$0xff]
    %v151 = vld [vmem:[#allocation5 + $0x98] sm:$0xff]
    %v152 = vld [vmem:[#allocation5 + $0xa0] sm:$0xff]
    %v153 = vld [vmem:[#allocation5 + $0xa8] sm:$0xff]
    %v154 = vld [vmem:[#allocation5 + $0xb0] sm:$0xff]
    %v155 = vld [vmem:[#allocation5 + $0xb8] sm:$0xff]
    %v156 = vld [vmem:[#allocation5 + $0xc0] sm:$0xff]
    %v157 = vld [vmem:[#allocation5 + $0xc8] sm:$0xff]
    %v158 = vld [vmem:[#allocation5 + $0xd0] sm:$0xff]
    %v159 = vld [vmem:[#allocation5 + $0xd8] sm:$0xff]
    %v160 = vld [vmem:[#allocation5 + $0xe0] sm:$0xff]
    %v161 = vld [vmem:[#allocation5 + $0xe8] sm:$0xff]
    %v162 = vld [vmem:[#allocation5 + $0xf0] sm:$0xff]
    %v163 = vld [vmem:[#allocation5 + $0xf8] sm:$0xff]
    %v164 = vld [vmem:[#allocation5 + $0x100] sm:$0xff]
    %v165 = vld [vmem:[#allocation5 + $0x108] sm:$0xff]
    %v166 = vld [vmem:[#allocation5 + $0x110] sm:$0xff]
    %v167 = vld [vmem:[#allocation5 + $0x118] sm:$0xff]
    %v168 = vld [vmem:[#allocation5 + $0x120] sm:$0xff]
    %v169 = vld [vmem:[#allocation5 + $0x128] sm:$0xff]
    %v170 = vld [vmem:[#allocation5 + $0x130] sm:$0xff]
    %v171 = vld [vmem:[#allocation5 + $0x138] sm:$0xff]
    %v172 = vld [vmem:[#allocation5 + $0x140] sm:$0xff]
    %v173 = vld [vmem:[#allocation5 + $0x148] sm:$0xff]
    %v174 = vld [vmem:[#allocation5 + $0x150] sm:$0xff]
    %v175 = vld [vmem:[#allocation5 + $0x158] sm:$0xff]
    %v176 = vld [vmem:[#allocation5 + $0x160] sm:$0xff]
    %v177 = vld [vmem:[#allocation5 + $0x168] sm:$0xff]
    %v178 = vld [vmem:[#allocation5 + $0x170] sm:$0xff]
    %v179 = vld [vmem:[#allocation5 + $0x178] sm:$0xff]
    %v180 = vld [vmem:[#allocation5 + $0x180] sm:$0xff]
    %v181 = vld [vmem:[#allocation5 + $0x188] sm:$0xff]
    %v182 = vld [vmem:[#allocation5 + $0x190] sm:$0xff]
    %v183 = vld [vmem:[#allocation5 + $0x198] sm:$0xff]
    %v184 = vld [vmem:[#allocation5 + $0x1a0] sm:$0xff]
    %v185 = vld [vmem:[#allocation5 + $0x1a8] sm:$0xff]
    %v186 = vld [vmem:[#allocation5 + $0x1b0] sm:$0xff]
    %v187 = vld [vmem:[#allocation5 + $0x1b8] sm:$0xff]
    %v188 = vld [vmem:[#allocation5 + $0x1c0] sm:$0xff]
    %v189 = vld [vmem:[#allocation5 + $0x1c8] sm:$0xff]
    %v190 = vld [vmem:[#allocation5 + $0x1d0] sm:$0xff]
    %v191 = vld [vmem:[#allocation5 + $0x1d8] sm:$0xff]
    %v192 = vld [vmem:[#allocation5 + $0x1e0] sm:$0xff]
    %v193 = vld [vmem:[#allocation5 + $0x1e8] sm:$0xff]
    %v194 = vld [vmem:[#allocation5 + $0x1f0] sm:$0xff]
    %v195 = vld [vmem:[#allocation5 + $0x1f8] sm:$0xff]
    %v196 = vld [vmem:[#allocation7] sm:$0xff]
    %v198 = vperm.slane %v196, 0
    %v199 = vperm.slane %v196, 1
    %v200 = vperm.slane %v196, 2
    %v201 = vperm.slane %v196, 3
    %v202 = vperm.slane %v196, 4
    %v203 = vperm.slane %v196, 5
    %v204 = vperm.slane %v196, 6
    %v205 = vperm.slane %v196, 7
    %vm214 = vcmask 523264
    %v216 = vsel %vm214, %v130, 0
    %v219 = vsel %vm214, %v131, 0
    %221 = vmatpush.msra.mxu0 0.0
    %222 = vmatpush.msra.mxu0 0.0
    %223 = vmatpush.msra.mxu0 0.0
    %224 = vmatpush.msra.mxu0 0.0
    %225 = vmatpush.msra.mxu0 0.0
    %226 = vmatpush.msra.mxu0 0.0
    %227 = vmatpush.msra.mxu0 0.0
    %228 = vmatpush.msra.mxu0 0.0
    %229 = vmatpush.msra.mxu0 %v188
    %230 = vmatpush.msra.mxu0 %v180
    %231 = vmatpush.msra.mxu0 %v172
    %232 = vmatpush.msra.mxu0 %v164
    %233 = vmatpush.msra.mxu0 %v156
    %234 = vmatpush.msra.mxu0 %v148
    %235 = vmatpush.msra.mxu0 %v140
    %236 = vmatpush.msra.mxu0 %v132
    %237 = vmatmul.f32.gmra.mxu0 %v216
    %v238 = vpop.f32.mrf.mxu0
    %v239 = vadd.f32 %v198, %v238
    %240 = vmatmul.f32.gmra.mxu0 %v219
    %v241 = vpop.f32.mrf.mxu0
    %v242 = vadd.f32 %v198, %v241
    %243 = vdwg.mxu0
    %244 = vmatpush.msra.mxu0 0.0
    %245 = vmatpush.msra.mxu0 0.0
    %246 = vmatpush.msra.mxu0 0.0
    %247 = vmatpush.msra.mxu0 0.0
    %248 = vmatpush.msra.mxu0 0.0
    %249 = vmatpush.msra.mxu0 0.0
    %250 = vmatpush.msra.mxu0 0.0
    %251 = vmatpush.msra.mxu0 0.0
    %252 = vmatpush.msra.mxu0 %v189
    %253 = vmatpush.msra.mxu0 %v181
    %254 = vmatpush.msra.mxu0 %v173
    %255 = vmatpush.msra.mxu0 %v165
    %256 = vmatpush.msra.mxu0 %v157
    %257 = vmatpush.msra.mxu0 %v149
    %258 = vmatpush.msra.mxu0 %v141
    %259 = vmatpush.msra.mxu0 %v133
    %260 = vmatmul.f32.gmra.mxu0 %v216
    %v261 = vpop.f32.mrf.mxu0
    %v262 = vadd.f32 %v199, %v261
    %263 = vmatmul.f32.gmra.mxu0 %v219
    %v264 = vpop.f32.mrf.mxu0
    %v265 = vadd.f32 %v199, %v264
    %266 = vdwg.mxu0
    %267 = vmatpush.msra.mxu0 0.0
    %268 = vmatpush.msra.mxu0 0.0
    %269 = vmatpush.msra.mxu0 0.0
    %270 = vmatpush.msra.mxu0 0.0
    %271 = vmatpush.msra.mxu0 0.0
    %272 = vmatpush.msra.mxu0 0.0
    %273 = vmatpush.msra.mxu0 0.0
    %274 = vmatpush.msra.mxu0 0.0
    %275 = vmatpush.msra.mxu0 %v190
    %276 = vmatpush.msra.mxu0 %v182
    %277 = vmatpush.msra.mxu0 %v174
    %278 = vmatpush.msra.mxu0 %v166
    %279 = vmatpush.msra.mxu0 %v158
    %280 = vmatpush.msra.mxu0 %v150
    %281 = vmatpush.msra.mxu0 %v142
    %282 = vmatpush.msra.mxu0 %v134
    %283 = vmatmul.f32.gmra.mxu0 %v216
    %v284 = vpop.f32.mrf.mxu0
    %v285 = vadd.f32 %v200, %v284
    %286 = vmatmul.f32.gmra.mxu0 %v219
    %v287 = vpop.f32.mrf.mxu0
    %v288 = vadd.f32 %v200, %v287
    %289 = vdwg.mxu0
    %290 = vmatpush.msra.mxu0 0.0
    %291 = vmatpush.msra.mxu0 0.0
    %292 = vmatpush.msra.mxu0 0.0
    %293 = vmatpush.msra.mxu0 0.0
    %294 = vmatpush.msra.mxu0 0.0
    %295 = vmatpush.msra.mxu0 0.0
    %296 = vmatpush.msra.mxu0 0.0
    %297 = vmatpush.msra.mxu0 0.0
    %298 = vmatpush.msra.mxu0 %v191
    %299 = vmatpush.msra.mxu0 %v183
    %300 = vmatpush.msra.mxu0 %v175
    %301 = vmatpush.msra.mxu0 %v167
    %302 = vmatpush.msra.mxu0 %v159
    %303 = vmatpush.msra.mxu0 %v151
    %304 = vmatpush.msra.mxu0 %v143
    %305 = vmatpush.msra.mxu0 %v135
    %306 = vmatmul.f32.gmra.mxu0 %v216
    %v307 = vpop.f32.mrf.mxu0
    %v308 = vadd.f32 %v201, %v307
    %309 = vmatmul.f32.gmra.mxu0 %v219
    %v310 = vpop.f32.mrf.mxu0
    %v311 = vadd.f32 %v201, %v310
    %312 = vdwg.mxu0
    %313 = vmatpush.msra.mxu0 0.0
    %314 = vmatpush.msra.mxu0 0.0
    %315 = vmatpush.msra.mxu0 0.0
    %316 = vmatpush.msra.mxu0 0.0
    %317 = vmatpush.msra.mxu0 0.0
    %318 = vmatpush.msra.mxu0 0.0
    %319 = vmatpush.msra.mxu0 0.0
    %320 = vmatpush.msra.mxu0 0.0
    %321 = vmatpush.msra.mxu0 %v192
    %322 = vmatpush.msra.mxu0 %v184
    %323 = vmatpush.msra.mxu0 %v176
    %324 = vmatpush.msra.mxu0 %v168
    %325 = vmatpush.msra.mxu0 %v160
    %326 = vmatpush.msra.mxu0 %v152
    %327 = vmatpush.msra.mxu0 %v144
    %328 = vmatpush.msra.mxu0 %v136
    %329 = vmatmul.f32.gmra.mxu0 %v216
    %v330 = vpop.f32.mrf.mxu0
    %v331 = vadd.f32 %v202, %v330
    %332 = vmatmul.f32.gmra.mxu0 %v219
    %v333 = vpop.f32.mrf.mxu0
    %v334 = vadd.f32 %v202, %v333
    %335 = vdwg.mxu0
    %336 = vmatpush.msra.mxu0 0.0
    %337 = vmatpush.msra.mxu0 0.0
    %338 = vmatpush.msra.mxu0 0.0
    %339 = vmatpush.msra.mxu0 0.0
    %340 = vmatpush.msra.mxu0 0.0
    %341 = vmatpush.msra.mxu0 0.0
    %342 = vmatpush.msra.mxu0 0.0
    %343 = vmatpush.msra.mxu0 0.0
    %344 = vmatpush.msra.mxu0 %v193
    %345 = vmatpush.msra.mxu0 %v185
    %346 = vmatpush.msra.mxu0 %v177
    %347 = vmatpush.msra.mxu0 %v169
    %348 = vmatpush.msra.mxu0 %v161
    %349 = vmatpush.msra.mxu0 %v153
    %350 = vmatpush.msra.mxu0 %v145
    %351 = vmatpush.msra.mxu0 %v137
    %352 = vmatmul.f32.gmra.mxu0 %v216
    %v353 = vpop.f32.mrf.mxu0
    %v354 = vadd.f32 %v203, %v353
    %355 = vmatmul.f32.gmra.mxu0 %v219
    %v356 = vpop.f32.mrf.mxu0
    %v357 = vadd.f32 %v203, %v356
    %358 = vdwg.mxu0
    %359 = vmatpush.msra.mxu0 0.0
    %360 = vmatpush.msra.mxu0 0.0
    %361 = vmatpush.msra.mxu0 0.0
    %362 = vmatpush.msra.mxu0 0.0
    %363 = vmatpush.msra.mxu0 0.0
    %364 = vmatpush.msra.mxu0 0.0
    %365 = vmatpush.msra.mxu0 0.0
    %366 = vmatpush.msra.mxu0 0.0
    %367 = vmatpush.msra.mxu0 %v194
    %368 = vmatpush.msra.mxu0 %v186
    %369 = vmatpush.msra.mxu0 %v178
    %370 = vmatpush.msra.mxu0 %v170
    %371 = vmatpush.msra.mxu0 %v162
    %372 = vmatpush.msra.mxu0 %v154
    %373 = vmatpush.msra.mxu0 %v146
    %374 = vmatpush.msra.mxu0 %v138
    %375 = vmatmul.f32.gmra.mxu0 %v216
    %v376 = vpop.f32.mrf.mxu0
    %v377 = vadd.f32 %v204, %v376
    %378 = vmatmul.f32.gmra.mxu0 %v219
    %v379 = vpop.f32.mrf.mxu0
    %v380 = vadd.f32 %v204, %v379
    %381 = vdwg.mxu0
    %382 = vmatpush.msra.mxu0 0.0
    %383 = vmatpush.msra.mxu0 0.0
    %384 = vmatpush.msra.mxu0 0.0
    %385 = vmatpush.msra.mxu0 0.0
    %386 = vmatpush.msra.mxu0 0.0
    %387 = vmatpush.msra.mxu0 0.0
    %388 = vmatpush.msra.mxu0 0.0
    %389 = vmatpush.msra.mxu0 0.0
    %390 = vmatpush.msra.mxu0 %v195
    %391 = vmatpush.msra.mxu0 %v187
    %392 = vmatpush.msra.mxu0 %v179
    %393 = vmatpush.msra.mxu0 %v171
    %394 = vmatpush.msra.mxu0 %v163
    %395 = vmatpush.msra.mxu0 %v155
    %396 = vmatpush.msra.mxu0 %v147
    %397 = vmatpush.msra.mxu0 %v139
    %398 = vmatmul.f32.gmra.mxu0 %v216
    %v399 = vpop.f32.mrf.mxu0
    %v400 = vadd.f32 %v205, %v399
    %401 = vmatmul.f32.gmra.mxu0 %v219
    %v402 = vpop.f32.mrf.mxu0
    %v403 = vadd.f32 %v205, %v402
    %404 = vdwg.mxu0
    %v405 = vmax.f32 %v239, 0.0
    %v406 = vmax.f32 %v262, 0.0
    %v407 = vmax.f32 %v285, 0.0
    %v408 = vmax.f32 %v308, 0.0
    %v409 = vmax.f32 %v331, 0.0
    %v410 = vmax.f32 %v354, 0.0
    %v411 = vmax.f32 %v377, 0.0
    %v412 = vmax.f32 %v400, 0.0
    %v413 = vmax.f32 %v242, 0.0
    %v414 = vmax.f32 %v265, 0.0
    %v415 = vmax.f32 %v288, 0.0
    %v416 = vmax.f32 %v311, 0.0
    %v417 = vmax.f32 %v334, 0.0
    %v418 = vmax.f32 %v357, 0.0
    %v419 = vmax.f32 %v380, 0.0
    %v420 = vmax.f32 %v403, 0.0
    %v421 = vld [vmem:[#allocation8] sm:$0xff]
    %v422 = vld [vmem:[#allocation8 + $0x8] sm:$0xff]
    %v423 = vld [vmem:[#allocation8 + $0x10] sm:$0xff]
    %v424 = vld [vmem:[#allocation8 + $0x18] sm:$0xff]
    %v425 = vld [vmem:[#allocation8 + $0x20] sm:$0xff]
    %v426 = vld [vmem:[#allocation8 + $0x28] sm:$0xff]
    %v427 = vld [vmem:[#allocation8 + $0x30] sm:$0xff]
    %v428 = vld [vmem:[#allocation8 + $0x38] sm:$0xff]
    %v429 = vld [vmem:[#allocation8 + $0x40] sm:$0xff]
    %v430 = vld [vmem:[#allocation8 + $0x48] sm:$0xff]
    %v431 = vld [vmem:[#allocation8 + $0x50] sm:$0xff]
    %v432 = vld [vmem:[#allocation8 + $0x58] sm:$0xff]
    %v433 = vld [vmem:[#allocation8 + $0x60] sm:$0xff]
    %v434 = vld [vmem:[#allocation8 + $0x68] sm:$0xff]
    %v435 = vld [vmem:[#allocation8 + $0x70] sm:$0xff]
    %v436 = vld [vmem:[#allocation8 + $0x78] sm:$0xff]
    %v437 = vld [vmem:[#allocation8 + $0x80] sm:$0xff]
    %v438 = vld [vmem:[#allocation8 + $0x88] sm:$0xff]
    %v439 = vld [vmem:[#allocation8 + $0x90] sm:$0xff]
    %v440 = vld [vmem:[#allocation8 + $0x98] sm:$0xff]
    %v441 = vld [vmem:[#allocation8 + $0xa0] sm:$0xff]
    %v442 = vld [vmem:[#allocation8 + $0xa8] sm:$0xff]
    %v443 = vld [vmem:[#allocation8 + $0xb0] sm:$0xff]
    %v444 = vld [vmem:[#allocation8 + $0xb8] sm:$0xff]
    %v445 = vld [vmem:[#allocation8 + $0xc0] sm:$0xff]
    %v446 = vld [vmem:[#allocation8 + $0xc8] sm:$0xff]
    %v447 = vld [vmem:[#allocation8 + $0xd0] sm:$0xff]
    %v448 = vld [vmem:[#allocation8 + $0xd8] sm:$0xff]
    %v449 = vld [vmem:[#allocation8 + $0xe0] sm:$0xff]
    %v450 = vld [vmem:[#allocation8 + $0xe8] sm:$0xff]
    %v451 = vld [vmem:[#allocation8 + $0xf0] sm:$0xff]
    %v452 = vld [vmem:[#allocation8 + $0xf8] sm:$0xff]
    %v453 = vld [vmem:[#allocation8 + $0x100] sm:$0xff]
    %v454 = vld [vmem:[#allocation8 + $0x108] sm:$0xff]
    %v455 = vld [vmem:[#allocation8 + $0x110] sm:$0xff]
    %v456 = vld [vmem:[#allocation8 + $0x118] sm:$0xff]
    %v457 = vld [vmem:[#allocation8 + $0x120] sm:$0xff]
    %v458 = vld [vmem:[#allocation8 + $0x128] sm:$0xff]
    %v459 = vld [vmem:[#allocation8 + $0x130] sm:$0xff]
    %v460 = vld [vmem:[#allocation8 + $0x138] sm:$0xff]
    %v461 = vld [vmem:[#allocation8 + $0x140] sm:$0xff]
    %v462 = vld [vmem:[#allocation8 + $0x148] sm:$0xff]
    %v463 = vld [vmem:[#allocation8 + $0x150] sm:$0xff]
    %v464 = vld [vmem:[#allocation8 + $0x158] sm:$0xff]
    %v465 = vld [vmem:[#allocation8 + $0x160] sm:$0xff]
    %v466 = vld [vmem:[#allocation8 + $0x168] sm:$0xff]
    %v467 = vld [vmem:[#allocation8 + $0x170] sm:$0xff]
    %v468 = vld [vmem:[#allocation8 + $0x178] sm:$0xff]
    %v469 = vld [vmem:[#allocation8 + $0x180] sm:$0xff]
    %v470 = vld [vmem:[#allocation8 + $0x188] sm:$0xff]
    %v471 = vld [vmem:[#allocation8 + $0x190] sm:$0xff]
    %v472 = vld [vmem:[#allocation8 + $0x198] sm:$0xff]
    %v473 = vld [vmem:[#allocation8 + $0x1a0] sm:$0xff]
    %v474 = vld [vmem:[#allocation8 + $0x1a8] sm:$0xff]
    %v475 = vld [vmem:[#allocation8 + $0x1b0] sm:$0xff]
    %v476 = vld [vmem:[#allocation8 + $0x1b8] sm:$0xff]
    %v477 = vld [vmem:[#allocation8 + $0x1c0] sm:$0xff]
    %v478 = vld [vmem:[#allocation8 + $0x1c8] sm:$0xff]
    %v479 = vld [vmem:[#allocation8 + $0x1d0] sm:$0xff]
    %v480 = vld [vmem:[#allocation8 + $0x1d8] sm:$0xff]
    %v481 = vld [vmem:[#allocation8 + $0x1e0] sm:$0xff]
    %v482 = vld [vmem:[#allocation8 + $0x1e8] sm:$0xff]
    %v483 = vld [vmem:[#allocation8 + $0x1f0] sm:$0xff]
    %v484 = vld [vmem:[#allocation8 + $0x1f8] sm:$0xff]
    %v485 = vld [vmem:[#allocation8 + $0x200] sm:$0xff]
    %v486 = vld [vmem:[#allocation8 + $0x208] sm:$0xff]
    %v487 = vld [vmem:[#allocation8 + $0x210] sm:$0xff]
    %v488 = vld [vmem:[#allocation8 + $0x218] sm:$0xff]
    %v489 = vld [vmem:[#allocation8 + $0x220] sm:$0xff]
    %v490 = vld [vmem:[#allocation8 + $0x228] sm:$0xff]
    %v491 = vld [vmem:[#allocation8 + $0x230] sm:$0xff]
    %v492 = vld [vmem:[#allocation8 + $0x238] sm:$0xff]
    %v493 = vld [vmem:[#allocation8 + $0x240] sm:$0xff]
    %v494 = vld [vmem:[#allocation8 + $0x248] sm:$0xff]
    %v495 = vld [vmem:[#allocation8 + $0x250] sm:$0xff]
    %v496 = vld [vmem:[#allocation8 + $0x258] sm:$0xff]
    %v497 = vld [vmem:[#allocation8 + $0x260] sm:$0xff]
    %v498 = vld [vmem:[#allocation8 + $0x268] sm:$0xff]
    %v499 = vld [vmem:[#allocation8 + $0x270] sm:$0xff]
    %v500 = vld [vmem:[#allocation8 + $0x278] sm:$0xff]
    %v501 = vld [vmem:[#allocation8 + $0x280] sm:$0xff]
    %v502 = vld [vmem:[#allocation8 + $0x288] sm:$0xff]
    %v503 = vld [vmem:[#allocation8 + $0x290] sm:$0xff]
    %v504 = vld [vmem:[#allocation8 + $0x298] sm:$0xff]
    %v505 = vld [vmem:[#allocation8 + $0x2a0] sm:$0xff]
    %v506 = vld [vmem:[#allocation8 + $0x2a8] sm:$0xff]
    %v507 = vld [vmem:[#allocation8 + $0x2b0] sm:$0xff]
    %v508 = vld [vmem:[#allocation8 + $0x2b8] sm:$0xff]
    %v509 = vld [vmem:[#allocation8 + $0x2c0] sm:$0xff]
    %v510 = vld [vmem:[#allocation8 + $0x2c8] sm:$0xff]
    %v511 = vld [vmem:[#allocation8 + $0x2d0] sm:$0xff]
    %v512 = vld [vmem:[#allocation8 + $0x2d8] sm:$0xff]
    %v513 = vld [vmem:[#allocation8 + $0x2e0] sm:$0xff]
    %v514 = vld [vmem:[#allocation8 + $0x2e8] sm:$0xff]
    %v515 = vld [vmem:[#allocation8 + $0x2f0] sm:$0xff]
    %v516 = vld [vmem:[#allocation8 + $0x2f8] sm:$0xff]
    %v517 = vld [vmem:[#allocation8 + $0x300] sm:$0xff]
    %v518 = vld [vmem:[#allocation8 + $0x308] sm:$0xff]
    %v519 = vld [vmem:[#allocation8 + $0x310] sm:$0xff]
    %v520 = vld [vmem:[#allocation8 + $0x318] sm:$0xff]
    %v521 = vld [vmem:[#allocation8 + $0x320] sm:$0xff]
    %v522 = vld [vmem:[#allocation8 + $0x328] sm:$0xff]
    %v523 = vld [vmem:[#allocation8 + $0x330] sm:$0xff]
    %v524 = vld [vmem:[#allocation8 + $0x338] sm:$0xff]
    %v525 = vld [vmem:[#allocation8 + $0x340] sm:$0xff]
    %v526 = vld [vmem:[#allocation8 + $0x348] sm:$0xff]
    %v527 = vld [vmem:[#allocation8 + $0x350] sm:$0xff]
    %v528 = vld [vmem:[#allocation8 + $0x358] sm:$0xff]
    %v529 = vld [vmem:[#allocation8 + $0x360] sm:$0xff]
    %v530 = vld [vmem:[#allocation8 + $0x368] sm:$0xff]
    %v531 = vld [vmem:[#allocation8 + $0x370] sm:$0xff]
    %v532 = vld [vmem:[#allocation8 + $0x378] sm:$0xff]
    %v533 = vld [vmem:[#allocation8 + $0x380] sm:$0xff]
    %v534 = vld [vmem:[#allocation8 + $0x388] sm:$0xff]
    %v535 = vld [vmem:[#allocation8 + $0x390] sm:$0xff]
    %v536 = vld [vmem:[#allocation8 + $0x398] sm:$0xff]
    %v537 = vld [vmem:[#allocation8 + $0x3a0] sm:$0xff]
    %v538 = vld [vmem:[#allocation8 + $0x3a8] sm:$0xff]
    %v539 = vld [vmem:[#allocation8 + $0x3b0] sm:$0xff]
    %v540 = vld [vmem:[#allocation8 + $0x3b8] sm:$0xff]
    %v541 = vld [vmem:[#allocation8 + $0x3c0] sm:$0xff]
    %v542 = vld [vmem:[#allocation8 + $0x3c8] sm:$0xff]
    %v543 = vld [vmem:[#allocation8 + $0x3d0] sm:$0xff]
    %v544 = vld [vmem:[#allocation8 + $0x3d8] sm:$0xff]
    %v545 = vld [vmem:[#allocation8 + $0x3e0] sm:$0xff]
    %v546 = vld [vmem:[#allocation8 + $0x3e8] sm:$0xff]
    %v547 = vld [vmem:[#allocation8 + $0x3f0] sm:$0xff]
    %v548 = vld [vmem:[#allocation8 + $0x3f8] sm:$0xff]
    %v549 = vld [vmem:[#allocation8 + $0x400] sm:$0xff]
    %v550 = vld [vmem:[#allocation8 + $0x408] sm:$0xff]
    %v551 = vld [vmem:[#allocation8 + $0x410] sm:$0xff]
    %v552 = vld [vmem:[#allocation8 + $0x418] sm:$0xff]
    %v553 = vld [vmem:[#allocation8 + $0x420] sm:$0xff]
    %v554 = vld [vmem:[#allocation8 + $0x428] sm:$0xff]
    %v555 = vld [vmem:[#allocation8 + $0x430] sm:$0xff]
    %v556 = vld [vmem:[#allocation8 + $0x438] sm:$0xff]
    %v557 = vld [vmem:[#allocation8 + $0x440] sm:$0xff]
    %v558 = vld [vmem:[#allocation8 + $0x448] sm:$0xff]
    %v559 = vld [vmem:[#allocation8 + $0x450] sm:$0xff]
    %v560 = vld [vmem:[#allocation8 + $0x458] sm:$0xff]
    %v561 = vld [vmem:[#allocation8 + $0x460] sm:$0xff]
    %v562 = vld [vmem:[#allocation8 + $0x468] sm:$0xff]
    %v563 = vld [vmem:[#allocation8 + $0x470] sm:$0xff]
    %v564 = vld [vmem:[#allocation8 + $0x478] sm:$0xff]
    %v565 = vld [vmem:[#allocation8 + $0x480] sm:$0xff]
    %v566 = vld [vmem:[#allocation8 + $0x488] sm:$0xff]
    %v567 = vld [vmem:[#allocation8 + $0x490] sm:$0xff]
    %v568 = vld [vmem:[#allocation8 + $0x498] sm:$0xff]
    %v569 = vld [vmem:[#allocation8 + $0x4a0] sm:$0xff]
    %v570 = vld [vmem:[#allocation8 + $0x4a8] sm:$0xff]
    %v571 = vld [vmem:[#allocation8 + $0x4b0] sm:$0xff]
    %v572 = vld [vmem:[#allocation8 + $0x4b8] sm:$0xff]
    %v573 = vld [vmem:[#allocation8 + $0x4c0] sm:$0xff]
    %v574 = vld [vmem:[#allocation8 + $0x4c8] sm:$0xff]
    %v575 = vld [vmem:[#allocation8 + $0x4d0] sm:$0xff]
    %v576 = vld [vmem:[#allocation8 + $0x4d8] sm:$0xff]
    %v577 = vld [vmem:[#allocation8 + $0x4e0] sm:$0xff]
    %v578 = vld [vmem:[#allocation8 + $0x4e8] sm:$0xff]
    %v579 = vld [vmem:[#allocation8 + $0x4f0] sm:$0xff]
    %v580 = vld [vmem:[#allocation8 + $0x4f8] sm:$0xff]
    %v581 = vld [vmem:[#allocation8 + $0x500] sm:$0xff]
    %v582 = vld [vmem:[#allocation8 + $0x508] sm:$0xff]
    %v583 = vld [vmem:[#allocation8 + $0x510] sm:$0xff]
    %v584 = vld [vmem:[#allocation8 + $0x518] sm:$0xff]
    %v585 = vld [vmem:[#allocation8 + $0x520] sm:$0xff]
    %v586 = vld [vmem:[#allocation8 + $0x528] sm:$0xff]
    %v587 = vld [vmem:[#allocation8 + $0x530] sm:$0xff]
    %v588 = vld [vmem:[#allocation8 + $0x538] sm:$0xff]
    %v589 = vld [vmem:[#allocation8 + $0x540] sm:$0xff]
    %v590 = vld [vmem:[#allocation8 + $0x548] sm:$0xff]
    %v591 = vld [vmem:[#allocation8 + $0x550] sm:$0xff]
    %v592 = vld [vmem:[#allocation8 + $0x558] sm:$0xff]
    %v593 = vld [vmem:[#allocation8 + $0x560] sm:$0xff]
    %v594 = vld [vmem:[#allocation8 + $0x568] sm:$0xff]
    %v595 = vld [vmem:[#allocation8 + $0x570] sm:$0xff]
    %v596 = vld [vmem:[#allocation8 + $0x578] sm:$0xff]
    %v597 = vld [vmem:[#allocation8 + $0x580] sm:$0xff]
    %v598 = vld [vmem:[#allocation8 + $0x588] sm:$0xff]
    %v599 = vld [vmem:[#allocation8 + $0x590] sm:$0xff]
    %v600 = vld [vmem:[#allocation8 + $0x598] sm:$0xff]
    %v601 = vld [vmem:[#allocation8 + $0x5a0] sm:$0xff]
    %v602 = vld [vmem:[#allocation8 + $0x5a8] sm:$0xff]
    %v603 = vld [vmem:[#allocation8 + $0x5b0] sm:$0xff]
    %v604 = vld [vmem:[#allocation8 + $0x5b8] sm:$0xff]
    %v605 = vld [vmem:[#allocation8 + $0x5c0] sm:$0xff]
    %v606 = vld [vmem:[#allocation8 + $0x5c8] sm:$0xff]
    %v607 = vld [vmem:[#allocation8 + $0x5d0] sm:$0xff]
    %v608 = vld [vmem:[#allocation8 + $0x5d8] sm:$0xff]
    %v609 = vld [vmem:[#allocation8 + $0x5e0] sm:$0xff]
    %v610 = vld [vmem:[#allocation8 + $0x5e8] sm:$0xff]
    %v611 = vld [vmem:[#allocation8 + $0x5f0] sm:$0xff]
    %v612 = vld [vmem:[#allocation8 + $0x5f8] sm:$0xff]
    %v613 = vld [vmem:[#allocation8 + $0x600] sm:$0xff]
    %v614 = vld [vmem:[#allocation8 + $0x608] sm:$0xff]
    %v615 = vld [vmem:[#allocation8 + $0x610] sm:$0xff]
    %v616 = vld [vmem:[#allocation8 + $0x618] sm:$0xff]
    %v617 = vld [vmem:[#allocation8 + $0x620] sm:$0xff]
    %v618 = vld [vmem:[#allocation8 + $0x628] sm:$0xff]
    %v619 = vld [vmem:[#allocation8 + $0x630] sm:$0xff]
    %v620 = vld [vmem:[#allocation8 + $0x638] sm:$0xff]
    %v621 = vld [vmem:[#allocation8 + $0x640] sm:$0xff]
    %v622 = vld [vmem:[#allocation8 + $0x648] sm:$0xff]
    %v623 = vld [vmem:[#allocation8 + $0x650] sm:$0xff]
    %v624 = vld [vmem:[#allocation8 + $0x658] sm:$0xff]
    %v625 = vld [vmem:[#allocation8 + $0x660] sm:$0xff]
    %v626 = vld [vmem:[#allocation8 + $0x668] sm:$0xff]
    %v627 = vld [vmem:[#allocation8 + $0x670] sm:$0xff]
    %v628 = vld [vmem:[#allocation8 + $0x678] sm:$0xff]
    %v629 = vld [vmem:[#allocation8 + $0x680] sm:$0xff]
    %v630 = vld [vmem:[#allocation8 + $0x688] sm:$0xff]
    %v631 = vld [vmem:[#allocation8 + $0x690] sm:$0xff]
    %v632 = vld [vmem:[#allocation8 + $0x698] sm:$0xff]
    %v633 = vld [vmem:[#allocation8 + $0x6a0] sm:$0xff]
    %v634 = vld [vmem:[#allocation8 + $0x6a8] sm:$0xff]
    %v635 = vld [vmem:[#allocation8 + $0x6b0] sm:$0xff]
    %v636 = vld [vmem:[#allocation8 + $0x6b8] sm:$0xff]
    %v637 = vld [vmem:[#allocation8 + $0x6c0] sm:$0xff]
    %v638 = vld [vmem:[#allocation8 + $0x6c8] sm:$0xff]
    %v639 = vld [vmem:[#allocation8 + $0x6d0] sm:$0xff]
    %v640 = vld [vmem:[#allocation8 + $0x6d8] sm:$0xff]
    %v641 = vld [vmem:[#allocation8 + $0x6e0] sm:$0xff]
    %v642 = vld [vmem:[#allocation8 + $0x6e8] sm:$0xff]
    %v643 = vld [vmem:[#allocation8 + $0x6f0] sm:$0xff]
    %v644 = vld [vmem:[#allocation8 + $0x6f8] sm:$0xff]
    %v645 = vld [vmem:[#allocation8 + $0x700] sm:$0xff]
    %v646 = vld [vmem:[#allocation8 + $0x708] sm:$0xff]
    %v647 = vld [vmem:[#allocation8 + $0x710] sm:$0xff]
    %v648 = vld [vmem:[#allocation8 + $0x718] sm:$0xff]
    %v649 = vld [vmem:[#allocation8 + $0x720] sm:$0xff]
    %v650 = vld [vmem:[#allocation8 + $0x728] sm:$0xff]
    %v651 = vld [vmem:[#allocation8 + $0x730] sm:$0xff]
    %v652 = vld [vmem:[#allocation8 + $0x738] sm:$0xff]
    %v653 = vld [vmem:[#allocation8 + $0x740] sm:$0xff]
    %v654 = vld [vmem:[#allocation8 + $0x748] sm:$0xff]
    %v655 = vld [vmem:[#allocation8 + $0x750] sm:$0xff]
    %v656 = vld [vmem:[#allocation8 + $0x758] sm:$0xff]
    %v657 = vld [vmem:[#allocation8 + $0x760] sm:$0xff]
    %v658 = vld [vmem:[#allocation8 + $0x768] sm:$0xff]
    %v659 = vld [vmem:[#allocation8 + $0x770] sm:$0xff]
    %v660 = vld [vmem:[#allocation8 + $0x778] sm:$0xff]
    %v661 = vld [vmem:[#allocation8 + $0x780] sm:$0xff]
    %v662 = vld [vmem:[#allocation8 + $0x788] sm:$0xff]
    %v663 = vld [vmem:[#allocation8 + $0x790] sm:$0xff]
    %v664 = vld [vmem:[#allocation8 + $0x798] sm:$0xff]
    %v665 = vld [vmem:[#allocation8 + $0x7a0] sm:$0xff]
    %v666 = vld [vmem:[#allocation8 + $0x7a8] sm:$0xff]
    %v667 = vld [vmem:[#allocation8 + $0x7b0] sm:$0xff]
    %v668 = vld [vmem:[#allocation8 + $0x7b8] sm:$0xff]
    %v669 = vld [vmem:[#allocation8 + $0x7c0] sm:$0xff]
    %v670 = vld [vmem:[#allocation8 + $0x7c8] sm:$0xff]
    %v671 = vld [vmem:[#allocation8 + $0x7d0] sm:$0xff]
    %v672 = vld [vmem:[#allocation8 + $0x7d8] sm:$0xff]
    %v673 = vld [vmem:[#allocation8 + $0x7e0] sm:$0xff]
    %v674 = vld [vmem:[#allocation8 + $0x7e8] sm:$0xff]
    %v675 = vld [vmem:[#allocation8 + $0x7f0] sm:$0xff]
    %v676 = vld [vmem:[#allocation8 + $0x7f8] sm:$0xff]
    %v677 = vld [vmem:[#allocation8 + $0x800] sm:$0xff]
    %v678 = vld [vmem:[#allocation8 + $0x808] sm:$0xff]
    %v679 = vld [vmem:[#allocation8 + $0x810] sm:$0xff]
    %v680 = vld [vmem:[#allocation8 + $0x818] sm:$0xff]
    %v681 = vld [vmem:[#allocation8 + $0x820] sm:$0xff]
    %v682 = vld [vmem:[#allocation8 + $0x828] sm:$0xff]
    %v683 = vld [vmem:[#allocation8 + $0x830] sm:$0xff]
    %v684 = vld [vmem:[#allocation8 + $0x838] sm:$0xff]
    %v685 = vld [vmem:[#allocation8 + $0x840] sm:$0xff]
    %v686 = vld [vmem:[#allocation8 + $0x848] sm:$0xff]
    %v687 = vld [vmem:[#allocation8 + $0x850] sm:$0xff]
    %v688 = vld [vmem:[#allocation8 + $0x858] sm:$0xff]
    %v689 = vld [vmem:[#allocation8 + $0x860] sm:$0xff]
    %v690 = vld [vmem:[#allocation8 + $0x868] sm:$0xff]
    %v691 = vld [vmem:[#allocation8 + $0x870] sm:$0xff]
    %v692 = vld [vmem:[#allocation8 + $0x878] sm:$0xff]
    %v693 = vld [vmem:[#allocation8 + $0x880] sm:$0xff]
    %v694 = vld [vmem:[#allocation8 + $0x888] sm:$0xff]
    %v695 = vld [vmem:[#allocation8 + $0x890] sm:$0xff]
    %v696 = vld [vmem:[#allocation8 + $0x898] sm:$0xff]
    %v697 = vld [vmem:[#allocation8 + $0x8a0] sm:$0xff]
    %v698 = vld [vmem:[#allocation8 + $0x8a8] sm:$0xff]
    %v699 = vld [vmem:[#allocation8 + $0x8b0] sm:$0xff]
    %v700 = vld [vmem:[#allocation8 + $0x8b8] sm:$0xff]
    %v701 = vld [vmem:[#allocation8 + $0x8c0] sm:$0xff]
    %v702 = vld [vmem:[#allocation8 + $0x8c8] sm:$0xff]
    %v703 = vld [vmem:[#allocation8 + $0x8d0] sm:$0xff]
    %v704 = vld [vmem:[#allocation8 + $0x8d8] sm:$0xff]
    %v705 = vld [vmem:[#allocation8 + $0x8e0] sm:$0xff]
    %v706 = vld [vmem:[#allocation8 + $0x8e8] sm:$0xff]
    %v707 = vld [vmem:[#allocation8 + $0x8f0] sm:$0xff]
    %v708 = vld [vmem:[#allocation8 + $0x8f8] sm:$0xff]
    %v709 = vld [vmem:[#allocation8 + $0x900] sm:$0xff]
    %v710 = vld [vmem:[#allocation8 + $0x908] sm:$0xff]
    %v711 = vld [vmem:[#allocation8 + $0x910] sm:$0xff]
    %v712 = vld [vmem:[#allocation8 + $0x918] sm:$0xff]
    %v713 = vld [vmem:[#allocation8 + $0x920] sm:$0xff]
    %v714 = vld [vmem:[#allocation8 + $0x928] sm:$0xff]
    %v715 = vld [vmem:[#allocation8 + $0x930] sm:$0xff]
    %v716 = vld [vmem:[#allocation8 + $0x938] sm:$0xff]
    %v717 = vld [vmem:[#allocation8 + $0x940] sm:$0xff]
    %v718 = vld [vmem:[#allocation8 + $0x948] sm:$0xff]
    %v719 = vld [vmem:[#allocation8 + $0x950] sm:$0xff]
    %v720 = vld [vmem:[#allocation8 + $0x958] sm:$0xff]
    %v721 = vld [vmem:[#allocation8 + $0x960] sm:$0xff]
    %v722 = vld [vmem:[#allocation8 + $0x968] sm:$0xff]
    %v723 = vld [vmem:[#allocation8 + $0x970] sm:$0xff]
    %v724 = vld [vmem:[#allocation8 + $0x978] sm:$0xff]
    %v725 = vld [vmem:[#allocation8 + $0x980] sm:$0xff]
    %v726 = vld [vmem:[#allocation8 + $0x988] sm:$0xff]
    %v727 = vld [vmem:[#allocation8 + $0x990] sm:$0xff]
    %v728 = vld [vmem:[#allocation8 + $0x998] sm:$0xff]
    %v729 = vld [vmem:[#allocation8 + $0x9a0] sm:$0xff]
    %v730 = vld [vmem:[#allocation8 + $0x9a8] sm:$0xff]
    %v731 = vld [vmem:[#allocation8 + $0x9b0] sm:$0xff]
    %v732 = vld [vmem:[#allocation8 + $0x9b8] sm:$0xff]
    %v733 = vld [vmem:[#allocation8 + $0x9c0] sm:$0xff]
    %v734 = vld [vmem:[#allocation8 + $0x9c8] sm:$0xff]
    %v735 = vld [vmem:[#allocation8 + $0x9d0] sm:$0xff]
    %v736 = vld [vmem:[#allocation8 + $0x9d8] sm:$0xff]
    %v737 = vld [vmem:[#allocation8 + $0x9e0] sm:$0xff]
    %v738 = vld [vmem:[#allocation8 + $0x9e8] sm:$0xff]
    %v739 = vld [vmem:[#allocation8 + $0x9f0] sm:$0xff]
    %v740 = vld [vmem:[#allocation8 + $0x9f8] sm:$0xff]
    %v741 = vld [vmem:[#allocation8 + $0xa00] sm:$0xff]
    %v742 = vld [vmem:[#allocation8 + $0xa08] sm:$0xff]
    %v743 = vld [vmem:[#allocation8 + $0xa10] sm:$0xff]
    %v744 = vld [vmem:[#allocation8 + $0xa18] sm:$0xff]
    %v745 = vld [vmem:[#allocation8 + $0xa20] sm:$0xff]
    %v746 = vld [vmem:[#allocation8 + $0xa28] sm:$0xff]
    %v747 = vld [vmem:[#allocation8 + $0xa30] sm:$0xff]
    %v748 = vld [vmem:[#allocation8 + $0xa38] sm:$0xff]
    %v749 = vld [vmem:[#allocation8 + $0xa40] sm:$0xff]
    %v750 = vld [vmem:[#allocation8 + $0xa48] sm:$0xff]
    %v751 = vld [vmem:[#allocation8 + $0xa50] sm:$0xff]
    %v752 = vld [vmem:[#allocation8 + $0xa58] sm:$0xff]
    %v753 = vld [vmem:[#allocation8 + $0xa60] sm:$0xff]
    %v754 = vld [vmem:[#allocation8 + $0xa68] sm:$0xff]
    %v755 = vld [vmem:[#allocation8 + $0xa70] sm:$0xff]
    %v756 = vld [vmem:[#allocation8 + $0xa78] sm:$0xff]
    %v757 = vld [vmem:[#allocation8 + $0xa80] sm:$0xff]
    %v758 = vld [vmem:[#allocation8 + $0xa88] sm:$0xff]
    %v759 = vld [vmem:[#allocation8 + $0xa90] sm:$0xff]
    %v760 = vld [vmem:[#allocation8 + $0xa98] sm:$0xff]
    %v761 = vld [vmem:[#allocation8 + $0xaa0] sm:$0xff]
    %v762 = vld [vmem:[#allocation8 + $0xaa8] sm:$0xff]
    %v763 = vld [vmem:[#allocation8 + $0xab0] sm:$0xff]
    %v764 = vld [vmem:[#allocation8 + $0xab8] sm:$0xff]
    %v765 = vld [vmem:[#allocation8 + $0xac0] sm:$0xff]
    %v766 = vld [vmem:[#allocation8 + $0xac8] sm:$0xff]
    %v767 = vld [vmem:[#allocation8 + $0xad0] sm:$0xff]
    %v768 = vld [vmem:[#allocation8 + $0xad8] sm:$0xff]
    %v769 = vld [vmem:[#allocation8 + $0xae0] sm:$0xff]
    %v770 = vld [vmem:[#allocation8 + $0xae8] sm:$0xff]
    %v771 = vld [vmem:[#allocation8 + $0xaf0] sm:$0xff]
    %v772 = vld [vmem:[#allocation8 + $0xaf8] sm:$0xff]
    %v773 = vld [vmem:[#allocation8 + $0xb00] sm:$0xff]
    %v774 = vld [vmem:[#allocation8 + $0xb08] sm:$0xff]
    %v775 = vld [vmem:[#allocation8 + $0xb10] sm:$0xff]
    %v776 = vld [vmem:[#allocation8 + $0xb18] sm:$0xff]
    %v777 = vld [vmem:[#allocation8 + $0xb20] sm:$0xff]
    %v778 = vld [vmem:[#allocation8 + $0xb28] sm:$0xff]
    %v779 = vld [vmem:[#allocation8 + $0xb30] sm:$0xff]
    %v780 = vld [vmem:[#allocation8 + $0xb38] sm:$0xff]
    %v781 = vld [vmem:[#allocation8 + $0xb40] sm:$0xff]
    %v782 = vld [vmem:[#allocation8 + $0xb48] sm:$0xff]
    %v783 = vld [vmem:[#allocation8 + $0xb50] sm:$0xff]
    %v784 = vld [vmem:[#allocation8 + $0xb58] sm:$0xff]
    %v785 = vld [vmem:[#allocation8 + $0xb60] sm:$0xff]
    %v786 = vld [vmem:[#allocation8 + $0xb68] sm:$0xff]
    %v787 = vld [vmem:[#allocation8 + $0xb70] sm:$0xff]
    %v788 = vld [vmem:[#allocation8 + $0xb78] sm:$0xff]
    %v789 = vld [vmem:[#allocation8 + $0xb80] sm:$0xff]
    %v790 = vld [vmem:[#allocation8 + $0xb88] sm:$0xff]
    %v791 = vld [vmem:[#allocation8 + $0xb90] sm:$0xff]
    %v792 = vld [vmem:[#allocation8 + $0xb98] sm:$0xff]
    %v793 = vld [vmem:[#allocation8 + $0xba0] sm:$0xff]
    %v794 = vld [vmem:[#allocation8 + $0xba8] sm:$0xff]
    %v795 = vld [vmem:[#allocation8 + $0xbb0] sm:$0xff]
    %v796 = vld [vmem:[#allocation8 + $0xbb8] sm:$0xff]
    %v797 = vld [vmem:[#allocation8 + $0xbc0] sm:$0xff]
    %v798 = vld [vmem:[#allocation8 + $0xbc8] sm:$0xff]
    %v799 = vld [vmem:[#allocation8 + $0xbd0] sm:$0xff]
    %v800 = vld [vmem:[#allocation8 + $0xbd8] sm:$0xff]
    %v801 = vld [vmem:[#allocation8 + $0xbe0] sm:$0xff]
    %v802 = vld [vmem:[#allocation8 + $0xbe8] sm:$0xff]
    %v803 = vld [vmem:[#allocation8 + $0xbf0] sm:$0xff]
    %v804 = vld [vmem:[#allocation8 + $0xbf8] sm:$0xff]
    %v805 = vld [vmem:[#allocation8 + $0xc00] sm:$0xff]
    %v806 = vld [vmem:[#allocation8 + $0xc08] sm:$0xff]
    %v807 = vld [vmem:[#allocation8 + $0xc10] sm:$0xff]
    %v808 = vld [vmem:[#allocation8 + $0xc18] sm:$0xff]
    %v809 = vld [vmem:[#allocation8 + $0xc20] sm:$0xff]
    %v810 = vld [vmem:[#allocation8 + $0xc28] sm:$0xff]
    %v811 = vld [vmem:[#allocation8 + $0xc30] sm:$0xff]
    %v812 = vld [vmem:[#allocation8 + $0xc38] sm:$0xff]
    %v813 = vld [vmem:[#allocation8 + $0xc40] sm:$0xff]
    %v814 = vld [vmem:[#allocation8 + $0xc48] sm:$0xff]
    %v815 = vld [vmem:[#allocation8 + $0xc50] sm:$0xff]
    %v816 = vld [vmem:[#allocation8 + $0xc58] sm:$0xff]
    %v817 = vld [vmem:[#allocation8 + $0xc60] sm:$0xff]
    %v818 = vld [vmem:[#allocation8 + $0xc68] sm:$0xff]
    %v819 = vld [vmem:[#allocation8 + $0xc70] sm:$0xff]
    %v820 = vld [vmem:[#allocation8 + $0xc78] sm:$0xff]
    %v821 = vld [vmem:[#allocation8 + $0xc80] sm:$0xff]
    %v822 = vld [vmem:[#allocation8 + $0xc88] sm:$0xff]
    %v823 = vld [vmem:[#allocation8 + $0xc90] sm:$0xff]
    %v824 = vld [vmem:[#allocation8 + $0xc98] sm:$0xff]
    %v825 = vld [vmem:[#allocation8 + $0xca0] sm:$0xff]
    %v826 = vld [vmem:[#allocation8 + $0xca8] sm:$0xff]
    %v827 = vld [vmem:[#allocation8 + $0xcb0] sm:$0xff]
    %v828 = vld [vmem:[#allocation8 + $0xcb8] sm:$0xff]
    %v829 = vld [vmem:[#allocation8 + $0xcc0] sm:$0xff]
    %v830 = vld [vmem:[#allocation8 + $0xcc8] sm:$0xff]
    %v831 = vld [vmem:[#allocation8 + $0xcd0] sm:$0xff]
    %v832 = vld [vmem:[#allocation8 + $0xcd8] sm:$0xff]
    %v833 = vld [vmem:[#allocation8 + $0xce0] sm:$0xff]
    %v834 = vld [vmem:[#allocation8 + $0xce8] sm:$0xff]
    %v835 = vld [vmem:[#allocation8 + $0xcf0] sm:$0xff]
    %v836 = vld [vmem:[#allocation8 + $0xcf8] sm:$0xff]
    %v837 = vld [vmem:[#allocation8 + $0xd00] sm:$0xff]
    %v838 = vld [vmem:[#allocation8 + $0xd08] sm:$0xff]
    %v839 = vld [vmem:[#allocation8 + $0xd10] sm:$0xff]
    %v840 = vld [vmem:[#allocation8 + $0xd18] sm:$0xff]
    %v841 = vld [vmem:[#allocation8 + $0xd20] sm:$0xff]
    %v842 = vld [vmem:[#allocation8 + $0xd28] sm:$0xff]
    %v843 = vld [vmem:[#allocation8 + $0xd30] sm:$0xff]
    %v844 = vld [vmem:[#allocation8 + $0xd38] sm:$0xff]
    %v845 = vld [vmem:[#allocation8 + $0xd40] sm:$0xff]
    %v846 = vld [vmem:[#allocation8 + $0xd48] sm:$0xff]
    %v847 = vld [vmem:[#allocation8 + $0xd50] sm:$0xff]
    %v848 = vld [vmem:[#allocation8 + $0xd58] sm:$0xff]
    %v849 = vld [vmem:[#allocation8 + $0xd60] sm:$0xff]
    %v850 = vld [vmem:[#allocation8 + $0xd68] sm:$0xff]
    %v851 = vld [vmem:[#allocation8 + $0xd70] sm:$0xff]
    %v852 = vld [vmem:[#allocation8 + $0xd78] sm:$0xff]
    %v853 = vld [vmem:[#allocation8 + $0xd80] sm:$0xff]
    %v854 = vld [vmem:[#allocation8 + $0xd88] sm:$0xff]
    %v855 = vld [vmem:[#allocation8 + $0xd90] sm:$0xff]
    %v856 = vld [vmem:[#allocation8 + $0xd98] sm:$0xff]
    %v857 = vld [vmem:[#allocation8 + $0xda0] sm:$0xff]
    %v858 = vld [vmem:[#allocation8 + $0xda8] sm:$0xff]
    %v859 = vld [vmem:[#allocation8 + $0xdb0] sm:$0xff]
    %v860 = vld [vmem:[#allocation8 + $0xdb8] sm:$0xff]
    %v861 = vld [vmem:[#allocation8 + $0xdc0] sm:$0xff]
    %v862 = vld [vmem:[#allocation8 + $0xdc8] sm:$0xff]
    %v863 = vld [vmem:[#allocation8 + $0xdd0] sm:$0xff]
    %v864 = vld [vmem:[#allocation8 + $0xdd8] sm:$0xff]
    %v865 = vld [vmem:[#allocation8 + $0xde0] sm:$0xff]
    %v866 = vld [vmem:[#allocation8 + $0xde8] sm:$0xff]
    %v867 = vld [vmem:[#allocation8 + $0xdf0] sm:$0xff]
    %v868 = vld [vmem:[#allocation8 + $0xdf8] sm:$0xff]
    %v869 = vld [vmem:[#allocation8 + $0xe00] sm:$0xff]
    %v870 = vld [vmem:[#allocation8 + $0xe08] sm:$0xff]
    %v871 = vld [vmem:[#allocation8 + $0xe10] sm:$0xff]
    %v872 = vld [vmem:[#allocation8 + $0xe18] sm:$0xff]
    %v873 = vld [vmem:[#allocation8 + $0xe20] sm:$0xff]
    %v874 = vld [vmem:[#allocation8 + $0xe28] sm:$0xff]
    %v875 = vld [vmem:[#allocation8 + $0xe30] sm:$0xff]
    %v876 = vld [vmem:[#allocation8 + $0xe38] sm:$0xff]
    %v877 = vld [vmem:[#allocation8 + $0xe40] sm:$0xff]
    %v878 = vld [vmem:[#allocation8 + $0xe48] sm:$0xff]
    %v879 = vld [vmem:[#allocation8 + $0xe50] sm:$0xff]
    %v880 = vld [vmem:[#allocation8 + $0xe58] sm:$0xff]
    %v881 = vld [vmem:[#allocation8 + $0xe60] sm:$0xff]
    %v882 = vld [vmem:[#allocation8 + $0xe68] sm:$0xff]
    %v883 = vld [vmem:[#allocation8 + $0xe70] sm:$0xff]
    %v884 = vld [vmem:[#allocation8 + $0xe78] sm:$0xff]
    %v885 = vld [vmem:[#allocation8 + $0xe80] sm:$0xff]
    %v886 = vld [vmem:[#allocation8 + $0xe88] sm:$0xff]
    %v887 = vld [vmem:[#allocation8 + $0xe90] sm:$0xff]
    %v888 = vld [vmem:[#allocation8 + $0xe98] sm:$0xff]
    %v889 = vld [vmem:[#allocation8 + $0xea0] sm:$0xff]
    %v890 = vld [vmem:[#allocation8 + $0xea8] sm:$0xff]
    %v891 = vld [vmem:[#allocation8 + $0xeb0] sm:$0xff]
    %v892 = vld [vmem:[#allocation8 + $0xeb8] sm:$0xff]
    %v893 = vld [vmem:[#allocation8 + $0xec0] sm:$0xff]
    %v894 = vld [vmem:[#allocation8 + $0xec8] sm:$0xff]
    %v895 = vld [vmem:[#allocation8 + $0xed0] sm:$0xff]
    %v896 = vld [vmem:[#allocation8 + $0xed8] sm:$0xff]
    %v897 = vld [vmem:[#allocation8 + $0xee0] sm:$0xff]
    %v898 = vld [vmem:[#allocation8 + $0xee8] sm:$0xff]
    %v899 = vld [vmem:[#allocation8 + $0xef0] sm:$0xff]
    %v900 = vld [vmem:[#allocation8 + $0xef8] sm:$0xff]
    %v901 = vld [vmem:[#allocation8 + $0xf00] sm:$0xff]
    %v902 = vld [vmem:[#allocation8 + $0xf08] sm:$0xff]
    %v903 = vld [vmem:[#allocation8 + $0xf10] sm:$0xff]
    %v904 = vld [vmem:[#allocation8 + $0xf18] sm:$0xff]
    %v905 = vld [vmem:[#allocation8 + $0xf20] sm:$0xff]
    %v906 = vld [vmem:[#allocation8 + $0xf28] sm:$0xff]
    %v907 = vld [vmem:[#allocation8 + $0xf30] sm:$0xff]
    %v908 = vld [vmem:[#allocation8 + $0xf38] sm:$0xff]
    %v909 = vld [vmem:[#allocation8 + $0xf40] sm:$0xff]
    %v910 = vld [vmem:[#allocation8 + $0xf48] sm:$0xff]
    %v911 = vld [vmem:[#allocation8 + $0xf50] sm:$0xff]
    %v912 = vld [vmem:[#allocation8 + $0xf58] sm:$0xff]
    %v913 = vld [vmem:[#allocation8 + $0xf60] sm:$0xff]
    %v914 = vld [vmem:[#allocation8 + $0xf68] sm:$0xff]
    %v915 = vld [vmem:[#allocation8 + $0xf70] sm:$0xff]
    %v916 = vld [vmem:[#allocation8 + $0xf78] sm:$0xff]
    %v917 = vld [vmem:[#allocation8 + $0xf80] sm:$0xff]
    %v918 = vld [vmem:[#allocation8 + $0xf88] sm:$0xff]
    %v919 = vld [vmem:[#allocation8 + $0xf90] sm:$0xff]
    %v920 = vld [vmem:[#allocation8 + $0xf98] sm:$0xff]
    %v921 = vld [vmem:[#allocation8 + $0xfa0] sm:$0xff]
    %v922 = vld [vmem:[#allocation8 + $0xfa8] sm:$0xff]
    %v923 = vld [vmem:[#allocation8 + $0xfb0] sm:$0xff]
    %v924 = vld [vmem:[#allocation8 + $0xfb8] sm:$0xff]
    %v925 = vld [vmem:[#allocation8 + $0xfc0] sm:$0xff]
    %v926 = vld [vmem:[#allocation8 + $0xfc8] sm:$0xff]
    %v927 = vld [vmem:[#allocation8 + $0xfd0] sm:$0xff]
    %v928 = vld [vmem:[#allocation8 + $0xfd8] sm:$0xff]
    %v929 = vld [vmem:[#allocation8 + $0xfe0] sm:$0xff]
    %v930 = vld [vmem:[#allocation8 + $0xfe8] sm:$0xff]
    %v931 = vld [vmem:[#allocation8 + $0xff0] sm:$0xff]
    %v932 = vld [vmem:[#allocation8 + $0xff8] sm:$0xff]
    %v933 = vld [vmem:[#allocation10] sm:$0xf]
    %v935 = vperm.slane %v933, 0
    %v936 = vperm.slane %v933, 1
    %v937 = vperm.slane %v933, 2
    %v938 = vperm.slane %v933, 3
    %943 = vmatpush.msra.mxu0 %v481
    %944 = vmatpush.msra.mxu0 %v477
    %945 = vmatpush.msra.mxu0 %v473
    %946 = vmatpush.msra.mxu0 %v469
    %947 = vmatpush.msra.mxu0 %v465
    %948 = vmatpush.msra.mxu0 %v461
    %949 = vmatpush.msra.mxu0 %v457
    %950 = vmatpush.msra.mxu0 %v453
    %951 = vmatpush.msra.mxu0 %v449
    %952 = vmatpush.msra.mxu0 %v445
    %953 = vmatpush.msra.mxu0 %v441
    %954 = vmatpush.msra.mxu0 %v437
    %955 = vmatpush.msra.mxu0 %v433
    %956 = vmatpush.msra.mxu0 %v429
    %957 = vmatpush.msra.mxu0 %v425
    %958 = vmatpush.msra.mxu0 %v421
    %959 = vmatmul.f32.gmra.mxu0 %v405
    %v960 = vpop.f32.mrf.mxu0
    %v961 = vadd.f32 %v935, %v960
    %962 = vmatmul.f32.gmra.mxu0 %v413
    %v963 = vpop.f32.mrf.mxu0
    %v964 = vadd.f32 %v935, %v963
    %965 = vdwg.mxu0
    %966 = vmatpush.msra.mxu0 %v545
    %967 = vmatpush.msra.mxu0 %v541
    %968 = vmatpush.msra.mxu0 %v537
    %969 = vmatpush.msra.mxu0 %v533
    %970 = vmatpush.msra.mxu0 %v529
    %971 = vmatpush.msra.mxu0 %v525
    %972 = vmatpush.msra.mxu0 %v521
    %973 = vmatpush.msra.mxu0 %v517
    %974 = vmatpush.msra.mxu0 %v513
    %975 = vmatpush.msra.mxu0 %v509
    %976 = vmatpush.msra.mxu0 %v505
    %977 = vmatpush.msra.mxu0 %v501
    %978 = vmatpush.msra.mxu0 %v497
    %979 = vmatpush.msra.mxu0 %v493
    %980 = vmatpush.msra.mxu0 %v489
    %981 = vmatpush.msra.mxu0 %v485
    %982 = vmatmul.f32.gmra.mxu0 %v406
    %v983 = vpop.f32.mrf.mxu0
    %v984 = vadd.f32 %v961, %v983
    %985 = vmatmul.f32.gmra.mxu0 %v414
    %v986 = vpop.f32.mrf.mxu0
    %v987 = vadd.f32 %v964, %v986
    %988 = vdwg.mxu0
    %989 = vmatpush.msra.mxu0 %v609
    %990 = vmatpush.msra.mxu0 %v605
    %991 = vmatpush.msra.mxu0 %v601
    %992 = vmatpush.msra.mxu0 %v597
    %993 = vmatpush.msra.mxu0 %v593
    %994 = vmatpush.msra.mxu0 %v589
    %995 = vmatpush.msra.mxu0 %v585
    %996 = vmatpush.msra.mxu0 %v581
    %997 = vmatpush.msra.mxu0 %v577
    %998 = vmatpush.msra.mxu0 %v573
    %999 = vmatpush.msra.mxu0 %v569
    %1000 = vmatpush.msra.mxu0 %v565
    %1001 = vmatpush.msra.mxu0 %v561
    %1002 = vmatpush.msra.mxu0 %v557
    %1003 = vmatpush.msra.mxu0 %v553
    %1004 = vmatpush.msra.mxu0 %v549
    %1005 = vmatmul.f32.gmra.mxu0 %v407
    %v1006 = vpop.f32.mrf.mxu0
    %v1007 = vadd.f32 %v984, %v1006
    %1008 = vmatmul.f32.gmra.mxu0 %v415
    %v1009 = vpop.f32.mrf.mxu0
    %v1010 = vadd.f32 %v987, %v1009
    %1011 = vdwg.mxu0
    %1012 = vmatpush.msra.mxu0 %v673
    %1013 = vmatpush.msra.mxu0 %v669
    %1014 = vmatpush.msra.mxu0 %v665
    %1015 = vmatpush.msra.mxu0 %v661
    %1016 = vmatpush.msra.mxu0 %v657
    %1017 = vmatpush.msra.mxu0 %v653
    %1018 = vmatpush.msra.mxu0 %v649
    %1019 = vmatpush.msra.mxu0 %v645
    %1020 = vmatpush.msra.mxu0 %v641
    %1021 = vmatpush.msra.mxu0 %v637
    %1022 = vmatpush.msra.mxu0 %v633
    %1023 = vmatpush.msra.mxu0 %v629
    %1024 = vmatpush.msra.mxu0 %v625
    %1025 = vmatpush.msra.mxu0 %v621
    %1026 = vmatpush.msra.mxu0 %v617
    %1027 = vmatpush.msra.mxu0 %v613
    %1028 = vmatmul.f32.gmra.mxu0 %v408
    %v1029 = vpop.f32.mrf.mxu0
    %v1030 = vadd.f32 %v1007, %v1029
    %1031 = vmatmul.f32.gmra.mxu0 %v416
    %v1032 = vpop.f32.mrf.mxu0
    %v1033 = vadd.f32 %v1010, %v1032
    %1034 = vdwg.mxu0
    %1035 = vmatpush.msra.mxu0 %v737
    %1036 = vmatpush.msra.mxu0 %v733
    %1037 = vmatpush.msra.mxu0 %v729
    %1038 = vmatpush.msra.mxu0 %v725
    %1039 = vmatpush.msra.mxu0 %v721
    %1040 = vmatpush.msra.mxu0 %v717
    %1041 = vmatpush.msra.mxu0 %v713
    %1042 = vmatpush.msra.mxu0 %v709
    %1043 = vmatpush.msra.mxu0 %v705
    %1044 = vmatpush.msra.mxu0 %v701
    %1045 = vmatpush.msra.mxu0 %v697
    %1046 = vmatpush.msra.mxu0 %v693
    %1047 = vmatpush.msra.mxu0 %v689
    %1048 = vmatpush.msra.mxu0 %v685
    %1049 = vmatpush.msra.mxu0 %v681
    %1050 = vmatpush.msra.mxu0 %v677
    %1051 = vmatmul.f32.gmra.mxu0 %v409
    %v1052 = vpop.f32.mrf.mxu0
    %v1053 = vadd.f32 %v1030, %v1052
    %1054 = vmatmul.f32.gmra.mxu0 %v417
    %v1055 = vpop.f32.mrf.mxu0
    %v1056 = vadd.f32 %v1033, %v1055
    %1057 = vdwg.mxu0
    %1058 = vmatpush.msra.mxu0 %v801
    %1059 = vmatpush.msra.mxu0 %v797
    %1060 = vmatpush.msra.mxu0 %v793
    %1061 = vmatpush.msra.mxu0 %v789
    %1062 = vmatpush.msra.mxu0 %v785
    %1063 = vmatpush.msra.mxu0 %v781
    %1064 = vmatpush.msra.mxu0 %v777
    %1065 = vmatpush.msra.mxu0 %v773
    %1066 = vmatpush.msra.mxu0 %v769
    %1067 = vmatpush.msra.mxu0 %v765
    %1068 = vmatpush.msra.mxu0 %v761
    %1069 = vmatpush.msra.mxu0 %v757
    %1070 = vmatpush.msra.mxu0 %v753
    %1071 = vmatpush.msra.mxu0 %v749
    %1072 = vmatpush.msra.mxu0 %v745
    %1073 = vmatpush.msra.mxu0 %v741
    %1074 = vmatmul.f32.gmra.mxu0 %v410
    %v1075 = vpop.f32.mrf.mxu0
    %v1076 = vadd.f32 %v1053, %v1075
    %1077 = vmatmul.f32.gmra.mxu0 %v418
    %v1078 = vpop.f32.mrf.mxu0
    %v1079 = vadd.f32 %v1056, %v1078
    %1080 = vdwg.mxu0
    %1081 = vmatpush.msra.mxu0 %v865
    %1082 = vmatpush.msra.mxu0 %v861
    %1083 = vmatpush.msra.mxu0 %v857
    %1084 = vmatpush.msra.mxu0 %v853
    %1085 = vmatpush.msra.mxu0 %v849
    %1086 = vmatpush.msra.mxu0 %v845
    %1087 = vmatpush.msra.mxu0 %v841
    %1088 = vmatpush.msra.mxu0 %v837
    %1089 = vmatpush.msra.mxu0 %v833
    %1090 = vmatpush.msra.mxu0 %v829
    %1091 = vmatpush.msra.mxu0 %v825
    %1092 = vmatpush.msra.mxu0 %v821
    %1093 = vmatpush.msra.mxu0 %v817
    %1094 = vmatpush.msra.mxu0 %v813
    %1095 = vmatpush.msra.mxu0 %v809
    %1096 = vmatpush.msra.mxu0 %v805
    %1097 = vmatmul.f32.gmra.mxu0 %v411
    %v1098 = vpop.f32.mrf.mxu0
    %v1099 = vadd.f32 %v1076, %v1098
    %1100 = vmatmul.f32.gmra.mxu0 %v419
    %v1101 = vpop.f32.mrf.mxu0
    %v1102 = vadd.f32 %v1079, %v1101
    %1103 = vdwg.mxu0
    %1104 = vmatpush.msra.mxu0 %v929
    %1105 = vmatpush.msra.mxu0 %v925
    %1106 = vmatpush.msra.mxu0 %v921
    %1107 = vmatpush.msra.mxu0 %v917
    %1108 = vmatpush.msra.mxu0 %v913
    %1109 = vmatpush.msra.mxu0 %v909
    %1110 = vmatpush.msra.mxu0 %v905
    %1111 = vmatpush.msra.mxu0 %v901
    %1112 = vmatpush.msra.mxu0 %v897
    %1113 = vmatpush.msra.mxu0 %v893
    %1114 = vmatpush.msra.mxu0 %v889
    %1115 = vmatpush.msra.mxu0 %v885
    %1116 = vmatpush.msra.mxu0 %v881
    %1117 = vmatpush.msra.mxu0 %v877
    %1118 = vmatpush.msra.mxu0 %v873
    %1119 = vmatpush.msra.mxu0 %v869
    %1120 = vmatmul.f32.gmra.mxu0 %v412
    %v1121 = vpop.f32.mrf.mxu0
    %v1122 = vadd.f32 %v1099, %v1121
    %1123 = vmatmul.f32.gmra.mxu0 %v420
    %v1124 = vpop.f32.mrf.mxu0
    %v1125 = vadd.f32 %v1102, %v1124
    %1126 = vdwg.mxu0
    %1127 = vmatpush.msra.mxu0 %v482
    %1128 = vmatpush.msra.mxu0 %v478
    %1129 = vmatpush.msra.mxu0 %v474
    %1130 = vmatpush.msra.mxu0 %v470
    %1131 = vmatpush.msra.mxu0 %v466
    %1132 = vmatpush.msra.mxu0 %v462
    %1133 = vmatpush.msra.mxu0 %v458
    %1134 = vmatpush.msra.mxu0 %v454
    %1135 = vmatpush.msra.mxu0 %v450
    %1136 = vmatpush.msra.mxu0 %v446
    %1137 = vmatpush.msra.mxu0 %v442
    %1138 = vmatpush.msra.mxu0 %v438
    %1139 = vmatpush.msra.mxu0 %v434
    %1140 = vmatpush.msra.mxu0 %v430
    %1141 = vmatpush.msra.mxu0 %v426
    %1142 = vmatpush.msra.mxu0 %v422
    %1143 = vmatmul.f32.gmra.mxu0 %v405
    %v1144 = vpop.f32.mrf.mxu0
    %v1145 = vadd.f32 %v936, %v1144
    %1146 = vmatmul.f32.gmra.mxu0 %v413
    %v1147 = vpop.f32.mrf.mxu0
    %v1148 = vadd.f32 %v936, %v1147
    %1149 = vdwg.mxu0
    %1150 = vmatpush.msra.mxu0 %v546
    %1151 = vmatpush.msra.mxu0 %v542
    %1152 = vmatpush.msra.mxu0 %v538
    %1153 = vmatpush.msra.mxu0 %v534
    %1154 = vmatpush.msra.mxu0 %v530
    %1155 = vmatpush.msra.mxu0 %v526
    %1156 = vmatpush.msra.mxu0 %v522
    %1157 = vmatpush.msra.mxu0 %v518
    %1158 = vmatpush.msra.mxu0 %v514
    %1159 = vmatpush.msra.mxu0 %v510
    %1160 = vmatpush.msra.mxu0 %v506
    %1161 = vmatpush.msra.mxu0 %v502
    %1162 = vmatpush.msra.mxu0 %v498
    %1163 = vmatpush.msra.mxu0 %v494
    %1164 = vmatpush.msra.mxu0 %v490
    %1165 = vmatpush.msra.mxu0 %v486
    %1166 = vmatmul.f32.gmra.mxu0 %v406
    %v1167 = vpop.f32.mrf.mxu0
    %v1168 = vadd.f32 %v1145, %v1167
    %1169 = vmatmul.f32.gmra.mxu0 %v414
    %v1170 = vpop.f32.mrf.mxu0
    %v1171 = vadd.f32 %v1148, %v1170
    %1172 = vdwg.mxu0
    %1173 = vmatpush.msra.mxu0 %v610
    %1174 = vmatpush.msra.mxu0 %v606
    %1175 = vmatpush.msra.mxu0 %v602
    %1176 = vmatpush.msra.mxu0 %v598
    %1177 = vmatpush.msra.mxu0 %v594
    %1178 = vmatpush.msra.mxu0 %v590
    %1179 = vmatpush.msra.mxu0 %v586
    %1180 = vmatpush.msra.mxu0 %v582
    %1181 = vmatpush.msra.mxu0 %v578
    %1182 = vmatpush.msra.mxu0 %v574
    %1183 = vmatpush.msra.mxu0 %v570
    %1184 = vmatpush.msra.mxu0 %v566
    %1185 = vmatpush.msra.mxu0 %v562
    %1186 = vmatpush.msra.mxu0 %v558
    %1187 = vmatpush.msra.mxu0 %v554
    %1188 = vmatpush.msra.mxu0 %v550
    %1189 = vmatmul.f32.gmra.mxu0 %v407
    %v1190 = vpop.f32.mrf.mxu0
    %v1191 = vadd.f32 %v1168, %v1190
    %1192 = vmatmul.f32.gmra.mxu0 %v415
    %v1193 = vpop.f32.mrf.mxu0
    %v1194 = vadd.f32 %v1171, %v1193
    %1195 = vdwg.mxu0
    %1196 = vmatpush.msra.mxu0 %v674
    %1197 = vmatpush.msra.mxu0 %v670
    %1198 = vmatpush.msra.mxu0 %v666
    %1199 = vmatpush.msra.mxu0 %v662
    %1200 = vmatpush.msra.mxu0 %v658
    %1201 = vmatpush.msra.mxu0 %v654
    %1202 = vmatpush.msra.mxu0 %v650
    %1203 = vmatpush.msra.mxu0 %v646
    %1204 = vmatpush.msra.mxu0 %v642
    %1205 = vmatpush.msra.mxu0 %v638
    %1206 = vmatpush.msra.mxu0 %v634
    %1207 = vmatpush.msra.mxu0 %v630
    %1208 = vmatpush.msra.mxu0 %v626
    %1209 = vmatpush.msra.mxu0 %v622
    %1210 = vmatpush.msra.mxu0 %v618
    %1211 = vmatpush.msra.mxu0 %v614
    %1212 = vmatmul.f32.gmra.mxu0 %v408
    %v1213 = vpop.f32.mrf.mxu0
    %v1214 = vadd.f32 %v1191, %v1213
    %1215 = vmatmul.f32.gmra.mxu0 %v416
    %v1216 = vpop.f32.mrf.mxu0
    %v1217 = vadd.f32 %v1194, %v1216
    %1218 = vdwg.mxu0
    %1219 = vmatpush.msra.mxu0 %v738
    %1220 = vmatpush.msra.mxu0 %v734
    %1221 = vmatpush.msra.mxu0 %v730
    %1222 = vmatpush.msra.mxu0 %v726
    %1223 = vmatpush.msra.mxu0 %v722
    %1224 = vmatpush.msra.mxu0 %v718
    %1225 = vmatpush.msra.mxu0 %v714
    %1226 = vmatpush.msra.mxu0 %v710
    %1227 = vmatpush.msra.mxu0 %v706
    %1228 = vmatpush.msra.mxu0 %v702
    %1229 = vmatpush.msra.mxu0 %v698
    %1230 = vmatpush.msra.mxu0 %v694
    %1231 = vmatpush.msra.mxu0 %v690
    %1232 = vmatpush.msra.mxu0 %v686
    %1233 = vmatpush.msra.mxu0 %v682
    %1234 = vmatpush.msra.mxu0 %v678
    %1235 = vmatmul.f32.gmra.mxu0 %v409
    %v1236 = vpop.f32.mrf.mxu0
    %v1237 = vadd.f32 %v1214, %v1236
    %1238 = vmatmul.f32.gmra.mxu0 %v417
    %v1239 = vpop.f32.mrf.mxu0
    %v1240 = vadd.f32 %v1217, %v1239
    %1241 = vdwg.mxu0
    %1242 = vmatpush.msra.mxu0 %v802
    %1243 = vmatpush.msra.mxu0 %v798
    %1244 = vmatpush.msra.mxu0 %v794
    %1245 = vmatpush.msra.mxu0 %v790
    %1246 = vmatpush.msra.mxu0 %v786
    %1247 = vmatpush.msra.mxu0 %v782
    %1248 = vmatpush.msra.mxu0 %v778
    %1249 = vmatpush.msra.mxu0 %v774
    %1250 = vmatpush.msra.mxu0 %v770
    %1251 = vmatpush.msra.mxu0 %v766
    %1252 = vmatpush.msra.mxu0 %v762
    %1253 = vmatpush.msra.mxu0 %v758
    %1254 = vmatpush.msra.mxu0 %v754
    %1255 = vmatpush.msra.mxu0 %v750
    %1256 = vmatpush.msra.mxu0 %v746
    %1257 = vmatpush.msra.mxu0 %v742
    %1258 = vmatmul.f32.gmra.mxu0 %v410
    %v1259 = vpop.f32.mrf.mxu0
    %v1260 = vadd.f32 %v1237, %v1259
    %1261 = vmatmul.f32.gmra.mxu0 %v418
    %v1262 = vpop.f32.mrf.mxu0
    %v1263 = vadd.f32 %v1240, %v1262
    %1264 = vdwg.mxu0
    %1265 = vmatpush.msra.mxu0 %v866
    %1266 = vmatpush.msra.mxu0 %v862
    %1267 = vmatpush.msra.mxu0 %v858
    %1268 = vmatpush.msra.mxu0 %v854
    %1269 = vmatpush.msra.mxu0 %v850
    %1270 = vmatpush.msra.mxu0 %v846
    %1271 = vmatpush.msra.mxu0 %v842
    %1272 = vmatpush.msra.mxu0 %v838
    %1273 = vmatpush.msra.mxu0 %v834
    %1274 = vmatpush.msra.mxu0 %v830
    %1275 = vmatpush.msra.mxu0 %v826
    %1276 = vmatpush.msra.mxu0 %v822
    %1277 = vmatpush.msra.mxu0 %v818
    %1278 = vmatpush.msra.mxu0 %v814
    %1279 = vmatpush.msra.mxu0 %v810
    %1280 = vmatpush.msra.mxu0 %v806
    %1281 = vmatmul.f32.gmra.mxu0 %v411
    %v1282 = vpop.f32.mrf.mxu0
    %v1283 = vadd.f32 %v1260, %v1282
    %1284 = vmatmul.f32.gmra.mxu0 %v419
    %v1285 = vpop.f32.mrf.mxu0
    %v1286 = vadd.f32 %v1263, %v1285
    %1287 = vdwg.mxu0
    %1288 = vmatpush.msra.mxu0 %v930
    %1289 = vmatpush.msra.mxu0 %v926
    %1290 = vmatpush.msra.mxu0 %v922
    %1291 = vmatpush.msra.mxu0 %v918
    %1292 = vmatpush.msra.mxu0 %v914
    %1293 = vmatpush.msra.mxu0 %v910
    %1294 = vmatpush.msra.mxu0 %v906
    %1295 = vmatpush.msra.mxu0 %v902
    %1296 = vmatpush.msra.mxu0 %v898
    %1297 = vmatpush.msra.mxu0 %v894
    %1298 = vmatpush.msra.mxu0 %v890
    %1299 = vmatpush.msra.mxu0 %v886
    %1300 = vmatpush.msra.mxu0 %v882
    %1301 = vmatpush.msra.mxu0 %v878
    %1302 = vmatpush.msra.mxu0 %v874
    %1303 = vmatpush.msra.mxu0 %v870
    %1304 = vmatmul.f32.gmra.mxu0 %v412
    %v1305 = vpop.f32.mrf.mxu0
    %v1306 = vadd.f32 %v1283, %v1305
    %1307 = vmatmul.f32.gmra.mxu0 %v420
    %v1308 = vpop.f32.mrf.mxu0
    %v1309 = vadd.f32 %v1286, %v1308
    %1310 = vdwg.mxu0
    %1311 = vmatpush.msra.mxu0 %v483
    %1312 = vmatpush.msra.mxu0 %v479
    %1313 = vmatpush.msra.mxu0 %v475
    %1314 = vmatpush.msra.mxu0 %v471
    %1315 = vmatpush.msra.mxu0 %v467
    %1316 = vmatpush.msra.mxu0 %v463
    %1317 = vmatpush.msra.mxu0 %v459
    %1318 = vmatpush.msra.mxu0 %v455
    %1319 = vmatpush.msra.mxu0 %v451
    %1320 = vmatpush.msra.mxu0 %v447
    %1321 = vmatpush.msra.mxu0 %v443
    %1322 = vmatpush.msra.mxu0 %v439
    %1323 = vmatpush.msra.mxu0 %v435
    %1324 = vmatpush.msra.mxu0 %v431
    %1325 = vmatpush.msra.mxu0 %v427
    %1326 = vmatpush.msra.mxu0 %v423
    %1327 = vmatmul.f32.gmra.mxu0 %v405
    %v1328 = vpop.f32.mrf.mxu0
    %v1329 = vadd.f32 %v937, %v1328
    %1330 = vmatmul.f32.gmra.mxu0 %v413
    %v1331 = vpop.f32.mrf.mxu0
    %v1332 = vadd.f32 %v937, %v1331
    %1333 = vdwg.mxu0
    %1334 = vmatpush.msra.mxu0 %v547
    %1335 = vmatpush.msra.mxu0 %v543
    %1336 = vmatpush.msra.mxu0 %v539
    %1337 = vmatpush.msra.mxu0 %v535
    %1338 = vmatpush.msra.mxu0 %v531
    %1339 = vmatpush.msra.mxu0 %v527
    %1340 = vmatpush.msra.mxu0 %v523
    %1341 = vmatpush.msra.mxu0 %v519
    %1342 = vmatpush.msra.mxu0 %v515
    %1343 = vmatpush.msra.mxu0 %v511
    %1344 = vmatpush.msra.mxu0 %v507
    %1345 = vmatpush.msra.mxu0 %v503
    %1346 = vmatpush.msra.mxu0 %v499
    %1347 = vmatpush.msra.mxu0 %v495
    %1348 = vmatpush.msra.mxu0 %v491
    %1349 = vmatpush.msra.mxu0 %v487
    %1350 = vmatmul.f32.gmra.mxu0 %v406
    %v1351 = vpop.f32.mrf.mxu0
    %v1352 = vadd.f32 %v1329, %v1351
    %1353 = vmatmul.f32.gmra.mxu0 %v414
    %v1354 = vpop.f32.mrf.mxu0
    %v1355 = vadd.f32 %v1332, %v1354
    %1356 = vdwg.mxu0
    %1357 = vmatpush.msra.mxu0 %v611
    %1358 = vmatpush.msra.mxu0 %v607
    %1359 = vmatpush.msra.mxu0 %v603
    %1360 = vmatpush.msra.mxu0 %v599
    %1361 = vmatpush.msra.mxu0 %v595
    %1362 = vmatpush.msra.mxu0 %v591
    %1363 = vmatpush.msra.mxu0 %v587
    %1364 = vmatpush.msra.mxu0 %v583
    %1365 = vmatpush.msra.mxu0 %v579
    %1366 = vmatpush.msra.mxu0 %v575
    %1367 = vmatpush.msra.mxu0 %v571
    %1368 = vmatpush.msra.mxu0 %v567
    %1369 = vmatpush.msra.mxu0 %v563
    %1370 = vmatpush.msra.mxu0 %v559
    %1371 = vmatpush.msra.mxu0 %v555
    %1372 = vmatpush.msra.mxu0 %v551
    %1373 = vmatmul.f32.gmra.mxu0 %v407
    %v1374 = vpop.f32.mrf.mxu0
    %v1375 = vadd.f32 %v1352, %v1374
    %1376 = vmatmul.f32.gmra.mxu0 %v415
    %v1377 = vpop.f32.mrf.mxu0
    %v1378 = vadd.f32 %v1355, %v1377
    %1379 = vdwg.mxu0
    %1380 = vmatpush.msra.mxu0 %v675
    %1381 = vmatpush.msra.mxu0 %v671
    %1382 = vmatpush.msra.mxu0 %v667
    %1383 = vmatpush.msra.mxu0 %v663
    %1384 = vmatpush.msra.mxu0 %v659
    %1385 = vmatpush.msra.mxu0 %v655
    %1386 = vmatpush.msra.mxu0 %v651
    %1387 = vmatpush.msra.mxu0 %v647
    %1388 = vmatpush.msra.mxu0 %v643
    %1389 = vmatpush.msra.mxu0 %v639
    %1390 = vmatpush.msra.mxu0 %v635
    %1391 = vmatpush.msra.mxu0 %v631
    %1392 = vmatpush.msra.mxu0 %v627
    %1393 = vmatpush.msra.mxu0 %v623
    %1394 = vmatpush.msra.mxu0 %v619
    %1395 = vmatpush.msra.mxu0 %v615
    %1396 = vmatmul.f32.gmra.mxu0 %v408
    %v1397 = vpop.f32.mrf.mxu0
    %v1398 = vadd.f32 %v1375, %v1397
    %1399 = vmatmul.f32.gmra.mxu0 %v416
    %v1400 = vpop.f32.mrf.mxu0
    %v1401 = vadd.f32 %v1378, %v1400
    %1402 = vdwg.mxu0
    %1403 = vmatpush.msra.mxu0 %v739
    %1404 = vmatpush.msra.mxu0 %v735
    %1405 = vmatpush.msra.mxu0 %v731
    %1406 = vmatpush.msra.mxu0 %v727
    %1407 = vmatpush.msra.mxu0 %v723
    %1408 = vmatpush.msra.mxu0 %v719
    %1409 = vmatpush.msra.mxu0 %v715
    %1410 = vmatpush.msra.mxu0 %v711
    %1411 = vmatpush.msra.mxu0 %v707
    %1412 = vmatpush.msra.mxu0 %v703
    %1413 = vmatpush.msra.mxu0 %v699
    %1414 = vmatpush.msra.mxu0 %v695
    %1415 = vmatpush.msra.mxu0 %v691
    %1416 = vmatpush.msra.mxu0 %v687
    %1417 = vmatpush.msra.mxu0 %v683
    %1418 = vmatpush.msra.mxu0 %v679
    %1419 = vmatmul.f32.gmra.mxu0 %v409
    %v1420 = vpop.f32.mrf.mxu0
    %v1421 = vadd.f32 %v1398, %v1420
    %1422 = vmatmul.f32.gmra.mxu0 %v417
    %v1423 = vpop.f32.mrf.mxu0
    %v1424 = vadd.f32 %v1401, %v1423
    %1425 = vdwg.mxu0
    %1426 = vmatpush.msra.mxu0 %v803
    %1427 = vmatpush.msra.mxu0 %v799
    %1428 = vmatpush.msra.mxu0 %v795
    %1429 = vmatpush.msra.mxu0 %v791
    %1430 = vmatpush.msra.mxu0 %v787
    %1431 = vmatpush.msra.mxu0 %v783
    %1432 = vmatpush.msra.mxu0 %v779
    %1433 = vmatpush.msra.mxu0 %v775
    %1434 = vmatpush.msra.mxu0 %v771
    %1435 = vmatpush.msra.mxu0 %v767
    %1436 = vmatpush.msra.mxu0 %v763
    %1437 = vmatpush.msra.mxu0 %v759
    %1438 = vmatpush.msra.mxu0 %v755
    %1439 = vmatpush.msra.mxu0 %v751
    %1440 = vmatpush.msra.mxu0 %v747
    %1441 = vmatpush.msra.mxu0 %v743
    %1442 = vmatmul.f32.gmra.mxu0 %v410
    %v1443 = vpop.f32.mrf.mxu0
    %v1444 = vadd.f32 %v1421, %v1443
    %1445 = vmatmul.f32.gmra.mxu0 %v418
    %v1446 = vpop.f32.mrf.mxu0
    %v1447 = vadd.f32 %v1424, %v1446
    %1448 = vdwg.mxu0
    %1449 = vmatpush.msra.mxu0 %v867
    %1450 = vmatpush.msra.mxu0 %v863
    %1451 = vmatpush.msra.mxu0 %v859
    %1452 = vmatpush.msra.mxu0 %v855
    %1453 = vmatpush.msra.mxu0 %v851
    %1454 = vmatpush.msra.mxu0 %v847
    %1455 = vmatpush.msra.mxu0 %v843
    %1456 = vmatpush.msra.mxu0 %v839
    %1457 = vmatpush.msra.mxu0 %v835
    %1458 = vmatpush.msra.mxu0 %v831
    %1459 = vmatpush.msra.mxu0 %v827
    %1460 = vmatpush.msra.mxu0 %v823
    %1461 = vmatpush.msra.mxu0 %v819
    %1462 = vmatpush.msra.mxu0 %v815
    %1463 = vmatpush.msra.mxu0 %v811
    %1464 = vmatpush.msra.mxu0 %v807
    %1465 = vmatmul.f32.gmra.mxu0 %v411
    %v1466 = vpop.f32.mrf.mxu0
    %v1467 = vadd.f32 %v1444, %v1466
    %1468 = vmatmul.f32.gmra.mxu0 %v419
    %v1469 = vpop.f32.mrf.mxu0
    %v1470 = vadd.f32 %v1447, %v1469
    %1471 = vdwg.mxu0
    %1472 = vmatpush.msra.mxu0 %v931
    %1473 = vmatpush.msra.mxu0 %v927
    %1474 = vmatpush.msra.mxu0 %v923
    %1475 = vmatpush.msra.mxu0 %v919
    %1476 = vmatpush.msra.mxu0 %v915
    %1477 = vmatpush.msra.mxu0 %v911
    %1478 = vmatpush.msra.mxu0 %v907
    %1479 = vmatpush.msra.mxu0 %v903
    %1480 = vmatpush.msra.mxu0 %v899
    %1481 = vmatpush.msra.mxu0 %v895
    %1482 = vmatpush.msra.mxu0 %v891
    %1483 = vmatpush.msra.mxu0 %v887
    %1484 = vmatpush.msra.mxu0 %v883
    %1485 = vmatpush.msra.mxu0 %v879
    %1486 = vmatpush.msra.mxu0 %v875
    %1487 = vmatpush.msra.mxu0 %v871
    %1488 = vmatmul.f32.gmra.mxu0 %v412
    %v1489 = vpop.f32.mrf.mxu0
    %v1490 = vadd.f32 %v1467, %v1489
    %1491 = vmatmul.f32.gmra.mxu0 %v420
    %v1492 = vpop.f32.mrf.mxu0
    %v1493 = vadd.f32 %v1470, %v1492
    %1494 = vdwg.mxu0
    %1495 = vmatpush.msra.mxu0 %v484
    %1496 = vmatpush.msra.mxu0 %v480
    %1497 = vmatpush.msra.mxu0 %v476
    %1498 = vmatpush.msra.mxu0 %v472
    %1499 = vmatpush.msra.mxu0 %v468
    %1500 = vmatpush.msra.mxu0 %v464
    %1501 = vmatpush.msra.mxu0 %v460
    %1502 = vmatpush.msra.mxu0 %v456
    %1503 = vmatpush.msra.mxu0 %v452
    %1504 = vmatpush.msra.mxu0 %v448
    %1505 = vmatpush.msra.mxu0 %v444
    %1506 = vmatpush.msra.mxu0 %v440
    %1507 = vmatpush.msra.mxu0 %v436
    %1508 = vmatpush.msra.mxu0 %v432
    %1509 = vmatpush.msra.mxu0 %v428
    %1510 = vmatpush.msra.mxu0 %v424
    %1511 = vmatmul.f32.gmra.mxu0 %v405
    %v1512 = vpop.f32.mrf.mxu0
    %v1513 = vadd.f32 %v938, %v1512
    %1514 = vmatmul.f32.gmra.mxu0 %v413
    %v1515 = vpop.f32.mrf.mxu0
    %v1516 = vadd.f32 %v938, %v1515
    %1517 = vdwg.mxu0
    %1518 = vmatpush.msra.mxu0 %v548
    %1519 = vmatpush.msra.mxu0 %v544
    %1520 = vmatpush.msra.mxu0 %v540
    %1521 = vmatpush.msra.mxu0 %v536
    %1522 = vmatpush.msra.mxu0 %v532
    %1523 = vmatpush.msra.mxu0 %v528
    %1524 = vmatpush.msra.mxu0 %v524
    %1525 = vmatpush.msra.mxu0 %v520
    %1526 = vmatpush.msra.mxu0 %v516
    %1527 = vmatpush.msra.mxu0 %v512
    %1528 = vmatpush.msra.mxu0 %v508
    %1529 = vmatpush.msra.mxu0 %v504
    %1530 = vmatpush.msra.mxu0 %v500
    %1531 = vmatpush.msra.mxu0 %v496
    %1532 = vmatpush.msra.mxu0 %v492
    %1533 = vmatpush.msra.mxu0 %v488
    %1534 = vmatmul.f32.gmra.mxu0 %v406
    %v1535 = vpop.f32.mrf.mxu0
    %v1536 = vadd.f32 %v1513, %v1535
    %1537 = vmatmul.f32.gmra.mxu0 %v414
    %v1538 = vpop.f32.mrf.mxu0
    %v1539 = vadd.f32 %v1516, %v1538
    %1540 = vdwg.mxu0
    %1541 = vmatpush.msra.mxu0 %v612
    %1542 = vmatpush.msra.mxu0 %v608
    %1543 = vmatpush.msra.mxu0 %v604
    %1544 = vmatpush.msra.mxu0 %v600
    %1545 = vmatpush.msra.mxu0 %v596
    %1546 = vmatpush.msra.mxu0 %v592
    %1547 = vmatpush.msra.mxu0 %v588
    %1548 = vmatpush.msra.mxu0 %v584
    %1549 = vmatpush.msra.mxu0 %v580
    %1550 = vmatpush.msra.mxu0 %v576
    %1551 = vmatpush.msra.mxu0 %v572
    %1552 = vmatpush.msra.mxu0 %v568
    %1553 = vmatpush.msra.mxu0 %v564
    %1554 = vmatpush.msra.mxu0 %v560
    %1555 = vmatpush.msra.mxu0 %v556
    %1556 = vmatpush.msra.mxu0 %v552
    %1557 = vmatmul.f32.gmra.mxu0 %v407
    %v1558 = vpop.f32.mrf.mxu0
    %v1559 = vadd.f32 %v1536, %v1558
    %1560 = vmatmul.f32.gmra.mxu0 %v415
    %v1561 = vpop.f32.mrf.mxu0
    %v1562 = vadd.f32 %v1539, %v1561
    %1563 = vdwg.mxu0
    %1564 = vmatpush.msra.mxu0 %v676
    %1565 = vmatpush.msra.mxu0 %v672
    %1566 = vmatpush.msra.mxu0 %v668
    %1567 = vmatpush.msra.mxu0 %v664
    %1568 = vmatpush.msra.mxu0 %v660
    %1569 = vmatpush.msra.mxu0 %v656
    %1570 = vmatpush.msra.mxu0 %v652
    %1571 = vmatpush.msra.mxu0 %v648
    %1572 = vmatpush.msra.mxu0 %v644
    %1573 = vmatpush.msra.mxu0 %v640
    %1574 = vmatpush.msra.mxu0 %v636
    %1575 = vmatpush.msra.mxu0 %v632
    %1576 = vmatpush.msra.mxu0 %v628
    %1577 = vmatpush.msra.mxu0 %v624
    %1578 = vmatpush.msra.mxu0 %v620
    %1579 = vmatpush.msra.mxu0 %v616
    %1580 = vmatmul.f32.gmra.mxu0 %v408
    %v1581 = vpop.f32.mrf.mxu0
    %v1582 = vadd.f32 %v1559, %v1581
    %1583 = vmatmul.f32.gmra.mxu0 %v416
    %v1584 = vpop.f32.mrf.mxu0
    %v1585 = vadd.f32 %v1562, %v1584
    %1586 = vdwg.mxu0
    %1587 = vmatpush.msra.mxu0 %v740
    %1588 = vmatpush.msra.mxu0 %v736
    %1589 = vmatpush.msra.mxu0 %v732
    %1590 = vmatpush.msra.mxu0 %v728
    %1591 = vmatpush.msra.mxu0 %v724
    %1592 = vmatpush.msra.mxu0 %v720
    %1593 = vmatpush.msra.mxu0 %v716
    %1594 = vmatpush.msra.mxu0 %v712
    %1595 = vmatpush.msra.mxu0 %v708
    %1596 = vmatpush.msra.mxu0 %v704
    %1597 = vmatpush.msra.mxu0 %v700
    %1598 = vmatpush.msra.mxu0 %v696
    %1599 = vmatpush.msra.mxu0 %v692
    %1600 = vmatpush.msra.mxu0 %v688
    %1601 = vmatpush.msra.mxu0 %v684
    %1602 = vmatpush.msra.mxu0 %v680
    %1603 = vmatmul.f32.gmra.mxu0 %v409
    %v1604 = vpop.f32.mrf.mxu0
    %v1605 = vadd.f32 %v1582, %v1604
    %1606 = vmatmul.f32.gmra.mxu0 %v417
    %v1607 = vpop.f32.mrf.mxu0
    %v1608 = vadd.f32 %v1585, %v1607
    %1609 = vdwg.mxu0
    %1610 = vmatpush.msra.mxu0 %v804
    %1611 = vmatpush.msra.mxu0 %v800
    %1612 = vmatpush.msra.mxu0 %v796
    %1613 = vmatpush.msra.mxu0 %v792
    %1614 = vmatpush.msra.mxu0 %v788
    %1615 = vmatpush.msra.mxu0 %v784
    %1616 = vmatpush.msra.mxu0 %v780
    %1617 = vmatpush.msra.mxu0 %v776
    %1618 = vmatpush.msra.mxu0 %v772
    %1619 = vmatpush.msra.mxu0 %v768
    %1620 = vmatpush.msra.mxu0 %v764
    %1621 = vmatpush.msra.mxu0 %v760
    %1622 = vmatpush.msra.mxu0 %v756
    %1623 = vmatpush.msra.mxu0 %v752
    %1624 = vmatpush.msra.mxu0 %v748
    %1625 = vmatpush.msra.mxu0 %v744
    %1626 = vmatmul.f32.gmra.mxu0 %v410
    %v1627 = vpop.f32.mrf.mxu0
    %v1628 = vadd.f32 %v1605, %v1627
    %1629 = vmatmul.f32.gmra.mxu0 %v418
    %v1630 = vpop.f32.mrf.mxu0
    %v1631 = vadd.f32 %v1608, %v1630
    %1632 = vdwg.mxu0
    %1633 = vmatpush.msra.mxu0 %v868
    %1634 = vmatpush.msra.mxu0 %v864
    %1635 = vmatpush.msra.mxu0 %v860
    %1636 = vmatpush.msra.mxu0 %v856
    %1637 = vmatpush.msra.mxu0 %v852
    %1638 = vmatpush.msra.mxu0 %v848
    %1639 = vmatpush.msra.mxu0 %v844
    %1640 = vmatpush.msra.mxu0 %v840
    %1641 = vmatpush.msra.mxu0 %v836
    %1642 = vmatpush.msra.mxu0 %v832
    %1643 = vmatpush.msra.mxu0 %v828
    %1644 = vmatpush.msra.mxu0 %v824
    %1645 = vmatpush.msra.mxu0 %v820
    %1646 = vmatpush.msra.mxu0 %v816
    %1647 = vmatpush.msra.mxu0 %v812
    %1648 = vmatpush.msra.mxu0 %v808
    %1649 = vmatmul.f32.gmra.mxu0 %v411
    %v1650 = vpop.f32.mrf.mxu0
    %v1651 = vadd.f32 %v1628, %v1650
    %1652 = vmatmul.f32.gmra.mxu0 %v419
    %v1653 = vpop.f32.mrf.mxu0
    %v1654 = vadd.f32 %v1631, %v1653
    %1655 = vdwg.mxu0
    %1656 = vmatpush.msra.mxu0 %v932
    %1657 = vmatpush.msra.mxu0 %v928
    %1658 = vmatpush.msra.mxu0 %v924
    %1659 = vmatpush.msra.mxu0 %v920
    %1660 = vmatpush.msra.mxu0 %v916
    %1661 = vmatpush.msra.mxu0 %v912
    %1662 = vmatpush.msra.mxu0 %v908
    %1663 = vmatpush.msra.mxu0 %v904
    %1664 = vmatpush.msra.mxu0 %v900
    %1665 = vmatpush.msra.mxu0 %v896
    %1666 = vmatpush.msra.mxu0 %v892
    %1667 = vmatpush.msra.mxu0 %v888
    %1668 = vmatpush.msra.mxu0 %v884
    %1669 = vmatpush.msra.mxu0 %v880
    %1670 = vmatpush.msra.mxu0 %v876
    %1671 = vmatpush.msra.mxu0 %v872
    %1672 = vmatmul.f32.gmra.mxu0 %v412
    %v1673 = vpop.f32.mrf.mxu0
    %v1674 = vadd.f32 %v1651, %v1673
    %1675 = vmatmul.f32.gmra.mxu0 %v420
    %v1676 = vpop.f32.mrf.mxu0
    %v1677 = vadd.f32 %v1654, %v1676
    %1678 = vdwg.mxu0
    %v1679 = vmax.f32 %v1122, 0.0
    %v1680 = vmax.f32 %v1306, 0.0
    %v1681 = vmax.f32 %v1490, 0.0
    %v1682 = vmax.f32 %v1674, 0.0
    %v1683 = vmax.f32 %v1125, 0.0
    %v1684 = vmax.f32 %v1309, 0.0
    %v1685 = vmax.f32 %v1493, 0.0
    %v1686 = vmax.f32 %v1677, 0.0
    %v1687 = vld [vmem:[#allocation11] sm:$0xff]
    %v1688 = vld [vmem:[#allocation11 + $0x8] sm:$0xff]
    %v1689 = vld [vmem:[#allocation11 + $0x10] sm:$0xff]
    %v1690 = vld [vmem:[#allocation11 + $0x18] sm:$0xff]
    %v1691 = vld [vmem:[#allocation11 + $0x20] sm:$0xff]
    %v1692 = vld [vmem:[#allocation11 + $0x28] sm:$0xff]
    %v1693 = vld [vmem:[#allocation11 + $0x30] sm:$0xff]
    %v1694 = vld [vmem:[#allocation11 + $0x38] sm:$0xff]
    %v1695 = vld [vmem:[#allocation11 + $0x40] sm:$0xff]
    %v1696 = vld [vmem:[#allocation11 + $0x48] sm:$0xff]
    %v1697 = vld [vmem:[#allocation11 + $0x50] sm:$0xff]
    %v1698 = vld [vmem:[#allocation11 + $0x58] sm:$0xff]
    %v1699 = vld [vmem:[#allocation11 + $0x60] sm:$0xff]
    %v1700 = vld [vmem:[#allocation11 + $0x68] sm:$0xff]
    %v1701 = vld [vmem:[#allocation11 + $0x70] sm:$0xff]
    %v1702 = vld [vmem:[#allocation11 + $0x78] sm:$0xff]
    %v1703 = vld [vmem:[#allocation11 + $0x80] sm:$0xff]
    %v1704 = vld [vmem:[#allocation11 + $0x88] sm:$0xff]
    %v1705 = vld [vmem:[#allocation11 + $0x90] sm:$0xff]
    %v1706 = vld [vmem:[#allocation11 + $0x98] sm:$0xff]
    %v1707 = vld [vmem:[#allocation11 + $0xa0] sm:$0xff]
    %v1708 = vld [vmem:[#allocation11 + $0xa8] sm:$0xff]
    %v1709 = vld [vmem:[#allocation11 + $0xb0] sm:$0xff]
    %v1710 = vld [vmem:[#allocation11 + $0xb8] sm:$0xff]
    %v1711 = vld [vmem:[#allocation11 + $0xc0] sm:$0xff]
    %v1712 = vld [vmem:[#allocation11 + $0xc8] sm:$0xff]
    %v1713 = vld [vmem:[#allocation11 + $0xd0] sm:$0xff]
    %v1714 = vld [vmem:[#allocation11 + $0xd8] sm:$0xff]
    %v1715 = vld [vmem:[#allocation11 + $0xe0] sm:$0xff]
    %v1716 = vld [vmem:[#allocation11 + $0xe8] sm:$0xff]
    %v1717 = vld [vmem:[#allocation11 + $0xf0] sm:$0xff]
    %v1718 = vld [vmem:[#allocation11 + $0xf8] sm:$0xff]
    %v1719 = vld [vmem:[#allocation11 + $0x100] sm:$0xff]
    %v1720 = vld [vmem:[#allocation11 + $0x108] sm:$0xff]
    %v1721 = vld [vmem:[#allocation11 + $0x110] sm:$0xff]
    %v1722 = vld [vmem:[#allocation11 + $0x118] sm:$0xff]
    %v1723 = vld [vmem:[#allocation11 + $0x120] sm:$0xff]
    %v1724 = vld [vmem:[#allocation11 + $0x128] sm:$0xff]
    %v1725 = vld [vmem:[#allocation11 + $0x130] sm:$0xff]
    %v1726 = vld [vmem:[#allocation11 + $0x138] sm:$0xff]
    %v1727 = vld [vmem:[#allocation11 + $0x140] sm:$0xff]
    %v1728 = vld [vmem:[#allocation11 + $0x148] sm:$0xff]
    %v1729 = vld [vmem:[#allocation11 + $0x150] sm:$0xff]
    %v1730 = vld [vmem:[#allocation11 + $0x158] sm:$0xff]
    %v1731 = vld [vmem:[#allocation11 + $0x160] sm:$0xff]
    %v1732 = vld [vmem:[#allocation11 + $0x168] sm:$0xff]
    %v1733 = vld [vmem:[#allocation11 + $0x170] sm:$0xff]
    %v1734 = vld [vmem:[#allocation11 + $0x178] sm:$0xff]
    %v1735 = vld [vmem:[#allocation11 + $0x180] sm:$0xff]
    %v1736 = vld [vmem:[#allocation11 + $0x188] sm:$0xff]
    %v1737 = vld [vmem:[#allocation11 + $0x190] sm:$0xff]
    %v1738 = vld [vmem:[#allocation11 + $0x198] sm:$0xff]
    %v1739 = vld [vmem:[#allocation11 + $0x1a0] sm:$0xff]
    %v1740 = vld [vmem:[#allocation11 + $0x1a8] sm:$0xff]
    %v1741 = vld [vmem:[#allocation11 + $0x1b0] sm:$0xff]
    %v1742 = vld [vmem:[#allocation11 + $0x1b8] sm:$0xff]
    %v1743 = vld [vmem:[#allocation11 + $0x1c0] sm:$0xff]
    %v1744 = vld [vmem:[#allocation11 + $0x1c8] sm:$0xff]
    %v1745 = vld [vmem:[#allocation11 + $0x1d0] sm:$0xff]
    %v1746 = vld [vmem:[#allocation11 + $0x1d8] sm:$0xff]
    %v1747 = vld [vmem:[#allocation11 + $0x1e0] sm:$0xff]
    %v1748 = vld [vmem:[#allocation11 + $0x1e8] sm:$0xff]
    %v1749 = vld [vmem:[#allocation11 + $0x1f0] sm:$0xff]
    %v1750 = vld [vmem:[#allocation11 + $0x1f8] sm:$0xff]
    %v1751 = vld [vmem:[#allocation13] sm:$0x1]
    %v1753 = vperm.slane %v1751, 0
    %1755 = vmatpush.msra.mxu0 %v1702
    %1756 = vmatpush.msra.mxu0 %v1701
    %1757 = vmatpush.msra.mxu0 %v1700
    %1758 = vmatpush.msra.mxu0 %v1699
    %1759 = vmatpush.msra.mxu0 %v1698
    %1760 = vmatpush.msra.mxu0 %v1697
    %1761 = vmatpush.msra.mxu0 %v1696
    %1762 = vmatpush.msra.mxu0 %v1695
    %1763 = vmatpush.msra.mxu0 %v1694
    %1764 = vmatpush.msra.mxu0 %v1693
    %1765 = vmatpush.msra.mxu0 %v1692
    %1766 = vmatpush.msra.mxu0 %v1691
    %1767 = vmatpush.msra.mxu0 %v1690
    %1768 = vmatpush.msra.mxu0 %v1689
    %1769 = vmatpush.msra.mxu0 %v1688
    %1770 = vmatpush.msra.mxu0 %v1687
    %1771 = vmatmul.f32.gmra.mxu0 %v1679
    %v1772 = vpop.f32.mrf.mxu0
    %v1773 = vadd.f32 %v1753, %v1772
    %1774 = vmatmul.f32.gmra.mxu0 %v1683
    %v1775 = vpop.f32.mrf.mxu0
    %v1776 = vadd.f32 %v1753, %v1775
    %1777 = vdwg.mxu0
    %1778 = vmatpush.msra.mxu0 %v1718
    %1779 = vmatpush.msra.mxu0 %v1717
    %1780 = vmatpush.msra.mxu0 %v1716
    %1781 = vmatpush.msra.mxu0 %v1715
    %1782 = vmatpush.msra.mxu0 %v1714
    %1783 = vmatpush.msra.mxu0 %v1713
    %1784 = vmatpush.msra.mxu0 %v1712
    %1785 = vmatpush.msra.mxu0 %v1711
    %1786 = vmatpush.msra.mxu0 %v1710
    %1787 = vmatpush.msra.mxu0 %v1709
    %1788 = vmatpush.msra.mxu0 %v1708
    %1789 = vmatpush.msra.mxu0 %v1707
    %1790 = vmatpush.msra.mxu0 %v1706
    %1791 = vmatpush.msra.mxu0 %v1705
    %1792 = vmatpush.msra.mxu0 %v1704
    %1793 = vmatpush.msra.mxu0 %v1703
    %1794 = vmatmul.f32.gmra.mxu0 %v1680
    %v1795 = vpop.f32.mrf.mxu0
    %v1796 = vadd.f32 %v1773, %v1795
    %1797 = vmatmul.f32.gmra.mxu0 %v1684
    %v1798 = vpop.f32.mrf.mxu0
    %v1799 = vadd.f32 %v1776, %v1798
    %1800 = vdwg.mxu0
    %1801 = vmatpush.msra.mxu0 %v1734
    %1802 = vmatpush.msra.mxu0 %v1733
    %1803 = vmatpush.msra.mxu0 %v1732
    %1804 = vmatpush.msra.mxu0 %v1731
    %1805 = vmatpush.msra.mxu0 %v1730
    %1806 = vmatpush.msra.mxu0 %v1729
    %1807 = vmatpush.msra.mxu0 %v1728
    %1808 = vmatpush.msra.mxu0 %v1727
    %1809 = vmatpush.msra.mxu0 %v1726
    %1810 = vmatpush.msra.mxu0 %v1725
    %1811 = vmatpush.msra.mxu0 %v1724
    %1812 = vmatpush.msra.mxu0 %v1723
    %1813 = vmatpush.msra.mxu0 %v1722
    %1814 = vmatpush.msra.mxu0 %v1721
    %1815 = vmatpush.msra.mxu0 %v1720
    %1816 = vmatpush.msra.mxu0 %v1719
    %1817 = vmatmul.f32.gmra.mxu0 %v1681
    %v1818 = vpop.f32.mrf.mxu0
    %v1819 = vadd.f32 %v1796, %v1818
    %1820 = vmatmul.f32.gmra.mxu0 %v1685
    %v1821 = vpop.f32.mrf.mxu0
    %v1822 = vadd.f32 %v1799, %v1821
    %1823 = vdwg.mxu0
    %1824 = vmatpush.msra.mxu0 %v1750
    %1825 = vmatpush.msra.mxu0 %v1749
    %1826 = vmatpush.msra.mxu0 %v1748
    %1827 = vmatpush.msra.mxu0 %v1747
    %1828 = vmatpush.msra.mxu0 %v1746
    %1829 = vmatpush.msra.mxu0 %v1745
    %1830 = vmatpush.msra.mxu0 %v1744
    %1831 = vmatpush.msra.mxu0 %v1743
    %1832 = vmatpush.msra.mxu0 %v1742
    %1833 = vmatpush.msra.mxu0 %v1741
    %1834 = vmatpush.msra.mxu0 %v1740
    %1835 = vmatpush.msra.mxu0 %v1739
    %1836 = vmatpush.msra.mxu0 %v1738
    %1837 = vmatpush.msra.mxu0 %v1737
    %1838 = vmatpush.msra.mxu0 %v1736
    %1839 = vmatpush.msra.mxu0 %v1735
    %1840 = vmatmul.f32.gmra.mxu0 %v1682
    %v1841 = vpop.f32.mrf.mxu0
    %v1842 = vadd.f32 %v1819, %v1841
    %1843 = vmatmul.f32.gmra.mxu0 %v1686
    %v1844 = vpop.f32.mrf.mxu0
    %v1845 = vadd.f32 %v1822, %v1844
    %1846 = vdwg.mxu0
    %1847 = vst [vmem:[#allocation14] sm:$0xff] %v1842
    %1848 = vst [vmem:[#allocation14 + $0x8] sm:$0xff] %v1845
    // Predicated region
    $region58: #{tpu_custom_call.1} parent=1 // pred_check
      _
    $region59: #{tpu_custom_call.1} parent=1 // pred_check_branch
      %1850 = sbr.rel (0) target = $region61
    $region60: #{tpu_custom_call.1} parent=1 // pred_region
      %1852 = vsyncadd [#allocation4], 0
      %s1853 = sshll.u32 [#allocation14], 4
      %s1854 = int_to_ptr.vmem [resolvable:$true] %s1853
      %s1855 = sshll.u32 %s7, 4
      %s1856 = int_to_ptr.hbm [resolvable:$true] %s1855
      %1861 = dma.vmem_to_hbm [thread:$0]  %s1854, 256, %s1856, [#allocation4], 128, 128, 8
    $region61: #{tpu_custom_call.1} parent=1 // pred_fallthru
      _
    // Predicated region
    $region62: #{tpu_custom_call.1} parent=1 // pred_check
      _
    $region63: #{tpu_custom_call.1} parent=1 // pred_check_branch
      %1863 = sbr.rel (0) target = $region65
    $region64: #{tpu_custom_call.1} parent=1 // pred_region
      %1865 = dma.done [#allocation4], 256
    $region65: #{tpu_custom_call.1} parent=1 // pred_fallthru
      _
    %1866 = vsyncpa [#allocation3], 1
    %1867 = vsyncpa [#allocation6], 1
    %1868 = vsyncpa [#allocation9], 1
    %1869 = vsyncpa [#allocation12], 1
    %1870 = vsyncpa [#allocation4], 1

// kernel: tpu_custom_call.1
$region0: #{tpu_custom_call.1}
  #allocation0 [shape = 'u32[]', space=smem, size = 0x4, offset = 0x4, fixed_abs, tag = 'smem constant byte address 0x4 - core index']
  #allocation1 [shape = 'u32[72,128]{1,0:T(1,128)}', space=vmem, size = 0x9000, scoped, tag = 'internal scratch']
  %s0 = inlined_call_operand.hbm [shape: f32[16,64], index: 0, kind: input, shape index: {}]
  %s1 = inlined_call_operand.hbm [shape: f32[64,1024], index: 1, kind: input, shape index: {}]
  %s2 = inlined_call_operand.hbm [shape: f32[1,1024], index: 2, kind: input, shape index: {}]
  %s3 = inlined_call_operand.hbm [shape: f32[1024,512], index: 3, kind: input, shape index: {}]
  %s4 = inlined_call_operand.hbm [shape: f32[1,512], index: 4, kind: input, shape index: {}]
  %s5 = inlined_call_operand.hbm [shape: f32[512,128], index: 5, kind: input, shape index: {}]
  %s6 = inlined_call_operand.hbm [shape: f32[1,128], index: 6, kind: input, shape index: {}]
  %s7 = inlined_call_operand.hbm [shape: f32[16,128], index: 7, kind: output, shape index: {}]
  %s8 = sld [smem:[#allocation0]]
  $region66: #{tpu_custom_call.1} parent=0
    _
  %s10 = ssub.s32 1, %s8
  %s11 = scalar_select 0, %s10, %s8
  $region1: #{tpu_custom_call.1} parent=0
    #allocation2 [shape = 'u8[8192]{0}', space=vmem, size = 0x2000, scoped, tag = 'input window, operand 0, single buffered']
    #allocation3 [shape = 's32[1]{0}', space=sflag, size = 0x4, scoped, tag = 'scoped memory for tpu_custom_call.1']
    #allocation4 [shape = 's32[1]{0}', space=sflag, size = 0x4, scoped, tag = 'scoped memory for tpu_custom_call.1']
    #allocation5 [shape = 'u8[262144]{0}', space=vmem, size = 0x40000, scoped, tag = 'input window, operand 1, single buffered']
    #allocation6 [shape = 's32[1]{0}', space=sflag, size = 0x4, scoped, tag = 'scoped memory for tpu_custom_call.1']
    #allocation7 [shape = 'u8[4096]{0}', space=vmem, size = 0x1000, scoped, tag = 'input window, operand 2, single buffered']
    #allocation8 [shape = 'u8[2097152]{0}', space=vmem, size = 0x200000, scoped, tag = 'input window, operand 3, single buffered']
    #allocation9 [shape = 's32[1]{0}', space=sflag, size = 0x4, scoped, tag = 'scoped memory for tpu_custom_call.1']
    #allocation10 [shape = 'u8[2048]{0}', space=vmem, size = 0x800, scoped, tag = 'input window, operand 4, single buffered']
    #allocation11 [shape = 'u8[262144]{0}', space=vmem, size = 0x40000, scoped, tag = 'input window, operand 5, single buffered']
    #allocation12 [shape = 's32[1]{0}', space=sflag, size = 0x4, scoped, tag = 'scoped memory for tpu_custom_call.1']
    #allocation13 [shape = 'u8[512]{0}', space=vmem, size = 0x400, scoped, tag = 'input window, operand 6, single buffered']
    #allocation14 [shape = 'u8[8192]{0}', space=vmem, size = 0x2000, scoped, tag = 'output window, operand 0, single buffered']
    %12 = vsyncpa [#allocation3], 0
    %13 = vsyncpa [#allocation6], 0
    %14 = vsyncpa [#allocation9], 0
    %15 = vsyncpa [#allocation12], 0
    %16 = vsyncpa [#allocation4], 0
    // Predicated region
    $region2: #{tpu_custom_call.1} parent=1 // pred_check
      _
    $region3: #{tpu_custom_call.1} parent=1 // pred_check_branch
      %18 = sbr.rel (0) target = $region5
    $region4: #{tpu_custom_call.1} parent=1 // pred_region
      %20 = vsyncadd [#allocation3], 0
      %s21 = sshll.u32 %s0, 4
      %s22 = int_to_ptr.hbm [resolvable:$true] %s21
      %s23 = sshll.u32 [#allocation2], 4
      %s24 = int_to_ptr.vmem [resolvable:$true] %s23
      %29 = dma.hbm_to_vmem [thread:$0]  %s22, 256, %s24, [#allocation3], 128, 128, 8
    $region5: #{tpu_custom_call.1} parent=1 // pred_fallthru
      _
    // Predicated region
    $region6: #{tpu_custom_call.1} parent=1 // pred_check
      _
    $region7: #{tpu_custom_call.1} parent=1 // pred_check_branch
      %31 = sbr.rel (0) target = $region9
    $region8: #{tpu_custom_call.1} parent=1 // pred_region
      %33 = vsyncadd [#allocation6], 0
      %s34 = sshll.u32 %s1, 4
      %s35 = int_to_ptr.hbm [resolvable:$true] %s34
      %s36 = sshll.u32 [#allocation5], 4
      %s37 = int_to_ptr.vmem [resolvable:$true] %s36
      %42 = dma.hbm_to_vmem [thread:$0]  %s35, 8192, %s37, [#allocation6], 1024, 1024, 64
    $region9: #{tpu_custom_call.1} parent=1 // pred_fallthru
      _
    // Predicated region
    $region10: #{tpu_custom_call.1} parent=1 // pred_check
      _
    $region11: #{tpu_custom_call.1} parent=1 // pred_check_branch
      %44 = sbr.rel (0) target = $region13
    $region12: #{tpu_custom_call.1} parent=1 // pred_region
      %46 = vsyncadd [#allocation6], 0
      %s48 = sshll.u32 %s2, 4
      %s49 = int_to_ptr.hbm [resolvable:$true] %s48
      %s50 = sshll.u32 [#allocation7], 4
      %s51 = int_to_ptr.vmem [resolvable:$true] %s50
      %53 = dma.hbm_to_vmem [thread:$0]  %s49, 128, %s51, [#allocation6]
    $region13: #{tpu_custom_call.1} parent=1 // pred_fallthru
      _
    // Predicated region
    $region14: #{tpu_custom_call.1} parent=1 // pred_check
      _
    $region15: #{tpu_custom_call.1} parent=1 // pred_check_branch
      %55 = sbr.rel (0) target = $region17
    $region16: #{tpu_custom_call.1} parent=1 // pred_region
      %57 = vsyncadd [#allocation9], 0
      %s58 = sshll.u32 %s3, 4
      %s59 = int_to_ptr.hbm [resolvable:$true] %s58
      %s60 = sshll.u32 [#allocation8], 4
      %s61 = int_to_ptr.vmem [resolvable:$true] %s60
      %66 = dma.hbm_to_vmem [thread:$0]  %s59, 65536, %s61, [#allocation9], 512, 512, 32
    $region17: #{tpu_custom_call.1} parent=1 // pred_fallthru
      _
    // Predicated region
    $region18: #{tpu_custom_call.1} parent=1 // pred_check
      _
    $region19: #{tpu_custom_call.1} parent=1 // pred_check_branch
      %68 = sbr.rel (0) target = $region21
    $region20: #{tpu_custom_call.1} parent=1 // pred_region
      %70 = vsyncadd [#allocation9], 0
      %s72 = sshll.u32 %s4, 4
      %s73 = int_to_ptr.hbm [resolvable:$true] %s72
      %s74 = sshll.u32 [#allocation10], 4
      %s75 = int_to_ptr.vmem [resolvable:$true] %s74
      %77 = dma.hbm_to_vmem [thread:$0]  %s73, 64, %s75, [#allocation9]
    $region21: #{tpu_custom_call.1} parent=1 // pred_fallthru
      _
    // Predicated region
    $region22: #{tpu_custom_call.1} parent=1 // pred_check
      _
    $region23: #{tpu_custom_call.1} parent=1 // pred_check_branch
      %79 = sbr.rel (0) target = $region25
    $region24: #{tpu_custom_call.1} parent=1 // pred_region
      %81 = vsyncadd [#allocation12], 0
      %s82 = sshll.u32 %s5, 4
      %s83 = int_to_ptr.hbm [resolvable:$true] %s82
      %s84 = sshll.u32 [#allocation11], 4
      %s85 = int_to_ptr.vmem [resolvable:$true] %s84
      %90 = dma.hbm_to_vmem [thread:$0]  %s83, 8192, %s85, [#allocation12], 128, 128, 8
    $region25: #{tpu_custom_call.1} parent=1 // pred_fallthru
      _
    // Predicated region
    $region26: #{tpu_custom_call.1} parent=1 // pred_check
      _
    $region27: #{tpu_custom_call.1} parent=1 // pred_check_branch
      %92 = sbr.rel (0) target = $region29
    $region28: #{tpu_custom_call.1} parent=1 // pred_region
      %94 = vsyncadd [#allocation12], 0
      %s96 = sshll.u32 %s6, 4
      %s97 = int_to_ptr.hbm [resolvable:$true] %s96
      %s98 = sshll.u32 [#allocation13], 4
      %s99 = int_to_ptr.vmem [resolvable:$true] %s98
      %101 = dma.hbm_to_vmem [thread:$0]  %s97, 16, %s99, [#allocation12]
    $region29: #{tpu_custom_call.1} parent=1 // pred_fallthru
      _
    // Predicated region
    $region30: #{tpu_custom_call.1} parent=1 // pred_check
      _
    $region31: #{tpu_custom_call.1} parent=1 // pred_check_branch
      %103 = sbr.rel (0) target = $region33
    $region32: #{tpu_custom_call.1} parent=1 // pred_region
      %105 = dma.done [#allocation3], 256
    $region33: #{tpu_custom_call.1} parent=1 // pred_fallthru
      _
    // Predicated region
    $region34: #{tpu_custom_call.1} parent=1 // pred_check
      _
    $region35: #{tpu_custom_call.1} parent=1 // pred_check_branch
      %107 = sbr.rel (0) target = $region37
    $region36: #{tpu_custom_call.1} parent=1 // pred_region
      %109 = dma.done [#allocation6], 8192
    $region37: #{tpu_custom_call.1} parent=1 // pred_fallthru
      _
    // Predicated region
    $region38: #{tpu_custom_call.1} parent=1 // pred_check
      _
    $region39: #{tpu_custom_call.1} parent=1 // pred_check_branch
      %111 = sbr.rel (0) target = $region41
    $region40: #{tpu_custom_call.1} parent=1 // pred_region
      %113 = dma.done [#allocation6], 128
    $region41: #{tpu_custom_call.1} parent=1 // pred_fallthru
      _
    // Predicated region
    $region42: #{tpu_custom_call.1} parent=1 // pred_check
      _
    $region43: #{tpu_custom_call.1} parent=1 // pred_check_branch
      %115 = sbr.rel (0) target = $region45
    $region44: #{tpu_custom_call.1} parent=1 // pred_region
      %117 = dma.done [#allocation9], 65536
    $region45: #{tpu_custom_call.1} parent=1 // pred_fallthru
      _
    // Predicated region
    $region46: #{tpu_custom_call.1} parent=1 // pred_check
      _
    $region47: #{tpu_custom_call.1} parent=1 // pred_check_branch
      %119 = sbr.rel (0) target = $region49
    $region48: #{tpu_custom_call.1} parent=1 // pred_region
      %121 = dma.done [#allocation9], 64
    $region49: #{tpu_custom_call.1} parent=1 // pred_fallthru
      _
    // Predicated region
    $region50: #{tpu_custom_call.1} parent=1 // pred_check
      _
    $region51: #{tpu_custom_call.1} parent=1 // pred_check_branch
      %123 = sbr.rel (0) target = $region53
    $region52: #{tpu_custom_call.1} parent=1 // pred_region
      %125 = dma.done [#allocation12], 8192
    $region53: #{tpu_custom_call.1} parent=1 // pred_fallthru
      _
    // Predicated region
    $region54: #{tpu_custom_call.1} parent=1 // pred_check
      _
    $region55: #{tpu_custom_call.1} parent=1 // pred_check_branch
      %127 = sbr.rel (0) target = $region57
    $region56: #{tpu_custom_call.1} parent=1 // pred_region
      %129 = dma.done [#allocation12], 16
    $region57: #{tpu_custom_call.1} parent=1 // pred_fallthru
      _
    %v130 = vld [vmem:[#allocation2] sm:$0xff]
    %v131 = vld [vmem:[#allocation2 + $0x8] sm:$0xff]
    %v132 = vld [vmem:[#allocation5] sm:$0xff]
    %v133 = vld [vmem:[#allocation5 + $0x8] sm:$0xff]
    %v134 = vld [vmem:[#allocation5 + $0x10] sm:$0xff]
    %v135 = vld [vmem:[#allocation5 + $0x18] sm:$0xff]
    %v136 = vld [vmem:[#allocation5 + $0x20] sm:$0xff]
    %v137 = vld [vmem:[#allocation5 + $0x28] sm:$0xff]
    %v138 = vld [vmem:[#allocation5 + $0x30] sm:$0xff]
    %v139 = vld [vmem:[#allocation5 + $0x38] sm:$0xff]
    %v140 = vld [vmem:[#allocation5 + $0x40] sm:$0xff]
    %v141 = vld [vmem:[#allocation5 + $0x48] sm:$0xff]
    %v142 = vld [vmem:[#allocation5 + $0x50] sm:$0xff]
    %v143 = vld [vmem:[#allocation5 + $0x58] sm:$0xff]
    %v144 = vld [vmem:[#allocation5 + $0x60] sm:$0xff]
    %v145 = vld [vmem:[#allocation5 + $0x68] sm:$0xff]
    %v146 = vld [vmem:[#allocation5 + $0x70] sm:$0xff]
    %v147 = vld [vmem:[#allocation5 + $0x78] sm:$0xff]
    %v148 = vld [vmem:[#allocation5 + $0x80] sm:$0xff]
    %v149 = vld [vmem:[#allocation5 + $0x88] sm:$0xff]
    %v150 = vld [vmem:[#allocation5 + $0x90] sm:$0xff]
    %v151 = vld [vmem:[#allocation5 + $0x98] sm:$0xff]
    %v152 = vld [vmem:[#allocation5 + $0xa0] sm:$0xff]
    %v153 = vld [vmem:[#allocation5 + $0xa8] sm:$0xff]
    %v154 = vld [vmem:[#allocation5 + $0xb0] sm:$0xff]
    %v155 = vld [vmem:[#allocation5 + $0xb8] sm:$0xff]
    %v156 = vld [vmem:[#allocation5 + $0xc0] sm:$0xff]
    %v157 = vld [vmem:[#allocation5 + $0xc8] sm:$0xff]
    %v158 = vld [vmem:[#allocation5 + $0xd0] sm:$0xff]
    %v159 = vld [vmem:[#allocation5 + $0xd8] sm:$0xff]
    %v160 = vld [vmem:[#allocation5 + $0xe0] sm:$0xff]
    %v161 = vld [vmem:[#allocation5 + $0xe8] sm:$0xff]
    %v162 = vld [vmem:[#allocation5 + $0xf0] sm:$0xff]
    %v163 = vld [vmem:[#allocation5 + $0xf8] sm:$0xff]
    %v164 = vld [vmem:[#allocation5 + $0x100] sm:$0xff]
    %v165 = vld [vmem:[#allocation5 + $0x108] sm:$0xff]
    %v166 = vld [vmem:[#allocation5 + $0x110] sm:$0xff]
    %v167 = vld [vmem:[#allocation5 + $0x118] sm:$0xff]
    %v168 = vld [vmem:[#allocation5 + $0x120] sm:$0xff]
    %v169 = vld [vmem:[#allocation5 + $0x128] sm:$0xff]
    %v170 = vld [vmem:[#allocation5 + $0x130] sm:$0xff]
    %v171 = vld [vmem:[#allocation5 + $0x138] sm:$0xff]
    %v172 = vld [vmem:[#allocation5 + $0x140] sm:$0xff]
    %v173 = vld [vmem:[#allocation5 + $0x148] sm:$0xff]
    %v174 = vld [vmem:[#allocation5 + $0x150] sm:$0xff]
    %v175 = vld [vmem:[#allocation5 + $0x158] sm:$0xff]
    %v176 = vld [vmem:[#allocation5 + $0x160] sm:$0xff]
    %v177 = vld [vmem:[#allocation5 + $0x168] sm:$0xff]
    %v178 = vld [vmem:[#allocation5 + $0x170] sm:$0xff]
    %v179 = vld [vmem:[#allocation5 + $0x178] sm:$0xff]
    %v180 = vld [vmem:[#allocation5 + $0x180] sm:$0xff]
    %v181 = vld [vmem:[#allocation5 + $0x188] sm:$0xff]
    %v182 = vld [vmem:[#allocation5 + $0x190] sm:$0xff]
    %v183 = vld [vmem:[#allocation5 + $0x198] sm:$0xff]
    %v184 = vld [vmem:[#allocation5 + $0x1a0] sm:$0xff]
    %v185 = vld [vmem:[#allocation5 + $0x1a8] sm:$0xff]
    %v186 = vld [vmem:[#allocation5 + $0x1b0] sm:$0xff]
    %v187 = vld [vmem:[#allocation5 + $0x1b8] sm:$0xff]
    %v188 = vld [vmem:[#allocation5 + $0x1c0] sm:$0xff]
    %v189 = vld [vmem:[#allocation5 + $0x1c8] sm:$0xff]
    %v190 = vld [vmem:[#allocation5 + $0x1d0] sm:$0xff]
    %v191 = vld [vmem:[#allocation5 + $0x1d8] sm:$0xff]
    %v192 = vld [vmem:[#allocation5 + $0x1e0] sm:$0xff]
    %v193 = vld [vmem:[#allocation5 + $0x1e8] sm:$0xff]
    %v194 = vld [vmem:[#allocation5 + $0x1f0] sm:$0xff]
    %v195 = vld [vmem:[#allocation5 + $0x1f8] sm:$0xff]
    %v196 = vld [vmem:[#allocation7] sm:$0xff]
    %v198 = vperm.slane %v196, 0
    %v199 = vperm.slane %v196, 1
    %v200 = vperm.slane %v196, 2
    %v201 = vperm.slane %v196, 3
    %v202 = vperm.slane %v196, 4
    %v203 = vperm.slane %v196, 5
    %v204 = vperm.slane %v196, 6
    %v205 = vperm.slane %v196, 7
    %vm214 = vcmask 523264
    %v216 = vsel %vm214, %v130, 0
    %v219 = vsel %vm214, %v131, 0
    %221 = vmatpush.msra.mxu0 0.0
    %222 = vmatpush.msra.mxu0 0.0
    %223 = vmatpush.msra.mxu0 0.0
    %224 = vmatpush.msra.mxu0 0.0
    %225 = vmatpush.msra.mxu0 0.0
    %226 = vmatpush.msra.mxu0 0.0
    %227 = vmatpush.msra.mxu0 0.0
    %228 = vmatpush.msra.mxu0 0.0
    %229 = vmatpush.msra.mxu0 %v188
    %230 = vmatpush.msra.mxu0 %v180
    %231 = vmatpush.msra.mxu0 %v172
    %232 = vmatpush.msra.mxu0 %v164
    %233 = vmatpush.msra.mxu0 %v156
    %234 = vmatpush.msra.mxu0 %v148
    %235 = vmatpush.msra.mxu0 %v140
    %236 = vmatpush.msra.mxu0 %v132
    %237 = vmatmul.f32.gmra.mxu0 %v216
    %v238 = vpop.f32.mrf.mxu0
    %v239 = vadd.f32 %v198, %v238
    %240 = vmatmul.f32.gmra.mxu0 %v219
    %v241 = vpop.f32.mrf.mxu0
    %v242 = vadd.f32 %v198, %v241
    %243 = vdwg.mxu0
    %244 = vmatpush.msra.mxu0 0.0
    %245 = vmatpush.msra.mxu0 0.0
    %246 = vmatpush.msra.mxu0 0.0
    %247 = vmatpush.msra.mxu0 0.0
    %248 = vmatpush.msra.mxu0 0.0
    %249 = vmatpush.msra.mxu0 0.0
    %250 = vmatpush.msra.mxu0 0.0
    %251 = vmatpush.msra.mxu0 0.0
    %252 = vmatpush.msra.mxu0 %v189
    %253 = vmatpush.msra.mxu0 %v181
    %254 = vmatpush.msra.mxu0 %v173
    %255 = vmatpush.msra.mxu0 %v165
    %256 = vmatpush.msra.mxu0 %v157
    %257 = vmatpush.msra.mxu0 %v149
    %258 = vmatpush.msra.mxu0 %v141
    %259 = vmatpush.msra.mxu0 %v133
    %260 = vmatmul.f32.gmra.mxu0 %v216
    %v261 = vpop.f32.mrf.mxu0
    %v262 = vadd.f32 %v199, %v261
    %263 = vmatmul.f32.gmra.mxu0 %v219
    %v264 = vpop.f32.mrf.mxu0
    %v265 = vadd.f32 %v199, %v264
    %266 = vdwg.mxu0
    %267 = vmatpush.msra.mxu0 0.0
    %268 = vmatpush.msra.mxu0 0.0
    %269 = vmatpush.msra.mxu0 0.0
    %270 = vmatpush.msra.mxu0 0.0
    %271 = vmatpush.msra.mxu0 0.0
    %272 = vmatpush.msra.mxu0 0.0
    %273 = vmatpush.msra.mxu0 0.0
    %274 = vmatpush.msra.mxu0 0.0
    %275 = vmatpush.msra.mxu0 %v190
    %276 = vmatpush.msra.mxu0 %v182
    %277 = vmatpush.msra.mxu0 %v174
    %278 = vmatpush.msra.mxu0 %v166
    %279 = vmatpush.msra.mxu0 %v158
    %280 = vmatpush.msra.mxu0 %v150
    %281 = vmatpush.msra.mxu0 %v142
    %282 = vmatpush.msra.mxu0 %v134
    %283 = vmatmul.f32.gmra.mxu0 %v216
    %v284 = vpop.f32.mrf.mxu0
    %v285 = vadd.f32 %v200, %v284
    %286 = vmatmul.f32.gmra.mxu0 %v219
    %v287 = vpop.f32.mrf.mxu0
    %v288 = vadd.f32 %v200, %v287
    %289 = vdwg.mxu0
    %290 = vmatpush.msra.mxu0 0.0
    %291 = vmatpush.msra.mxu0 0.0
    %292 = vmatpush.msra.mxu0 0.0
    %293 = vmatpush.msra.mxu0 0.0
    %294 = vmatpush.msra.mxu0 0.0
    %295 = vmatpush.msra.mxu0 0.0
    %296 = vmatpush.msra.mxu0 0.0
    %297 = vmatpush.msra.mxu0 0.0
    %298 = vmatpush.msra.mxu0 %v191
    %299 = vmatpush.msra.mxu0 %v183
    %300 = vmatpush.msra.mxu0 %v175
    %301 = vmatpush.msra.mxu0 %v167
    %302 = vmatpush.msra.mxu0 %v159
    %303 = vmatpush.msra.mxu0 %v151
    %304 = vmatpush.msra.mxu0 %v143
    %305 = vmatpush.msra.mxu0 %v135
    %306 = vmatmul.f32.gmra.mxu0 %v216
    %v307 = vpop.f32.mrf.mxu0
    %v308 = vadd.f32 %v201, %v307
    %309 = vmatmul.f32.gmra.mxu0 %v219
    %v310 = vpop.f32.mrf.mxu0
    %v311 = vadd.f32 %v201, %v310
    %312 = vdwg.mxu0
    %313 = vmatpush.msra.mxu0 0.0
    %314 = vmatpush.msra.mxu0 0.0
    %315 = vmatpush.msra.mxu0 0.0
    %316 = vmatpush.msra.mxu0 0.0
    %317 = vmatpush.msra.mxu0 0.0
    %318 = vmatpush.msra.mxu0 0.0
    %319 = vmatpush.msra.mxu0 0.0
    %320 = vmatpush.msra.mxu0 0.0
    %321 = vmatpush.msra.mxu0 %v192
    %322 = vmatpush.msra.mxu0 %v184
    %323 = vmatpush.msra.mxu0 %v176
    %324 = vmatpush.msra.mxu0 %v168
    %325 = vmatpush.msra.mxu0 %v160
    %326 = vmatpush.msra.mxu0 %v152
    %327 = vmatpush.msra.mxu0 %v144
    %328 = vmatpush.msra.mxu0 %v136
    %329 = vmatmul.f32.gmra.mxu0 %v216
    %v330 = vpop.f32.mrf.mxu0
    %v331 = vadd.f32 %v202, %v330
    %332 = vmatmul.f32.gmra.mxu0 %v219
    %v333 = vpop.f32.mrf.mxu0
    %v334 = vadd.f32 %v202, %v333
    %335 = vdwg.mxu0
    %336 = vmatpush.msra.mxu0 0.0
    %337 = vmatpush.msra.mxu0 0.0
    %338 = vmatpush.msra.mxu0 0.0
    %339 = vmatpush.msra.mxu0 0.0
    %340 = vmatpush.msra.mxu0 0.0
    %341 = vmatpush.msra.mxu0 0.0
    %342 = vmatpush.msra.mxu0 0.0
    %343 = vmatpush.msra.mxu0 0.0
    %344 = vmatpush.msra.mxu0 %v193
    %345 = vmatpush.msra.mxu0 %v185
    %346 = vmatpush.msra.mxu0 %v177
    %347 = vmatpush.msra.mxu0 %v169
    %348 = vmatpush.msra.mxu0 %v161
    %349 = vmatpush.msra.mxu0 %v153
    %350 = vmatpush.msra.mxu0 %v145
    %351 = vmatpush.msra.mxu0 %v137
    %352 = vmatmul.f32.gmra.mxu0 %v216
    %v353 = vpop.f32.mrf.mxu0
    %v354 = vadd.f32 %v203, %v353
    %355 = vmatmul.f32.gmra.mxu0 %v219
    %v356 = vpop.f32.mrf.mxu0
    %v357 = vadd.f32 %v203, %v356
    %358 = vdwg.mxu0
    %359 = vmatpush.msra.mxu0 0.0
    %360 = vmatpush.msra.mxu0 0.0
    %361 = vmatpush.msra.mxu0 0.0
    %362 = vmatpush.msra.mxu0 0.0
    %363 = vmatpush.msra.mxu0 0.0
    %364 = vmatpush.msra.mxu0 0.0
    %365 = vmatpush.msra.mxu0 0.0
    %366 = vmatpush.msra.mxu0 0.0
    %367 = vmatpush.msra.mxu0 %v194
    %368 = vmatpush.msra.mxu0 %v186
    %369 = vmatpush.msra.mxu0 %v178
    %370 = vmatpush.msra.mxu0 %v170
    %371 = vmatpush.msra.mxu0 %v162
    %372 = vmatpush.msra.mxu0 %v154
    %373 = vmatpush.msra.mxu0 %v146
    %374 = vmatpush.msra.mxu0 %v138
    %375 = vmatmul.f32.gmra.mxu0 %v216
    %v376 = vpop.f32.mrf.mxu0
    %v377 = vadd.f32 %v204, %v376
    %378 = vmatmul.f32.gmra.mxu0 %v219
    %v379 = vpop.f32.mrf.mxu0
    %v380 = vadd.f32 %v204, %v379
    %381 = vdwg.mxu0
    %382 = vmatpush.msra.mxu0 0.0
    %383 = vmatpush.msra.mxu0 0.0
    %384 = vmatpush.msra.mxu0 0.0
    %385 = vmatpush.msra.mxu0 0.0
    %386 = vmatpush.msra.mxu0 0.0
    %387 = vmatpush.msra.mxu0 0.0
    %388 = vmatpush.msra.mxu0 0.0
    %389 = vmatpush.msra.mxu0 0.0
    %390 = vmatpush.msra.mxu0 %v195
    %391 = vmatpush.msra.mxu0 %v187
    %392 = vmatpush.msra.mxu0 %v179
    %393 = vmatpush.msra.mxu0 %v171
    %394 = vmatpush.msra.mxu0 %v163
    %395 = vmatpush.msra.mxu0 %v155
    %396 = vmatpush.msra.mxu0 %v147
    %397 = vmatpush.msra.mxu0 %v139
    %398 = vmatmul.f32.gmra.mxu0 %v216
    %v399 = vpop.f32.mrf.mxu0
    %v400 = vadd.f32 %v205, %v399
    %401 = vmatmul.f32.gmra.mxu0 %v219
    %v402 = vpop.f32.mrf.mxu0
    %v403 = vadd.f32 %v205, %v402
    %404 = vdwg.mxu0
    %v405 = vmax.f32 %v239, 0.0
    %v406 = vmax.f32 %v262, 0.0
    %v407 = vmax.f32 %v285, 0.0
    %v408 = vmax.f32 %v308, 0.0
    %v409 = vmax.f32 %v331, 0.0
    %v410 = vmax.f32 %v354, 0.0
    %v411 = vmax.f32 %v377, 0.0
    %v412 = vmax.f32 %v400, 0.0
    %v413 = vmax.f32 %v242, 0.0
    %v414 = vmax.f32 %v265, 0.0
    %v415 = vmax.f32 %v288, 0.0
    %v416 = vmax.f32 %v311, 0.0
    %v417 = vmax.f32 %v334, 0.0
    %v418 = vmax.f32 %v357, 0.0
    %v419 = vmax.f32 %v380, 0.0
    %v420 = vmax.f32 %v403, 0.0
    %v421 = vld [vmem:[#allocation8] sm:$0xff]
    %v422 = vld [vmem:[#allocation8 + $0x8] sm:$0xff]
    %v423 = vld [vmem:[#allocation8 + $0x10] sm:$0xff]
    %v424 = vld [vmem:[#allocation8 + $0x18] sm:$0xff]
    %v425 = vld [vmem:[#allocation8 + $0x20] sm:$0xff]
    %v426 = vld [vmem:[#allocation8 + $0x28] sm:$0xff]
    %v427 = vld [vmem:[#allocation8 + $0x30] sm:$0xff]
    %v428 = vld [vmem:[#allocation8 + $0x38] sm:$0xff]
    %v429 = vld [vmem:[#allocation8 + $0x40] sm:$0xff]
    %v430 = vld [vmem:[#allocation8 + $0x48] sm:$0xff]
    %v431 = vld [vmem:[#allocation8 + $0x50] sm:$0xff]
    %v432 = vld [vmem:[#allocation8 + $0x58] sm:$0xff]
    %v433 = vld [vmem:[#allocation8 + $0x60] sm:$0xff]
    %v434 = vld [vmem:[#allocation8 + $0x68] sm:$0xff]
    %v435 = vld [vmem:[#allocation8 + $0x70] sm:$0xff]
    %v436 = vld [vmem:[#allocation8 + $0x78] sm:$0xff]
    %v437 = vld [vmem:[#allocation8 + $0x80] sm:$0xff]
    %v438 = vld [vmem:[#allocation8 + $0x88] sm:$0xff]
    %v439 = vld [vmem:[#allocation8 + $0x90] sm:$0xff]
    %v440 = vld [vmem:[#allocation8 + $0x98] sm:$0xff]
    %v441 = vld [vmem:[#allocation8 + $0xa0] sm:$0xff]
    %v442 = vld [vmem:[#allocation8 + $0xa8] sm:$0xff]
    %v443 = vld [vmem:[#allocation8 + $0xb0] sm:$0xff]
    %v444 = vld [vmem:[#allocation8 + $0xb8] sm:$0xff]
    %v445 = vld [vmem:[#allocation8 + $0xc0] sm:$0xff]
    %v446 = vld [vmem:[#allocation8 + $0xc8] sm:$0xff]
    %v447 = vld [vmem:[#allocation8 + $0xd0] sm:$0xff]
    %v448 = vld [vmem:[#allocation8 + $0xd8] sm:$0xff]
    %v449 = vld [vmem:[#allocation8 + $0xe0] sm:$0xff]
    %v450 = vld [vmem:[#allocation8 + $0xe8] sm:$0xff]
    %v451 = vld [vmem:[#allocation8 + $0xf0] sm:$0xff]
    %v452 = vld [vmem:[#allocation8 + $0xf8] sm:$0xff]
    %v453 = vld [vmem:[#allocation8 + $0x100] sm:$0xff]
    %v454 = vld [vmem:[#allocation8 + $0x108] sm:$0xff]
    %v455 = vld [vmem:[#allocation8 + $0x110] sm:$0xff]
    %v456 = vld [vmem:[#allocation8 + $0x118] sm:$0xff]
    %v457 = vld [vmem:[#allocation8 + $0x120] sm:$0xff]
    %v458 = vld [vmem:[#allocation8 + $0x128] sm:$0xff]
    %v459 = vld [vmem:[#allocation8 + $0x130] sm:$0xff]
    %v460 = vld [vmem:[#allocation8 + $0x138] sm:$0xff]
    %v461 = vld [vmem:[#allocation8 + $0x140] sm:$0xff]
    %v462 = vld [vmem:[#allocation8 + $0x148] sm:$0xff]
    %v463 = vld [vmem:[#allocation8 + $0x150] sm:$0xff]
    %v464 = vld [vmem:[#allocation8 + $0x158] sm:$0xff]
    %v465 = vld [vmem:[#allocation8 + $0x160] sm:$0xff]
    %v466 = vld [vmem:[#allocation8 + $0x168] sm:$0xff]
    %v467 = vld [vmem:[#allocation8 + $0x170] sm:$0xff]
    %v468 = vld [vmem:[#allocation8 + $0x178] sm:$0xff]
    %v469 = vld [vmem:[#allocation8 + $0x180] sm:$0xff]
    %v470 = vld [vmem:[#allocation8 + $0x188] sm:$0xff]
    %v471 = vld [vmem:[#allocation8 + $0x190] sm:$0xff]
    %v472 = vld [vmem:[#allocation8 + $0x198] sm:$0xff]
    %v473 = vld [vmem:[#allocation8 + $0x1a0] sm:$0xff]
    %v474 = vld [vmem:[#allocation8 + $0x1a8] sm:$0xff]
    %v475 = vld [vmem:[#allocation8 + $0x1b0] sm:$0xff]
    %v476 = vld [vmem:[#allocation8 + $0x1b8] sm:$0xff]
    %v477 = vld [vmem:[#allocation8 + $0x1c0] sm:$0xff]
    %v478 = vld [vmem:[#allocation8 + $0x1c8] sm:$0xff]
    %v479 = vld [vmem:[#allocation8 + $0x1d0] sm:$0xff]
    %v480 = vld [vmem:[#allocation8 + $0x1d8] sm:$0xff]
    %v481 = vld [vmem:[#allocation8 + $0x1e0] sm:$0xff]
    %v482 = vld [vmem:[#allocation8 + $0x1e8] sm:$0xff]
    %v483 = vld [vmem:[#allocation8 + $0x1f0] sm:$0xff]
    %v484 = vld [vmem:[#allocation8 + $0x1f8] sm:$0xff]
    %v485 = vld [vmem:[#allocation8 + $0x200] sm:$0xff]
    %v486 = vld [vmem:[#allocation8 + $0x208] sm:$0xff]
    %v487 = vld [vmem:[#allocation8 + $0x210] sm:$0xff]
    %v488 = vld [vmem:[#allocation8 + $0x218] sm:$0xff]
    %v489 = vld [vmem:[#allocation8 + $0x220] sm:$0xff]
    %v490 = vld [vmem:[#allocation8 + $0x228] sm:$0xff]
    %v491 = vld [vmem:[#allocation8 + $0x230] sm:$0xff]
    %v492 = vld [vmem:[#allocation8 + $0x238] sm:$0xff]
    %v493 = vld [vmem:[#allocation8 + $0x240] sm:$0xff]
    %v494 = vld [vmem:[#allocation8 + $0x248] sm:$0xff]
    %v495 = vld [vmem:[#allocation8 + $0x250] sm:$0xff]
    %v496 = vld [vmem:[#allocation8 + $0x258] sm:$0xff]
    %v497 = vld [vmem:[#allocation8 + $0x260] sm:$0xff]
    %v498 = vld [vmem:[#allocation8 + $0x268] sm:$0xff]
    %v499 = vld [vmem:[#allocation8 + $0x270] sm:$0xff]
    %v500 = vld [vmem:[#allocation8 + $0x278] sm:$0xff]
    %v501 = vld [vmem:[#allocation8 + $0x280] sm:$0xff]
    %v502 = vld [vmem:[#allocation8 + $0x288] sm:$0xff]
    %v503 = vld [vmem:[#allocation8 + $0x290] sm:$0xff]
    %v504 = vld [vmem:[#allocation8 + $0x298] sm:$0xff]
    %v505 = vld [vmem:[#allocation8 + $0x2a0] sm:$0xff]
    %v506 = vld [vmem:[#allocation8 + $0x2a8] sm:$0xff]
    %v507 = vld [vmem:[#allocation8 + $0x2b0] sm:$0xff]
    %v508 = vld [vmem:[#allocation8 + $0x2b8] sm:$0xff]
    %v509 = vld [vmem:[#allocation8 + $0x2c0] sm:$0xff]
    %v510 = vld [vmem:[#allocation8 + $0x2c8] sm:$0xff]
    %v511 = vld [vmem:[#allocation8 + $0x2d0] sm:$0xff]
    %v512 = vld [vmem:[#allocation8 + $0x2d8] sm:$0xff]
    %v513 = vld [vmem:[#allocation8 + $0x2e0] sm:$0xff]
    %v514 = vld [vmem:[#allocation8 + $0x2e8] sm:$0xff]
    %v515 = vld [vmem:[#allocation8 + $0x2f0] sm:$0xff]
    %v516 = vld [vmem:[#allocation8 + $0x2f8] sm:$0xff]
    %v517 = vld [vmem:[#allocation8 + $0x300] sm:$0xff]
    %v518 = vld [vmem:[#allocation8 + $0x308] sm:$0xff]
    %v519 = vld [vmem:[#allocation8 + $0x310] sm:$0xff]
    %v520 = vld [vmem:[#allocation8 + $0x318] sm:$0xff]
    %v521 = vld [vmem:[#allocation8 + $0x320] sm:$0xff]
    %v522 = vld [vmem:[#allocation8 + $0x328] sm:$0xff]
    %v523 = vld [vmem:[#allocation8 + $0x330] sm:$0xff]
    %v524 = vld [vmem:[#allocation8 + $0x338] sm:$0xff]
    %v525 = vld [vmem:[#allocation8 + $0x340] sm:$0xff]
    %v526 = vld [vmem:[#allocation8 + $0x348] sm:$0xff]
    %v527 = vld [vmem:[#allocation8 + $0x350] sm:$0xff]
    %v528 = vld [vmem:[#allocation8 + $0x358] sm:$0xff]
    %v529 = vld [vmem:[#allocation8 + $0x360] sm:$0xff]
    %v530 = vld [vmem:[#allocation8 + $0x368] sm:$0xff]
    %v531 = vld [vmem:[#allocation8 + $0x370] sm:$0xff]
    %v532 = vld [vmem:[#allocation8 + $0x378] sm:$0xff]
    %v533 = vld [vmem:[#allocation8 + $0x380] sm:$0xff]
    %v534 = vld [vmem:[#allocation8 + $0x388] sm:$0xff]
    %v535 = vld [vmem:[#allocation8 + $0x390] sm:$0xff]
    %v536 = vld [vmem:[#allocation8 + $0x398] sm:$0xff]
    %v537 = vld [vmem:[#allocation8 + $0x3a0] sm:$0xff]
    %v538 = vld [vmem:[#allocation8 + $0x3a8] sm:$0xff]
    %v539 = vld [vmem:[#allocation8 + $0x3b0] sm:$0xff]
    %v540 = vld [vmem:[#allocation8 + $0x3b8] sm:$0xff]
    %v541 = vld [vmem:[#allocation8 + $0x3c0] sm:$0xff]
    %v542 = vld [vmem:[#allocation8 + $0x3c8] sm:$0xff]
    %v543 = vld [vmem:[#allocation8 + $0x3d0] sm:$0xff]
    %v544 = vld [vmem:[#allocation8 + $0x3d8] sm:$0xff]
    %v545 = vld [vmem:[#allocation8 + $0x3e0] sm:$0xff]
    %v546 = vld [vmem:[#allocation8 + $0x3e8] sm:$0xff]
    %v547 = vld [vmem:[#allocation8 + $0x3f0] sm:$0xff]
    %v548 = vld [vmem:[#allocation8 + $0x3f8] sm:$0xff]
    %v549 = vld [vmem:[#allocation8 + $0x400] sm:$0xff]
    %v550 = vld [vmem:[#allocation8 + $0x408] sm:$0xff]
    %v551 = vld [vmem:[#allocation8 + $0x410] sm:$0xff]
    %v552 = vld [vmem:[#allocation8 + $0x418] sm:$0xff]
    %v553 = vld [vmem:[#allocation8 + $0x420] sm:$0xff]
    %v554 = vld [vmem:[#allocation8 + $0x428] sm:$0xff]
    %v555 = vld [vmem:[#allocation8 + $0x430] sm:$0xff]
    %v556 = vld [vmem:[#allocation8 + $0x438] sm:$0xff]
    %v557 = vld [vmem:[#allocation8 + $0x440] sm:$0xff]
    %v558 = vld [vmem:[#allocation8 + $0x448] sm:$0xff]
    %v559 = vld [vmem:[#allocation8 + $0x450] sm:$0xff]
    %v560 = vld [vmem:[#allocation8 + $0x458] sm:$0xff]
    %v561 = vld [vmem:[#allocation8 + $0x460] sm:$0xff]
    %v562 = vld [vmem:[#allocation8 + $0x468] sm:$0xff]
    %v563 = vld [vmem:[#allocation8 + $0x470] sm:$0xff]
    %v564 = vld [vmem:[#allocation8 + $0x478] sm:$0xff]
    %v565 = vld [vmem:[#allocation8 + $0x480] sm:$0xff]
    %v566 = vld [vmem:[#allocation8 + $0x488] sm:$0xff]
    %v567 = vld [vmem:[#allocation8 + $0x490] sm:$0xff]
    %v568 = vld [vmem:[#allocation8 + $0x498] sm:$0xff]
    %v569 = vld [vmem:[#allocation8 + $0x4a0] sm:$0xff]
    %v570 = vld [vmem:[#allocation8 + $0x4a8] sm:$0xff]
    %v571 = vld [vmem:[#allocation8 + $0x4b0] sm:$0xff]
    %v572 = vld [vmem:[#allocation8 + $0x4b8] sm:$0xff]
    %v573 = vld [vmem:[#allocation8 + $0x4c0] sm:$0xff]
    %v574 = vld [vmem:[#allocation8 + $0x4c8] sm:$0xff]
    %v575 = vld [vmem:[#allocation8 + $0x4d0] sm:$0xff]
    %v576 = vld [vmem:[#allocation8 + $0x4d8] sm:$0xff]
    %v577 = vld [vmem:[#allocation8 + $0x4e0] sm:$0xff]
    %v578 = vld [vmem:[#allocation8 + $0x4e8] sm:$0xff]
    %v579 = vld [vmem:[#allocation8 + $0x4f0] sm:$0xff]
    %v580 = vld [vmem:[#allocation8 + $0x4f8] sm:$0xff]
    %v581 = vld [vmem:[#allocation8 + $0x500] sm:$0xff]
    %v582 = vld [vmem:[#allocation8 + $0x508] sm:$0xff]
    %v583 = vld [vmem:[#allocation8 + $0x510] sm:$0xff]
    %v584 = vld [vmem:[#allocation8 + $0x518] sm:$0xff]
    %v585 = vld [vmem:[#allocation8 + $0x520] sm:$0xff]
    %v586 = vld [vmem:[#allocation8 + $0x528] sm:$0xff]
    %v587 = vld [vmem:[#allocation8 + $0x530] sm:$0xff]
    %v588 = vld [vmem:[#allocation8 + $0x538] sm:$0xff]
    %v589 = vld [vmem:[#allocation8 + $0x540] sm:$0xff]
    %v590 = vld [vmem:[#allocation8 + $0x548] sm:$0xff]
    %v591 = vld [vmem:[#allocation8 + $0x550] sm:$0xff]
    %v592 = vld [vmem:[#allocation8 + $0x558] sm:$0xff]
    %v593 = vld [vmem:[#allocation8 + $0x560] sm:$0xff]
    %v594 = vld [vmem:[#allocation8 + $0x568] sm:$0xff]
    %v595 = vld [vmem:[#allocation8 + $0x570] sm:$0xff]
    %v596 = vld [vmem:[#allocation8 + $0x578] sm:$0xff]
    %v597 = vld [vmem:[#allocation8 + $0x580] sm:$0xff]
    %v598 = vld [vmem:[#allocation8 + $0x588] sm:$0xff]
    %v599 = vld [vmem:[#allocation8 + $0x590] sm:$0xff]
    %v600 = vld [vmem:[#allocation8 + $0x598] sm:$0xff]
    %v601 = vld [vmem:[#allocation8 + $0x5a0] sm:$0xff]
    %v602 = vld [vmem:[#allocation8 + $0x5a8] sm:$0xff]
    %v603 = vld [vmem:[#allocation8 + $0x5b0] sm:$0xff]
    %v604 = vld [vmem:[#allocation8 + $0x5b8] sm:$0xff]
    %v605 = vld [vmem:[#allocation8 + $0x5c0] sm:$0xff]
    %v606 = vld [vmem:[#allocation8 + $0x5c8] sm:$0xff]
    %v607 = vld [vmem:[#allocation8 + $0x5d0] sm:$0xff]
    %v608 = vld [vmem:[#allocation8 + $0x5d8] sm:$0xff]
    %v609 = vld [vmem:[#allocation8 + $0x5e0] sm:$0xff]
    %v610 = vld [vmem:[#allocation8 + $0x5e8] sm:$0xff]
    %v611 = vld [vmem:[#allocation8 + $0x5f0] sm:$0xff]
    %v612 = vld [vmem:[#allocation8 + $0x5f8] sm:$0xff]
    %v613 = vld [vmem:[#allocation8 + $0x600] sm:$0xff]
    %v614 = vld [vmem:[#allocation8 + $0x608] sm:$0xff]
    %v615 = vld [vmem:[#allocation8 + $0x610] sm:$0xff]
    %v616 = vld [vmem:[#allocation8 + $0x618] sm:$0xff]
    %v617 = vld [vmem:[#allocation8 + $0x620] sm:$0xff]
    %v618 = vld [vmem:[#allocation8 + $0x628] sm:$0xff]
    %v619 = vld [vmem:[#allocation8 + $0x630] sm:$0xff]
    %v620 = vld [vmem:[#allocation8 + $0x638] sm:$0xff]
    %v621 = vld [vmem:[#allocation8 + $0x640] sm:$0xff]
    %v622 = vld [vmem:[#allocation8 + $0x648] sm:$0xff]
    %v623 = vld [vmem:[#allocation8 + $0x650] sm:$0xff]
    %v624 = vld [vmem:[#allocation8 + $0x658] sm:$0xff]
    %v625 = vld [vmem:[#allocation8 + $0x660] sm:$0xff]
    %v626 = vld [vmem:[#allocation8 + $0x668] sm:$0xff]
    %v627 = vld [vmem:[#allocation8 + $0x670] sm:$0xff]
    %v628 = vld [vmem:[#allocation8 + $0x678] sm:$0xff]
    %v629 = vld [vmem:[#allocation8 + $0x680] sm:$0xff]
    %v630 = vld [vmem:[#allocation8 + $0x688] sm:$0xff]
    %v631 = vld [vmem:[#allocation8 + $0x690] sm:$0xff]
    %v632 = vld [vmem:[#allocation8 + $0x698] sm:$0xff]
    %v633 = vld [vmem:[#allocation8 + $0x6a0] sm:$0xff]
    %v634 = vld [vmem:[#allocation8 + $0x6a8] sm:$0xff]
    %v635 = vld [vmem:[#allocation8 + $0x6b0] sm:$0xff]
    %v636 = vld [vmem:[#allocation8 + $0x6b8] sm:$0xff]
    %v637 = vld [vmem:[#allocation8 + $0x6c0] sm:$0xff]
    %v638 = vld [vmem:[#allocation8 + $0x6c8] sm:$0xff]
    %v639 = vld [vmem:[#allocation8 + $0x6d0] sm:$0xff]
    %v640 = vld [vmem:[#allocation8 + $0x6d8] sm:$0xff]
    %v641 = vld [vmem:[#allocation8 + $0x6e0] sm:$0xff]
    %v642 = vld [vmem:[#allocation8 + $0x6e8] sm:$0xff]
    %v643 = vld [vmem:[#allocation8 + $0x6f0] sm:$0xff]
    %v644 = vld [vmem:[#allocation8 + $0x6f8] sm:$0xff]
    %v645 = vld [vmem:[#allocation8 + $0x700] sm:$0xff]
    %v646 = vld [vmem:[#allocation8 + $0x708] sm:$0xff]
    %v647 = vld [vmem:[#allocation8 + $0x710] sm:$0xff]
    %v648 = vld [vmem:[#allocation8 + $0x718] sm:$0xff]
    %v649 = vld [vmem:[#allocation8 + $0x720] sm:$0xff]
    %v650 = vld [vmem:[#allocation8 + $0x728] sm:$0xff]
    %v651 = vld [vmem:[#allocation8 + $0x730] sm:$0xff]
    %v652 = vld [vmem:[#allocation8 + $0x738] sm:$0xff]
    %v653 = vld [vmem:[#allocation8 + $0x740] sm:$0xff]
    %v654 = vld [vmem:[#allocation8 + $0x748] sm:$0xff]
    %v655 = vld [vmem:[#allocation8 + $0x750] sm:$0xff]
    %v656 = vld [vmem:[#allocation8 + $0x758] sm:$0xff]
    %v657 = vld [vmem:[#allocation8 + $0x760] sm:$0xff]
    %v658 = vld [vmem:[#allocation8 + $0x768] sm:$0xff]
    %v659 = vld [vmem:[#allocation8 + $0x770] sm:$0xff]
    %v660 = vld [vmem:[#allocation8 + $0x778] sm:$0xff]
    %v661 = vld [vmem:[#allocation8 + $0x780] sm:$0xff]
    %v662 = vld [vmem:[#allocation8 + $0x788] sm:$0xff]
    %v663 = vld [vmem:[#allocation8 + $0x790] sm:$0xff]
    %v664 = vld [vmem:[#allocation8 + $0x798] sm:$0xff]
    %v665 = vld [vmem:[#allocation8 + $0x7a0] sm:$0xff]
    %v666 = vld [vmem:[#allocation8 + $0x7a8] sm:$0xff]
    %v667 = vld [vmem:[#allocation8 + $0x7b0] sm:$0xff]
    %v668 = vld [vmem:[#allocation8 + $0x7b8] sm:$0xff]
    %v669 = vld [vmem:[#allocation8 + $0x7c0] sm:$0xff]
    %v670 = vld [vmem:[#allocation8 + $0x7c8] sm:$0xff]
    %v671 = vld [vmem:[#allocation8 + $0x7d0] sm:$0xff]
    %v672 = vld [vmem:[#allocation8 + $0x7d8] sm:$0xff]
    %v673 = vld [vmem:[#allocation8 + $0x7e0] sm:$0xff]
    %v674 = vld [vmem:[#allocation8 + $0x7e8] sm:$0xff]
    %v675 = vld [vmem:[#allocation8 + $0x7f0] sm:$0xff]
    %v676 = vld [vmem:[#allocation8 + $0x7f8] sm:$0xff]
    %v677 = vld [vmem:[#allocation8 + $0x800] sm:$0xff]
    %v678 = vld [vmem:[#allocation8 + $0x808] sm:$0xff]
    %v679 = vld [vmem:[#allocation8 + $0x810] sm:$0xff]
    %v680 = vld [vmem:[#allocation8 + $0x818] sm:$0xff]
    %v681 = vld [vmem:[#allocation8 + $0x820] sm:$0xff]
    %v682 = vld [vmem:[#allocation8 + $0x828] sm:$0xff]
    %v683 = vld [vmem:[#allocation8 + $0x830] sm:$0xff]
    %v684 = vld [vmem:[#allocation8 + $0x838] sm:$0xff]
    %v685 = vld [vmem:[#allocation8 + $0x840] sm:$0xff]
    %v686 = vld [vmem:[#allocation8 + $0x848] sm:$0xff]
    %v687 = vld [vmem:[#allocation8 + $0x850] sm:$0xff]
    %v688 = vld [vmem:[#allocation8 + $0x858] sm:$0xff]
    %v689 = vld [vmem:[#allocation8 + $0x860] sm:$0xff]
    %v690 = vld [vmem:[#allocation8 + $0x868] sm:$0xff]
    %v691 = vld [vmem:[#allocation8 + $0x870] sm:$0xff]
    %v692 = vld [vmem:[#allocation8 + $0x878] sm:$0xff]
    %v693 = vld [vmem:[#allocation8 + $0x880] sm:$0xff]
    %v694 = vld [vmem:[#allocation8 + $0x888] sm:$0xff]
    %v695 = vld [vmem:[#allocation8 + $0x890] sm:$0xff]
    %v696 = vld [vmem:[#allocation8 + $0x898] sm:$0xff]
    %v697 = vld [vmem:[#allocation8 + $0x8a0] sm:$0xff]
    %v698 = vld [vmem:[#allocation8 + $0x8a8] sm:$0xff]
    %v699 = vld [vmem:[#allocation8 + $0x8b0] sm:$0xff]
    %v700 = vld [vmem:[#allocation8 + $0x8b8] sm:$0xff]
    %v701 = vld [vmem:[#allocation8 + $0x8c0] sm:$0xff]
    %v702 = vld [vmem:[#allocation8 + $0x8c8] sm:$0xff]
    %v703 = vld [vmem:[#allocation8 + $0x8d0] sm:$0xff]
    %v704 = vld [vmem:[#allocation8 + $0x8d8] sm:$0xff]
    %v705 = vld [vmem:[#allocation8 + $0x8e0] sm:$0xff]
    %v706 = vld [vmem:[#allocation8 + $0x8e8] sm:$0xff]
    %v707 = vld [vmem:[#allocation8 + $0x8f0] sm:$0xff]
    %v708 = vld [vmem:[#allocation8 + $0x8f8] sm:$0xff]
    %v709 = vld [vmem:[#allocation8 + $0x900] sm:$0xff]
    %v710 = vld [vmem:[#allocation8 + $0x908] sm:$0xff]
    %v711 = vld [vmem:[#allocation8 + $0x910] sm:$0xff]
    %v712 = vld [vmem:[#allocation8 + $0x918] sm:$0xff]
    %v713 = vld [vmem:[#allocation8 + $0x920] sm:$0xff]
    %v714 = vld [vmem:[#allocation8 + $0x928] sm:$0xff]
    %v715 = vld [vmem:[#allocation8 + $0x930] sm:$0xff]
    %v716 = vld [vmem:[#allocation8 + $0x938] sm:$0xff]
    %v717 = vld [vmem:[#allocation8 + $0x940] sm:$0xff]
    %v718 = vld [vmem:[#allocation8 + $0x948] sm:$0xff]
    %v719 = vld [vmem:[#allocation8 + $0x950] sm:$0xff]
    %v720 = vld [vmem:[#allocation8 + $0x958] sm:$0xff]
    %v721 = vld [vmem:[#allocation8 + $0x960] sm:$0xff]
    %v722 = vld [vmem:[#allocation8 + $0x968] sm:$0xff]
    %v723 = vld [vmem:[#allocation8 + $0x970] sm:$0xff]
    %v724 = vld [vmem:[#allocation8 + $0x978] sm:$0xff]
    %v725 = vld [vmem:[#allocation8 + $0x980] sm:$0xff]
    %v726 = vld [vmem:[#allocation8 + $0x988] sm:$0xff]
    %v727 = vld [vmem:[#allocation8 + $0x990] sm:$0xff]
    %v728 = vld [vmem:[#allocation8 + $0x998] sm:$0xff]
    %v729 = vld [vmem:[#allocation8 + $0x9a0] sm:$0xff]
    %v730 = vld [vmem:[#allocation8 + $0x9a8] sm:$0xff]
    %v731 = vld [vmem:[#allocation8 + $0x9b0] sm:$0xff]
    %v732 = vld [vmem:[#allocation8 + $0x9b8] sm:$0xff]
    %v733 = vld [vmem:[#allocation8 + $0x9c0] sm:$0xff]
    %v734 = vld [vmem:[#allocation8 + $0x9c8] sm:$0xff]
    %v735 = vld [vmem:[#allocation8 + $0x9d0] sm:$0xff]
    %v736 = vld [vmem:[#allocation8 + $0x9d8] sm:$0xff]
    %v737 = vld [vmem:[#allocation8 + $0x9e0] sm:$0xff]
    %v738 = vld [vmem:[#allocation8 + $0x9e8] sm:$0xff]
    %v739 = vld [vmem:[#allocation8 + $0x9f0] sm:$0xff]
    %v740 = vld [vmem:[#allocation8 + $0x9f8] sm:$0xff]
    %v741 = vld [vmem:[#allocation8 + $0xa00] sm:$0xff]
    %v742 = vld [vmem:[#allocation8 + $0xa08] sm:$0xff]
    %v743 = vld [vmem:[#allocation8 + $0xa10] sm:$0xff]
    %v744 = vld [vmem:[#allocation8 + $0xa18] sm:$0xff]
    %v745 = vld [vmem:[#allocation8 + $0xa20] sm:$0xff]
    %v746 = vld [vmem:[#allocation8 + $0xa28] sm:$0xff]
    %v747 = vld [vmem:[#allocation8 + $0xa30] sm:$0xff]
    %v748 = vld [vmem:[#allocation8 + $0xa38] sm:$0xff]
    %v749 = vld [vmem:[#allocation8 + $0xa40] sm:$0xff]
    %v750 = vld [vmem:[#allocation8 + $0xa48] sm:$0xff]
    %v751 = vld [vmem:[#allocation8 + $0xa50] sm:$0xff]
    %v752 = vld [vmem:[#allocation8 + $0xa58] sm:$0xff]
    %v753 = vld [vmem:[#allocation8 + $0xa60] sm:$0xff]
    %v754 = vld [vmem:[#allocation8 + $0xa68] sm:$0xff]
    %v755 = vld [vmem:[#allocation8 + $0xa70] sm:$0xff]
    %v756 = vld [vmem:[#allocation8 + $0xa78] sm:$0xff]
    %v757 = vld [vmem:[#allocation8 + $0xa80] sm:$0xff]
    %v758 = vld [vmem:[#allocation8 + $0xa88] sm:$0xff]
    %v759 = vld [vmem:[#allocation8 + $0xa90] sm:$0xff]
    %v760 = vld [vmem:[#allocation8 + $0xa98] sm:$0xff]
    %v761 = vld [vmem:[#allocation8 + $0xaa0] sm:$0xff]
    %v762 = vld [vmem:[#allocation8 + $0xaa8] sm:$0xff]
    %v763 = vld [vmem:[#allocation8 + $0xab0] sm:$0xff]
    %v764 = vld [vmem:[#allocation8 + $0xab8] sm:$0xff]
    %v765 = vld [vmem:[#allocation8 + $0xac0] sm:$0xff]
    %v766 = vld [vmem:[#allocation8 + $0xac8] sm:$0xff]
    %v767 = vld [vmem:[#allocation8 + $0xad0] sm:$0xff]
    %v768 = vld [vmem:[#allocation8 + $0xad8] sm:$0xff]
    %v769 = vld [vmem:[#allocation8 + $0xae0] sm:$0xff]
    %v770 = vld [vmem:[#allocation8 + $0xae8] sm:$0xff]
    %v771 = vld [vmem:[#allocation8 + $0xaf0] sm:$0xff]
    %v772 = vld [vmem:[#allocation8 + $0xaf8] sm:$0xff]
    %v773 = vld [vmem:[#allocation8 + $0xb00] sm:$0xff]
    %v774 = vld [vmem:[#allocation8 + $0xb08] sm:$0xff]
    %v775 = vld [vmem:[#allocation8 + $0xb10] sm:$0xff]
    %v776 = vld [vmem:[#allocation8 + $0xb18] sm:$0xff]
    %v777 = vld [vmem:[#allocation8 + $0xb20] sm:$0xff]
    %v778 = vld [vmem:[#allocation8 + $0xb28] sm:$0xff]
    %v779 = vld [vmem:[#allocation8 + $0xb30] sm:$0xff]
    %v780 = vld [vmem:[#allocation8 + $0xb38] sm:$0xff]
    %v781 = vld [vmem:[#allocation8 + $0xb40] sm:$0xff]
    %v782 = vld [vmem:[#allocation8 + $0xb48] sm:$0xff]
    %v783 = vld [vmem:[#allocation8 + $0xb50] sm:$0xff]
    %v784 = vld [vmem:[#allocation8 + $0xb58] sm:$0xff]
    %v785 = vld [vmem:[#allocation8 + $0xb60] sm:$0xff]
    %v786 = vld [vmem:[#allocation8 + $0xb68] sm:$0xff]
    %v787 = vld [vmem:[#allocation8 + $0xb70] sm:$0xff]
    %v788 = vld [vmem:[#allocation8 + $0xb78] sm:$0xff]
    %v789 = vld [vmem:[#allocation8 + $0xb80] sm:$0xff]
    %v790 = vld [vmem:[#allocation8 + $0xb88] sm:$0xff]
    %v791 = vld [vmem:[#allocation8 + $0xb90] sm:$0xff]
    %v792 = vld [vmem:[#allocation8 + $0xb98] sm:$0xff]
    %v793 = vld [vmem:[#allocation8 + $0xba0] sm:$0xff]
    %v794 = vld [vmem:[#allocation8 + $0xba8] sm:$0xff]
    %v795 = vld [vmem:[#allocation8 + $0xbb0] sm:$0xff]
    %v796 = vld [vmem:[#allocation8 + $0xbb8] sm:$0xff]
    %v797 = vld [vmem:[#allocation8 + $0xbc0] sm:$0xff]
    %v798 = vld [vmem:[#allocation8 + $0xbc8] sm:$0xff]
    %v799 = vld [vmem:[#allocation8 + $0xbd0] sm:$0xff]
    %v800 = vld [vmem:[#allocation8 + $0xbd8] sm:$0xff]
    %v801 = vld [vmem:[#allocation8 + $0xbe0] sm:$0xff]
    %v802 = vld [vmem:[#allocation8 + $0xbe8] sm:$0xff]
    %v803 = vld [vmem:[#allocation8 + $0xbf0] sm:$0xff]
    %v804 = vld [vmem:[#allocation8 + $0xbf8] sm:$0xff]
    %v805 = vld [vmem:[#allocation8 + $0xc00] sm:$0xff]
    %v806 = vld [vmem:[#allocation8 + $0xc08] sm:$0xff]
    %v807 = vld [vmem:[#allocation8 + $0xc10] sm:$0xff]
    %v808 = vld [vmem:[#allocation8 + $0xc18] sm:$0xff]
    %v809 = vld [vmem:[#allocation8 + $0xc20] sm:$0xff]
    %v810 = vld [vmem:[#allocation8 + $0xc28] sm:$0xff]
    %v811 = vld [vmem:[#allocation8 + $0xc30] sm:$0xff]
    %v812 = vld [vmem:[#allocation8 + $0xc38] sm:$0xff]
    %v813 = vld [vmem:[#allocation8 + $0xc40] sm:$0xff]
    %v814 = vld [vmem:[#allocation8 + $0xc48] sm:$0xff]
    %v815 = vld [vmem:[#allocation8 + $0xc50] sm:$0xff]
    %v816 = vld [vmem:[#allocation8 + $0xc58] sm:$0xff]
    %v817 = vld [vmem:[#allocation8 + $0xc60] sm:$0xff]
    %v818 = vld [vmem:[#allocation8 + $0xc68] sm:$0xff]
    %v819 = vld [vmem:[#allocation8 + $0xc70] sm:$0xff]
    %v820 = vld [vmem:[#allocation8 + $0xc78] sm:$0xff]
    %v821 = vld [vmem:[#allocation8 + $0xc80] sm:$0xff]
    %v822 = vld [vmem:[#allocation8 + $0xc88] sm:$0xff]
    %v823 = vld [vmem:[#allocation8 + $0xc90] sm:$0xff]
    %v824 = vld [vmem:[#allocation8 + $0xc98] sm:$0xff]
    %v825 = vld [vmem:[#allocation8 + $0xca0] sm:$0xff]
    %v826 = vld [vmem:[#allocation8 + $0xca8] sm:$0xff]
    %v827 = vld [vmem:[#allocation8 + $0xcb0] sm:$0xff]
    %v828 = vld [vmem:[#allocation8 + $0xcb8] sm:$0xff]
    %v829 = vld [vmem:[#allocation8 + $0xcc0] sm:$0xff]
    %v830 = vld [vmem:[#allocation8 + $0xcc8] sm:$0xff]
    %v831 = vld [vmem:[#allocation8 + $0xcd0] sm:$0xff]
    %v832 = vld [vmem:[#allocation8 + $0xcd8] sm:$0xff]
    %v833 = vld [vmem:[#allocation8 + $0xce0] sm:$0xff]
    %v834 = vld [vmem:[#allocation8 + $0xce8] sm:$0xff]
    %v835 = vld [vmem:[#allocation8 + $0xcf0] sm:$0xff]
    %v836 = vld [vmem:[#allocation8 + $0xcf8] sm:$0xff]
    %v837 = vld [vmem:[#allocation8 + $0xd00] sm:$0xff]
    %v838 = vld [vmem:[#allocation8 + $0xd08] sm:$0xff]
    %v839 = vld [vmem:[#allocation8 + $0xd10] sm:$0xff]
    %v840 = vld [vmem:[#allocation8 + $0xd18] sm:$0xff]
    %v841 = vld [vmem:[#allocation8 + $0xd20] sm:$0xff]
    %v842 = vld [vmem:[#allocation8 + $0xd28] sm:$0xff]
    %v843 = vld [vmem:[#allocation8 + $0xd30] sm:$0xff]
    %v844 = vld [vmem:[#allocation8 + $0xd38] sm:$0xff]
    %v845 = vld [vmem:[#allocation8 + $0xd40] sm:$0xff]
    %v846 = vld [vmem:[#allocation8 + $0xd48] sm:$0xff]
    %v847 = vld [vmem:[#allocation8 + $0xd50] sm:$0xff]
    %v848 = vld [vmem:[#allocation8 + $0xd58] sm:$0xff]
    %v849 = vld [vmem:[#allocation8 + $0xd60] sm:$0xff]
    %v850 = vld [vmem:[#allocation8 + $0xd68] sm:$0xff]
    %v851 = vld [vmem:[#allocation8 + $0xd70] sm:$0xff]
    %v852 = vld [vmem:[#allocation8 + $0xd78] sm:$0xff]
    %v853 = vld [vmem:[#allocation8 + $0xd80] sm:$0xff]
    %v854 = vld [vmem:[#allocation8 + $0xd88] sm:$0xff]
    %v855 = vld [vmem:[#allocation8 + $0xd90] sm:$0xff]
    %v856 = vld [vmem:[#allocation8 + $0xd98] sm:$0xff]
    %v857 = vld [vmem:[#allocation8 + $0xda0] sm:$0xff]
    %v858 = vld [vmem:[#allocation8 + $0xda8] sm:$0xff]
    %v859 = vld [vmem:[#allocation8 + $0xdb0] sm:$0xff]
    %v860 = vld [vmem:[#allocation8 + $0xdb8] sm:$0xff]
    %v861 = vld [vmem:[#allocation8 + $0xdc0] sm:$0xff]
    %v862 = vld [vmem:[#allocation8 + $0xdc8] sm:$0xff]
    %v863 = vld [vmem:[#allocation8 + $0xdd0] sm:$0xff]
    %v864 = vld [vmem:[#allocation8 + $0xdd8] sm:$0xff]
    %v865 = vld [vmem:[#allocation8 + $0xde0] sm:$0xff]
    %v866 = vld [vmem:[#allocation8 + $0xde8] sm:$0xff]
    %v867 = vld [vmem:[#allocation8 + $0xdf0] sm:$0xff]
    %v868 = vld [vmem:[#allocation8 + $0xdf8] sm:$0xff]
    %v869 = vld [vmem:[#allocation8 + $0xe00] sm:$0xff]
    %v870 = vld [vmem:[#allocation8 + $0xe08] sm:$0xff]
    %v871 = vld [vmem:[#allocation8 + $0xe10] sm:$0xff]
    %v872 = vld [vmem:[#allocation8 + $0xe18] sm:$0xff]
    %v873 = vld [vmem:[#allocation8 + $0xe20] sm:$0xff]
    %v874 = vld [vmem:[#allocation8 + $0xe28] sm:$0xff]
    %v875 = vld [vmem:[#allocation8 + $0xe30] sm:$0xff]
    %v876 = vld [vmem:[#allocation8 + $0xe38] sm:$0xff]
    %v877 = vld [vmem:[#allocation8 + $0xe40] sm:$0xff]
    %v878 = vld [vmem:[#allocation8 + $0xe48] sm:$0xff]
    %v879 = vld [vmem:[#allocation8 + $0xe50] sm:$0xff]
    %v880 = vld [vmem:[#allocation8 + $0xe58] sm:$0xff]
    %v881 = vld [vmem:[#allocation8 + $0xe60] sm:$0xff]
    %v882 = vld [vmem:[#allocation8 + $0xe68] sm:$0xff]
    %v883 = vld [vmem:[#allocation8 + $0xe70] sm:$0xff]
    %v884 = vld [vmem:[#allocation8 + $0xe78] sm:$0xff]
    %v885 = vld [vmem:[#allocation8 + $0xe80] sm:$0xff]
    %v886 = vld [vmem:[#allocation8 + $0xe88] sm:$0xff]
    %v887 = vld [vmem:[#allocation8 + $0xe90] sm:$0xff]
    %v888 = vld [vmem:[#allocation8 + $0xe98] sm:$0xff]
    %v889 = vld [vmem:[#allocation8 + $0xea0] sm:$0xff]
    %v890 = vld [vmem:[#allocation8 + $0xea8] sm:$0xff]
    %v891 = vld [vmem:[#allocation8 + $0xeb0] sm:$0xff]
    %v892 = vld [vmem:[#allocation8 + $0xeb8] sm:$0xff]
    %v893 = vld [vmem:[#allocation8 + $0xec0] sm:$0xff]
    %v894 = vld [vmem:[#allocation8 + $0xec8] sm:$0xff]
    %v895 = vld [vmem:[#allocation8 + $0xed0] sm:$0xff]
    %v896 = vld [vmem:[#allocation8 + $0xed8] sm:$0xff]
    %v897 = vld [vmem:[#allocation8 + $0xee0] sm:$0xff]
    %v898 = vld [vmem:[#allocation8 + $0xee8] sm:$0xff]
    %v899 = vld [vmem:[#allocation8 + $0xef0] sm:$0xff]
    %v900 = vld [vmem:[#allocation8 + $0xef8] sm:$0xff]
    %v901 = vld [vmem:[#allocation8 + $0xf00] sm:$0xff]
    %v902 = vld [vmem:[#allocation8 + $0xf08] sm:$0xff]
    %v903 = vld [vmem:[#allocation8 + $0xf10] sm:$0xff]
    %v904 = vld [vmem:[#allocation8 + $0xf18] sm:$0xff]
    %v905 = vld [vmem:[#allocation8 + $0xf20] sm:$0xff]
    %v906 = vld [vmem:[#allocation8 + $0xf28] sm:$0xff]
    %v907 = vld [vmem:[#allocation8 + $0xf30] sm:$0xff]
    %v908 = vld [vmem:[#allocation8 + $0xf38] sm:$0xff]
    %v909 = vld [vmem:[#allocation8 + $0xf40] sm:$0xff]
    %v910 = vld [vmem:[#allocation8 + $0xf48] sm:$0xff]
    %v911 = vld [vmem:[#allocation8 + $0xf50] sm:$0xff]
    %v912 = vld [vmem:[#allocation8 + $0xf58] sm:$0xff]
    %v913 = vld [vmem:[#allocation8 + $0xf60] sm:$0xff]
    %v914 = vld [vmem:[#allocation8 + $0xf68] sm:$0xff]
    %v915 = vld [vmem:[#allocation8 + $0xf70] sm:$0xff]
    %v916 = vld [vmem:[#allocation8 + $0xf78] sm:$0xff]
    %v917 = vld [vmem:[#allocation8 + $0xf80] sm:$0xff]
    %v918 = vld [vmem:[#allocation8 + $0xf88] sm:$0xff]
    %v919 = vld [vmem:[#allocation8 + $0xf90] sm:$0xff]
    %v920 = vld [vmem:[#allocation8 + $0xf98] sm:$0xff]
    %v921 = vld [vmem:[#allocation8 + $0xfa0] sm:$0xff]
    %v922 = vld [vmem:[#allocation8 + $0xfa8] sm:$0xff]
    %v923 = vld [vmem:[#allocation8 + $0xfb0] sm:$0xff]
    %v924 = vld [vmem:[#allocation8 + $0xfb8] sm:$0xff]
    %v925 = vld [vmem:[#allocation8 + $0xfc0] sm:$0xff]
    %v926 = vld [vmem:[#allocation8 + $0xfc8] sm:$0xff]
    %v927 = vld [vmem:[#allocation8 + $0xfd0] sm:$0xff]
    %v928 = vld [vmem:[#allocation8 + $0xfd8] sm:$0xff]
    %v929 = vld [vmem:[#allocation8 + $0xfe0] sm:$0xff]
    %v930 = vld [vmem:[#allocation8 + $0xfe8] sm:$0xff]
    %v931 = vld [vmem:[#allocation8 + $0xff0] sm:$0xff]
    %v932 = vld [vmem:[#allocation8 + $0xff8] sm:$0xff]
    %v933 = vld [vmem:[#allocation10] sm:$0xf]
    %v935 = vperm.slane %v933, 0
    %v936 = vperm.slane %v933, 1
    %v937 = vperm.slane %v933, 2
    %v938 = vperm.slane %v933, 3
    %943 = vmatpush.msra.mxu0 %v481
    %944 = vmatpush.msra.mxu0 %v477
    %945 = vmatpush.msra.mxu0 %v473
    %946 = vmatpush.msra.mxu0 %v469
    %947 = vmatpush.msra.mxu0 %v465
    %948 = vmatpush.msra.mxu0 %v461
    %949 = vmatpush.msra.mxu0 %v457
    %950 = vmatpush.msra.mxu0 %v453
    %951 = vmatpush.msra.mxu0 %v449
    %952 = vmatpush.msra.mxu0 %v445
    %953 = vmatpush.msra.mxu0 %v441
    %954 = vmatpush.msra.mxu0 %v437
    %955 = vmatpush.msra.mxu0 %v433
    %956 = vmatpush.msra.mxu0 %v429
    %957 = vmatpush.msra.mxu0 %v425
    %958 = vmatpush.msra.mxu0 %v421
    %959 = vmatmul.f32.gmra.mxu0 %v405
    %v960 = vpop.f32.mrf.mxu0
    %v961 = vadd.f32 %v935, %v960
    %962 = vmatmul.f32.gmra.mxu0 %v413
    %v963 = vpop.f32.mrf.mxu0
    %v964 = vadd.f32 %v935, %v963
    %965 = vdwg.mxu0
    %966 = vmatpush.msra.mxu0 %v545
    %967 = vmatpush.msra.mxu0 %v541
    %968 = vmatpush.msra.mxu0 %v537
    %969 = vmatpush.msra.mxu0 %v533
    %970 = vmatpush.msra.mxu0 %v529
    %971 = vmatpush.msra.mxu0 %v525
    %972 = vmatpush.msra.mxu0 %v521
    %973 = vmatpush.msra.mxu0 %v517
    %974 = vmatpush.msra.mxu0 %v513
    %975 = vmatpush.msra.mxu0 %v509
    %976 = vmatpush.msra.mxu0 %v505
    %977 = vmatpush.msra.mxu0 %v501
    %978 = vmatpush.msra.mxu0 %v497
    %979 = vmatpush.msra.mxu0 %v493
    %980 = vmatpush.msra.mxu0 %v489
    %981 = vmatpush.msra.mxu0 %v485
    %982 = vmatmul.f32.gmra.mxu0 %v406
    %v983 = vpop.f32.mrf.mxu0
    %v984 = vadd.f32 %v961, %v983
    %985 = vmatmul.f32.gmra.mxu0 %v414
    %v986 = vpop.f32.mrf.mxu0
    %v987 = vadd.f32 %v964, %v986
    %988 = vdwg.mxu0
    %989 = vmatpush.msra.mxu0 %v609
    %990 = vmatpush.msra.mxu0 %v605
    %991 = vmatpush.msra.mxu0 %v601
    %992 = vmatpush.msra.mxu0 %v597
    %993 = vmatpush.msra.mxu0 %v593
    %994 = vmatpush.msra.mxu0 %v589
    %995 = vmatpush.msra.mxu0 %v585
    %996 = vmatpush.msra.mxu0 %v581
    %997 = vmatpush.msra.mxu0 %v577
    %998 = vmatpush.msra.mxu0 %v573
    %999 = vmatpush.msra.mxu0 %v569
    %1000 = vmatpush.msra.mxu0 %v565
    %1001 = vmatpush.msra.mxu0 %v561
    %1002 = vmatpush.msra.mxu0 %v557
    %1003 = vmatpush.msra.mxu0 %v553
    %1004 = vmatpush.msra.mxu0 %v549
    %1005 = vmatmul.f32.gmra.mxu0 %v407
    %v1006 = vpop.f32.mrf.mxu0
    %v1007 = vadd.f32 %v984, %v1006
    %1008 = vmatmul.f32.gmra.mxu0 %v415
    %v1009 = vpop.f32.mrf.mxu0
    %v1010 = vadd.f32 %v987, %v1009
    %1011 = vdwg.mxu0
    %1012 = vmatpush.msra.mxu0 %v673
    %1013 = vmatpush.msra.mxu0 %v669
    %1014 = vmatpush.msra.mxu0 %v665
    %1015 = vmatpush.msra.mxu0 %v661
    %1016 = vmatpush.msra.mxu0 %v657
    %1017 = vmatpush.msra.mxu0 %v653
    %1018 = vmatpush.msra.mxu0 %v649
    %1019 = vmatpush.msra.mxu0 %v645
    %1020 = vmatpush.msra.mxu0 %v641
    %1021 = vmatpush.msra.mxu0 %v637
    %1022 = vmatpush.msra.mxu0 %v633
    %1023 = vmatpush.msra.mxu0 %v629
    %1024 = vmatpush.msra.mxu0 %v625
    %1025 = vmatpush.msra.mxu0 %v621
    %1026 = vmatpush.msra.mxu0 %v617
    %1027 = vmatpush.msra.mxu0 %v613
    %1028 = vmatmul.f32.gmra.mxu0 %v408
    %v1029 = vpop.f32.mrf.mxu0
    %v1030 = vadd.f32 %v1007, %v1029
    %1031 = vmatmul.f32.gmra.mxu0 %v416
    %v1032 = vpop.f32.mrf.mxu0
    %v1033 = vadd.f32 %v1010, %v1032
    %1034 = vdwg.mxu0
    %1035 = vmatpush.msra.mxu0 %v737
    %1036 = vmatpush.msra.mxu0 %v733
    %1037 = vmatpush.msra.mxu0 %v729
    %1038 = vmatpush.msra.mxu0 %v725
    %1039 = vmatpush.msra.mxu0 %v721
    %1040 = vmatpush.msra.mxu0 %v717
    %1041 = vmatpush.msra.mxu0 %v713
    %1042 = vmatpush.msra.mxu0 %v709
    %1043 = vmatpush.msra.mxu0 %v705
    %1044 = vmatpush.msra.mxu0 %v701
    %1045 = vmatpush.msra.mxu0 %v697
    %1046 = vmatpush.msra.mxu0 %v693
    %1047 = vmatpush.msra.mxu0 %v689
    %1048 = vmatpush.msra.mxu0 %v685
    %1049 = vmatpush.msra.mxu0 %v681
    %1050 = vmatpush.msra.mxu0 %v677
    %1051 = vmatmul.f32.gmra.mxu0 %v409
    %v1052 = vpop.f32.mrf.mxu0
    %v1053 = vadd.f32 %v1030, %v1052
    %1054 = vmatmul.f32.gmra.mxu0 %v417
    %v1055 = vpop.f32.mrf.mxu0
    %v1056 = vadd.f32 %v1033, %v1055
    %1057 = vdwg.mxu0
    %1058 = vmatpush.msra.mxu0 %v801
    %1059 = vmatpush.msra.mxu0 %v797
    %1060 = vmatpush.msra.mxu0 %v793
    %1061 = vmatpush.msra.mxu0 %v789
    %1062 = vmatpush.msra.mxu0 %v785
    %1063 = vmatpush.msra.mxu0 %v781
    %1064 = vmatpush.msra.mxu0 %v777
    %1065 = vmatpush.msra.mxu0 %v773
    %1066 = vmatpush.msra.mxu0 %v769
    %1067 = vmatpush.msra.mxu0 %v765
    %1068 = vmatpush.msra.mxu0 %v761
    %1069 = vmatpush.msra.mxu0 %v757
    %1070 = vmatpush.msra.mxu0 %v753
    %1071 = vmatpush.msra.mxu0 %v749
    %1072 = vmatpush.msra.mxu0 %v745
    %1073 = vmatpush.msra.mxu0 %v741
    %1074 = vmatmul.f32.gmra.mxu0 %v410
    %v1075 = vpop.f32.mrf.mxu0
    %v1076 = vadd.f32 %v1053, %v1075
    %1077 = vmatmul.f32.gmra.mxu0 %v418
    %v1078 = vpop.f32.mrf.mxu0
    %v1079 = vadd.f32 %v1056, %v1078
    %1080 = vdwg.mxu0
    %1081 = vmatpush.msra.mxu0 %v865
    %1082 = vmatpush.msra.mxu0 %v861
    %1083 = vmatpush.msra.mxu0 %v857
    %1084 = vmatpush.msra.mxu0 %v853
    %1085 = vmatpush.msra.mxu0 %v849
    %1086 = vmatpush.msra.mxu0 %v845
    %1087 = vmatpush.msra.mxu0 %v841
    %1088 = vmatpush.msra.mxu0 %v837
    %1089 = vmatpush.msra.mxu0 %v833
    %1090 = vmatpush.msra.mxu0 %v829
    %1091 = vmatpush.msra.mxu0 %v825
    %1092 = vmatpush.msra.mxu0 %v821
    %1093 = vmatpush.msra.mxu0 %v817
    %1094 = vmatpush.msra.mxu0 %v813
    %1095 = vmatpush.msra.mxu0 %v809
    %1096 = vmatpush.msra.mxu0 %v805
    %1097 = vmatmul.f32.gmra.mxu0 %v411
    %v1098 = vpop.f32.mrf.mxu0
    %v1099 = vadd.f32 %v1076, %v1098
    %1100 = vmatmul.f32.gmra.mxu0 %v419
    %v1101 = vpop.f32.mrf.mxu0
    %v1102 = vadd.f32 %v1079, %v1101
    %1103 = vdwg.mxu0
    %1104 = vmatpush.msra.mxu0 %v929
    %1105 = vmatpush.msra.mxu0 %v925
    %1106 = vmatpush.msra.mxu0 %v921
    %1107 = vmatpush.msra.mxu0 %v917
    %1108 = vmatpush.msra.mxu0 %v913
    %1109 = vmatpush.msra.mxu0 %v909
    %1110 = vmatpush.msra.mxu0 %v905
    %1111 = vmatpush.msra.mxu0 %v901
    %1112 = vmatpush.msra.mxu0 %v897
    %1113 = vmatpush.msra.mxu0 %v893
    %1114 = vmatpush.msra.mxu0 %v889
    %1115 = vmatpush.msra.mxu0 %v885
    %1116 = vmatpush.msra.mxu0 %v881
    %1117 = vmatpush.msra.mxu0 %v877
    %1118 = vmatpush.msra.mxu0 %v873
    %1119 = vmatpush.msra.mxu0 %v869
    %1120 = vmatmul.f32.gmra.mxu0 %v412
    %v1121 = vpop.f32.mrf.mxu0
    %v1122 = vadd.f32 %v1099, %v1121
    %1123 = vmatmul.f32.gmra.mxu0 %v420
    %v1124 = vpop.f32.mrf.mxu0
    %v1125 = vadd.f32 %v1102, %v1124
    %1126 = vdwg.mxu0
    %1127 = vmatpush.msra.mxu0 %v482
    %1128 = vmatpush.msra.mxu0 %v478
    %1129 = vmatpush.msra.mxu0 %v474
    %1130 = vmatpush.msra.mxu0 %v470
    %1131 = vmatpush.msra.mxu0 %v466
    %1132 = vmatpush.msra.mxu0 %v462
    %1133 = vmatpush.msra.mxu0 %v458
    %1134 = vmatpush.msra.mxu0 %v454
    %1135 = vmatpush.msra.mxu0 %v450
    %1136 = vmatpush.msra.mxu0 %v446
    %1137 = vmatpush.msra.mxu0 %v442
    %1138 = vmatpush.msra.mxu0 %v438
    %1139 = vmatpush.msra.mxu0 %v434
    %1140 = vmatpush.msra.mxu0 %v430
    %1141 = vmatpush.msra.mxu0 %v426
    %1142 = vmatpush.msra.mxu0 %v422
    %1143 = vmatmul.f32.gmra.mxu0 %v405
    %v1144 = vpop.f32.mrf.mxu0
    %v1145 = vadd.f32 %v936, %v1144
    %1146 = vmatmul.f32.gmra.mxu0 %v413
    %v1147 = vpop.f32.mrf.mxu0
    %v1148 = vadd.f32 %v936, %v1147
    %1149 = vdwg.mxu0
    %1150 = vmatpush.msra.mxu0 %v546
    %1151 = vmatpush.msra.mxu0 %v542
    %1152 = vmatpush.msra.mxu0 %v538
    %1153 = vmatpush.msra.mxu0 %v534
    %1154 = vmatpush.msra.mxu0 %v530
    %1155 = vmatpush.msra.mxu0 %v526
    %1156 = vmatpush.msra.mxu0 %v522
    %1157 = vmatpush.msra.mxu0 %v518
    %1158 = vmatpush.msra.mxu0 %v514
    %1159 = vmatpush.msra.mxu0 %v510
    %1160 = vmatpush.msra.mxu0 %v506
    %1161 = vmatpush.msra.mxu0 %v502
    %1162 = vmatpush.msra.mxu0 %v498
    %1163 = vmatpush.msra.mxu0 %v494
    %1164 = vmatpush.msra.mxu0 %v490
    %1165 = vmatpush.msra.mxu0 %v486
    %1166 = vmatmul.f32.gmra.mxu0 %v406
    %v1167 = vpop.f32.mrf.mxu0
    %v1168 = vadd.f32 %v1145, %v1167
    %1169 = vmatmul.f32.gmra.mxu0 %v414
    %v1170 = vpop.f32.mrf.mxu0
    %v1171 = vadd.f32 %v1148, %v1170
    %1172 = vdwg.mxu0
    %1173 = vmatpush.msra.mxu0 %v610
    %1174 = vmatpush.msra.mxu0 %v606
    %1175 = vmatpush.msra.mxu0 %v602
    %1176 = vmatpush.msra.mxu0 %v598
    %1177 = vmatpush.msra.mxu0 %v594
    %1178 = vmatpush.msra.mxu0 %v590
    %1179 = vmatpush.msra.mxu0 %v586
    %1180 = vmatpush.msra.mxu0 %v582
    %1181 = vmatpush.msra.mxu0 %v578
    %1182 = vmatpush.msra.mxu0 %v574
    %1183 = vmatpush.msra.mxu0 %v570
    %1184 = vmatpush.msra.mxu0 %v566
    %1185 = vmatpush.msra.mxu0 %v562
    %1186 = vmatpush.msra.mxu0 %v558
    %1187 = vmatpush.msra.mxu0 %v554
    %1188 = vmatpush.msra.mxu0 %v550
    %1189 = vmatmul.f32.gmra.mxu0 %v407
    %v1190 = vpop.f32.mrf.mxu0
    %v1191 = vadd.f32 %v1168, %v1190
    %1192 = vmatmul.f32.gmra.mxu0 %v415
    %v1193 = vpop.f32.mrf.mxu0
    %v1194 = vadd.f32 %v1171, %v1193
    %1195 = vdwg.mxu0
    %1196 = vmatpush.msra.mxu0 %v674
    %1197 = vmatpush.msra.mxu0 %v670
    %1198 = vmatpush.msra.mxu0 %v666
    %1199 = vmatpush.msra.mxu0 %v662
    %1200 = vmatpush.msra.mxu0 %v658
    %1201 = vmatpush.msra.mxu0 %v654
    %1202 = vmatpush.msra.mxu0 %v650
    %1203 = vmatpush.msra.mxu0 %v646
    %1204 = vmatpush.msra.mxu0 %v642
    %1205 = vmatpush.msra.mxu0 %v638
    %1206 = vmatpush.msra.mxu0 %v634
    %1207 = vmatpush.msra.mxu0 %v630
    %1208 = vmatpush.msra.mxu0 %v626
    %1209 = vmatpush.msra.mxu0 %v622
    %1210 = vmatpush.msra.mxu0 %v618
    %1211 = vmatpush.msra.mxu0 %v614
    %1212 = vmatmul.f32.gmra.mxu0 %v408
    %v1213 = vpop.f32.mrf.mxu0
    %v1214 = vadd.f32 %v1191, %v1213
    %1215 = vmatmul.f32.gmra.mxu0 %v416
    %v1216 = vpop.f32.mrf.mxu0
    %v1217 = vadd.f32 %v1194, %v1216
    %1218 = vdwg.mxu0
    %1219 = vmatpush.msra.mxu0 %v738
    %1220 = vmatpush.msra.mxu0 %v734
    %1221 = vmatpush.msra.mxu0 %v730
    %1222 = vmatpush.msra.mxu0 %v726
    %1223 = vmatpush.msra.mxu0 %v722
    %1224 = vmatpush.msra.mxu0 %v718
    %1225 = vmatpush.msra.mxu0 %v714
    %1226 = vmatpush.msra.mxu0 %v710
    %1227 = vmatpush.msra.mxu0 %v706
    %1228 = vmatpush.msra.mxu0 %v702
    %1229 = vmatpush.msra.mxu0 %v698
    %1230 = vmatpush.msra.mxu0 %v694
    %1231 = vmatpush.msra.mxu0 %v690
    %1232 = vmatpush.msra.mxu0 %v686
    %1233 = vmatpush.msra.mxu0 %v682
    %1234 = vmatpush.msra.mxu0 %v678
    %1235 = vmatmul.f32.gmra.mxu0 %v409
    %v1236 = vpop.f32.mrf.mxu0
    %v1237 = vadd.f32 %v1214, %v1236
    %1238 = vmatmul.f32.gmra.mxu0 %v417
    %v1239 = vpop.f32.mrf.mxu0
    %v1240 = vadd.f32 %v1217, %v1239
    %1241 = vdwg.mxu0
    %1242 = vmatpush.msra.mxu0 %v802
    %1243 = vmatpush.msra.mxu0 %v798
    %1244 = vmatpush.msra.mxu0 %v794
    %1245 = vmatpush.msra.mxu0 %v790
    %1246 = vmatpush.msra.mxu0 %v786
    %1247 = vmatpush.msra.mxu0 %v782
    %1248 = vmatpush.msra.mxu0 %v778
    %1249 = vmatpush.msra.mxu0 %v774
    %1250 = vmatpush.msra.mxu0 %v770
    %1251 = vmatpush.msra.mxu0 %v766
    %1252 = vmatpush.msra.mxu0 %v762
    %1253 = vmatpush.msra.mxu0 %v758
    %1254 = vmatpush.msra.mxu0 %v754
    %1255 = vmatpush.msra.mxu0 %v750
    %1256 = vmatpush.msra.mxu0 %v746
    %1257 = vmatpush.msra.mxu0 %v742
    %1258 = vmatmul.f32.gmra.mxu0 %v410
    %v1259 = vpop.f32.mrf.mxu0
    %v1260 = vadd.f32 %v1237, %v1259
    %1261 = vmatmul.f32.gmra.mxu0 %v418
    %v1262 = vpop.f32.mrf.mxu0
    %v1263 = vadd.f32 %v1240, %v1262
    %1264 = vdwg.mxu0
    %1265 = vmatpush.msra.mxu0 %v866
    %1266 = vmatpush.msra.mxu0 %v862
    %1267 = vmatpush.msra.mxu0 %v858
    %1268 = vmatpush.msra.mxu0 %v854
    %1269 = vmatpush.msra.mxu0 %v850
    %1270 = vmatpush.msra.mxu0 %v846
    %1271 = vmatpush.msra.mxu0 %v842
    %1272 = vmatpush.msra.mxu0 %v838
    %1273 = vmatpush.msra.mxu0 %v834
    %1274 = vmatpush.msra.mxu0 %v830
    %1275 = vmatpush.msra.mxu0 %v826
    %1276 = vmatpush.msra.mxu0 %v822
    %1277 = vmatpush.msra.mxu0 %v818
    %1278 = vmatpush.msra.mxu0 %v814
    %1279 = vmatpush.msra.mxu0 %v810
    %1280 = vmatpush.msra.mxu0 %v806
    %1281 = vmatmul.f32.gmra.mxu0 %v411
    %v1282 = vpop.f32.mrf.mxu0
    %v1283 = vadd.f32 %v1260, %v1282
    %1284 = vmatmul.f32.gmra.mxu0 %v419
    %v1285 = vpop.f32.mrf.mxu0
    %v1286 = vadd.f32 %v1263, %v1285
    %1287 = vdwg.mxu0
    %1288 = vmatpush.msra.mxu0 %v930
    %1289 = vmatpush.msra.mxu0 %v926
    %1290 = vmatpush.msra.mxu0 %v922
    %1291 = vmatpush.msra.mxu0 %v918
    %1292 = vmatpush.msra.mxu0 %v914
    %1293 = vmatpush.msra.mxu0 %v910
    %1294 = vmatpush.msra.mxu0 %v906
    %1295 = vmatpush.msra.mxu0 %v902
    %1296 = vmatpush.msra.mxu0 %v898
    %1297 = vmatpush.msra.mxu0 %v894
    %1298 = vmatpush.msra.mxu0 %v890
    %1299 = vmatpush.msra.mxu0 %v886
    %1300 = vmatpush.msra.mxu0 %v882
    %1301 = vmatpush.msra.mxu0 %v878
    %1302 = vmatpush.msra.mxu0 %v874
    %1303 = vmatpush.msra.mxu0 %v870
    %1304 = vmatmul.f32.gmra.mxu0 %v412
    %v1305 = vpop.f32.mrf.mxu0
    %v1306 = vadd.f32 %v1283, %v1305
    %1307 = vmatmul.f32.gmra.mxu0 %v420
    %v1308 = vpop.f32.mrf.mxu0
    %v1309 = vadd.f32 %v1286, %v1308
    %1310 = vdwg.mxu0
    %1311 = vmatpush.msra.mxu0 %v483
    %1312 = vmatpush.msra.mxu0 %v479
    %1313 = vmatpush.msra.mxu0 %v475
    %1314 = vmatpush.msra.mxu0 %v471
    %1315 = vmatpush.msra.mxu0 %v467
    %1316 = vmatpush.msra.mxu0 %v463
    %1317 = vmatpush.msra.mxu0 %v459
    %1318 = vmatpush.msra.mxu0 %v455
    %1319 = vmatpush.msra.mxu0 %v451
    %1320 = vmatpush.msra.mxu0 %v447
    %1321 = vmatpush.msra.mxu0 %v443
    %1322 = vmatpush.msra.mxu0 %v439
    %1323 = vmatpush.msra.mxu0 %v435
    %1324 = vmatpush.msra.mxu0 %v431
    %1325 = vmatpush.msra.mxu0 %v427
    %1326 = vmatpush.msra.mxu0 %v423
    %1327 = vmatmul.f32.gmra.mxu0 %v405
    %v1328 = vpop.f32.mrf.mxu0
    %v1329 = vadd.f32 %v937, %v1328
    %1330 = vmatmul.f32.gmra.mxu0 %v413
    %v1331 = vpop.f32.mrf.mxu0
    %v1332 = vadd.f32 %v937, %v1331
    %1333 = vdwg.mxu0
    %1334 = vmatpush.msra.mxu0 %v547
    %1335 = vmatpush.msra.mxu0 %v543
    %1336 = vmatpush.msra.mxu0 %v539
    %1337 = vmatpush.msra.mxu0 %v535
    %1338 = vmatpush.msra.mxu0 %v531
    %1339 = vmatpush.msra.mxu0 %v527
    %1340 = vmatpush.msra.mxu0 %v523
    %1341 = vmatpush.msra.mxu0 %v519
    %1342 = vmatpush.msra.mxu0 %v515
    %1343 = vmatpush.msra.mxu0 %v511
    %1344 = vmatpush.msra.mxu0 %v507
    %1345 = vmatpush.msra.mxu0 %v503
    %1346 = vmatpush.msra.mxu0 %v499
    %1347 = vmatpush.msra.mxu0 %v495
    %1348 = vmatpush.msra.mxu0 %v491
    %1349 = vmatpush.msra.mxu0 %v487
    %1350 = vmatmul.f32.gmra.mxu0 %v406
    %v1351 = vpop.f32.mrf.mxu0
    %v1352 = vadd.f32 %v1329, %v1351
    %1353 = vmatmul.f32.gmra.mxu0 %v414
    %v1354 = vpop.f32.mrf.mxu0
    %v1355 = vadd.f32 %v1332, %v1354
    %1356 = vdwg.mxu0
    %1357 = vmatpush.msra.mxu0 %v611
    %1358 = vmatpush.msra.mxu0 %v607
    %1359 = vmatpush.msra.mxu0 %v603
    %1360 = vmatpush.msra.mxu0 %v599
    %1361 = vmatpush.msra.mxu0 %v595
    %1362 = vmatpush.msra.mxu0 %v591
    %1363 = vmatpush.msra.mxu0 %v587
    %1364 = vmatpush.msra.mxu0 %v583
    %1365 = vmatpush.msra.mxu0 %v579
    %1366 = vmatpush.msra.mxu0 %v575
    %1367 = vmatpush.msra.mxu0 %v571
    %1368 = vmatpush.msra.mxu0 %v567
    %1369 = vmatpush.msra.mxu0 %v563
    %1370 = vmatpush.msra.mxu0 %v559
    %1371 = vmatpush.msra.mxu0 %v555
    %1372 = vmatpush.msra.mxu0 %v551
    %1373 = vmatmul.f32.gmra.mxu0 %v407
    %v1374 = vpop.f32.mrf.mxu0
    %v1375 = vadd.f32 %v1352, %v1374
    %1376 = vmatmul.f32.gmra.mxu0 %v415
    %v1377 = vpop.f32.mrf.mxu0
    %v1378 = vadd.f32 %v1355, %v1377
    %1379 = vdwg.mxu0
    %1380 = vmatpush.msra.mxu0 %v675
    %1381 = vmatpush.msra.mxu0 %v671
    %1382 = vmatpush.msra.mxu0 %v667
    %1383 = vmatpush.msra.mxu0 %v663
    %1384 = vmatpush.msra.mxu0 %v659
    %1385 = vmatpush.msra.mxu0 %v655
    %1386 = vmatpush.msra.mxu0 %v651
    %1387 = vmatpush.msra.mxu0 %v647
    %1388 = vmatpush.msra.mxu0 %v643
    %1389 = vmatpush.msra.mxu0 %v639
    %1390 = vmatpush.msra.mxu0 %v635
    %1391 = vmatpush.msra.mxu0 %v631
    %1392 = vmatpush.msra.mxu0 %v627
    %1393 = vmatpush.msra.mxu0 %v623
    %1394 = vmatpush.msra.mxu0 %v619
    %1395 = vmatpush.msra.mxu0 %v615
    %1396 = vmatmul.f32.gmra.mxu0 %v408
    %v1397 = vpop.f32.mrf.mxu0
    %v1398 = vadd.f32 %v1375, %v1397
    %1399 = vmatmul.f32.gmra.mxu0 %v416
    %v1400 = vpop.f32.mrf.mxu0
    %v1401 = vadd.f32 %v1378, %v1400
    %1402 = vdwg.mxu0
    %1403 = vmatpush.msra.mxu0 %v739
    %1404 = vmatpush.msra.mxu0 %v735
    %1405 = vmatpush.msra.mxu0 %v731
    %1406 = vmatpush.msra.mxu0 %v727
    %1407 = vmatpush.msra.mxu0 %v723
    %1408 = vmatpush.msra.mxu0 %v719
    %1409 = vmatpush.msra.mxu0 %v715
    %1410 = vmatpush.msra.mxu0 %v711
    %1411 = vmatpush.msra.mxu0 %v707
    %1412 = vmatpush.msra.mxu0 %v703
    %1413 = vmatpush.msra.mxu0 %v699
    %1414 = vmatpush.msra.mxu0 %v695
    %1415 = vmatpush.msra.mxu0 %v691
    %1416 = vmatpush.msra.mxu0 %v687
    %1417 = vmatpush.msra.mxu0 %v683
    %1418 = vmatpush.msra.mxu0 %v679
    %1419 = vmatmul.f32.gmra.mxu0 %v409
    %v1420 = vpop.f32.mrf.mxu0
    %v1421 = vadd.f32 %v1398, %v1420
    %1422 = vmatmul.f32.gmra.mxu0 %v417
    %v1423 = vpop.f32.mrf.mxu0
    %v1424 = vadd.f32 %v1401, %v1423
    %1425 = vdwg.mxu0
    %1426 = vmatpush.msra.mxu0 %v803
    %1427 = vmatpush.msra.mxu0 %v799
    %1428 = vmatpush.msra.mxu0 %v795
    %1429 = vmatpush.msra.mxu0 %v791
    %1430 = vmatpush.msra.mxu0 %v787
    %1431 = vmatpush.msra.mxu0 %v783
    %1432 = vmatpush.msra.mxu0 %v779
    %1433 = vmatpush.msra.mxu0 %v775
    %1434 = vmatpush.msra.mxu0 %v771
    %1435 = vmatpush.msra.mxu0 %v767
    %1436 = vmatpush.msra.mxu0 %v763
    %1437 = vmatpush.msra.mxu0 %v759
    %1438 = vmatpush.msra.mxu0 %v755
    %1439 = vmatpush.msra.mxu0 %v751
    %1440 = vmatpush.msra.mxu0 %v747
    %1441 = vmatpush.msra.mxu0 %v743
    %1442 = vmatmul.f32.gmra.mxu0 %v410
    %v1443 = vpop.f32.mrf.mxu0
    %v1444 = vadd.f32 %v1421, %v1443
    %1445 = vmatmul.f32.gmra.mxu0 %v418
    %v1446 = vpop.f32.mrf.mxu0
    %v1447 = vadd.f32 %v1424, %v1446
    %1448 = vdwg.mxu0
    %1449 = vmatpush.msra.mxu0 %v867
    %1450 = vmatpush.msra.mxu0 %v863
    %1451 = vmatpush.msra.mxu0 %v859
    %1452 = vmatpush.msra.mxu0 %v855
    %1453 = vmatpush.msra.mxu0 %v851
    %1454 = vmatpush.msra.mxu0 %v847
    %1455 = vmatpush.msra.mxu0 %v843
    %1456 = vmatpush.msra.mxu0 %v839
    %1457 = vmatpush.msra.mxu0 %v835
    %1458 = vmatpush.msra.mxu0 %v831
    %1459 = vmatpush.msra.mxu0 %v827
    %1460 = vmatpush.msra.mxu0 %v823
    %1461 = vmatpush.msra.mxu0 %v819
    %1462 = vmatpush.msra.mxu0 %v815
    %1463 = vmatpush.msra.mxu0 %v811
    %1464 = vmatpush.msra.mxu0 %v807
    %1465 = vmatmul.f32.gmra.mxu0 %v411
    %v1466 = vpop.f32.mrf.mxu0
    %v1467 = vadd.f32 %v1444, %v1466
    %1468 = vmatmul.f32.gmra.mxu0 %v419
    %v1469 = vpop.f32.mrf.mxu0
    %v1470 = vadd.f32 %v1447, %v1469
    %1471 = vdwg.mxu0
    %1472 = vmatpush.msra.mxu0 %v931
    %1473 = vmatpush.msra.mxu0 %v927
    %1474 = vmatpush.msra.mxu0 %v923
    %1475 = vmatpush.msra.mxu0 %v919
    %1476 = vmatpush.msra.mxu0 %v915
    %1477 = vmatpush.msra.mxu0 %v911
    %1478 = vmatpush.msra.mxu0 %v907
    %1479 = vmatpush.msra.mxu0 %v903
    %1480 = vmatpush.msra.mxu0 %v899
    %1481 = vmatpush.msra.mxu0 %v895
    %1482 = vmatpush.msra.mxu0 %v891
    %1483 = vmatpush.msra.mxu0 %v887
    %1484 = vmatpush.msra.mxu0 %v883
    %1485 = vmatpush.msra.mxu0 %v879
    %1486 = vmatpush.msra.mxu0 %v875
    %1487 = vmatpush.msra.mxu0 %v871
    %1488 = vmatmul.f32.gmra.mxu0 %v412
    %v1489 = vpop.f32.mrf.mxu0
    %v1490 = vadd.f32 %v1467, %v1489
    %1491 = vmatmul.f32.gmra.mxu0 %v420
    %v1492 = vpop.f32.mrf.mxu0
    %v1493 = vadd.f32 %v1470, %v1492
    %1494 = vdwg.mxu0
    %1495 = vmatpush.msra.mxu0 %v484
    %1496 = vmatpush.msra.mxu0 %v480
    %1497 = vmatpush.msra.mxu0 %v476
    %1498 = vmatpush.msra.mxu0 %v472
    %1499 = vmatpush.msra.mxu0 %v468
    %1500 = vmatpush.msra.mxu0 %v464
    %1501 = vmatpush.msra.mxu0 %v460
    %1502 = vmatpush.msra.mxu0 %v456
    %1503 = vmatpush.msra.mxu0 %v452
    %1504 = vmatpush.msra.mxu0 %v448
    %1505 = vmatpush.msra.mxu0 %v444
    %1506 = vmatpush.msra.mxu0 %v440
    %1507 = vmatpush.msra.mxu0 %v436
    %1508 = vmatpush.msra.mxu0 %v432
    %1509 = vmatpush.msra.mxu0 %v428
    %1510 = vmatpush.msra.mxu0 %v424
    %1511 = vmatmul.f32.gmra.mxu0 %v405
    %v1512 = vpop.f32.mrf.mxu0
    %v1513 = vadd.f32 %v938, %v1512
    %1514 = vmatmul.f32.gmra.mxu0 %v413
    %v1515 = vpop.f32.mrf.mxu0
    %v1516 = vadd.f32 %v938, %v1515
    %1517 = vdwg.mxu0
    %1518 = vmatpush.msra.mxu0 %v548
    %1519 = vmatpush.msra.mxu0 %v544
    %1520 = vmatpush.msra.mxu0 %v540
    %1521 = vmatpush.msra.mxu0 %v536
    %1522 = vmatpush.msra.mxu0 %v532
    %1523 = vmatpush.msra.mxu0 %v528
    %1524 = vmatpush.msra.mxu0 %v524
    %1525 = vmatpush.msra.mxu0 %v520
    %1526 = vmatpush.msra.mxu0 %v516
    %1527 = vmatpush.msra.mxu0 %v512
    %1528 = vmatpush.msra.mxu0 %v508
    %1529 = vmatpush.msra.mxu0 %v504
    %1530 = vmatpush.msra.mxu0 %v500
    %1531 = vmatpush.msra.mxu0 %v496
    %1532 = vmatpush.msra.mxu0 %v492
    %1533 = vmatpush.msra.mxu0 %v488
    %1534 = vmatmul.f32.gmra.mxu0 %v406
    %v1535 = vpop.f32.mrf.mxu0
    %v1536 = vadd.f32 %v1513, %v1535
    %1537 = vmatmul.f32.gmra.mxu0 %v414
    %v1538 = vpop.f32.mrf.mxu0
    %v1539 = vadd.f32 %v1516, %v1538
    %1540 = vdwg.mxu0
    %1541 = vmatpush.msra.mxu0 %v612
    %1542 = vmatpush.msra.mxu0 %v608
    %1543 = vmatpush.msra.mxu0 %v604
    %1544 = vmatpush.msra.mxu0 %v600
    %1545 = vmatpush.msra.mxu0 %v596
    %1546 = vmatpush.msra.mxu0 %v592
    %1547 = vmatpush.msra.mxu0 %v588
    %1548 = vmatpush.msra.mxu0 %v584
    %1549 = vmatpush.msra.mxu0 %v580
    %1550 = vmatpush.msra.mxu0 %v576
    %1551 = vmatpush.msra.mxu0 %v572
    %1552 = vmatpush.msra.mxu0 %v568
    %1553 = vmatpush.msra.mxu0 %v564
    %1554 = vmatpush.msra.mxu0 %v560
    %1555 = vmatpush.msra.mxu0 %v556
    %1556 = vmatpush.msra.mxu0 %v552
    %1557 = vmatmul.f32.gmra.mxu0 %v407
    %v1558 = vpop.f32.mrf.mxu0
    %v1559 = vadd.f32 %v1536, %v1558
    %1560 = vmatmul.f32.gmra.mxu0 %v415
    %v1561 = vpop.f32.mrf.mxu0
    %v1562 = vadd.f32 %v1539, %v1561
    %1563 = vdwg.mxu0
    %1564 = vmatpush.msra.mxu0 %v676
    %1565 = vmatpush.msra.mxu0 %v672
    %1566 = vmatpush.msra.mxu0 %v668
    %1567 = vmatpush.msra.mxu0 %v664
    %1568 = vmatpush.msra.mxu0 %v660
    %1569 = vmatpush.msra.mxu0 %v656
    %1570 = vmatpush.msra.mxu0 %v652
    %1571 = vmatpush.msra.mxu0 %v648
    %1572 = vmatpush.msra.mxu0 %v644
    %1573 = vmatpush.msra.mxu0 %v640
    %1574 = vmatpush.msra.mxu0 %v636
    %1575 = vmatpush.msra.mxu0 %v632
    %1576 = vmatpush.msra.mxu0 %v628
    %1577 = vmatpush.msra.mxu0 %v624
    %1578 = vmatpush.msra.mxu0 %v620
    %1579 = vmatpush.msra.mxu0 %v616
    %1580 = vmatmul.f32.gmra.mxu0 %v408
    %v1581 = vpop.f32.mrf.mxu0
    %v1582 = vadd.f32 %v1559, %v1581
    %1583 = vmatmul.f32.gmra.mxu0 %v416
    %v1584 = vpop.f32.mrf.mxu0
    %v1585 = vadd.f32 %v1562, %v1584
    %1586 = vdwg.mxu0
    %1587 = vmatpush.msra.mxu0 %v740
    %1588 = vmatpush.msra.mxu0 %v736
    %1589 = vmatpush.msra.mxu0 %v732
    %1590 = vmatpush.msra.mxu0 %v728
    %1591 = vmatpush.msra.mxu0 %v724
    %1592 = vmatpush.msra.mxu0 %v720
    %1593 = vmatpush.msra.mxu0 %v716
    %1594 = vmatpush.msra.mxu0 %v712
    %1595 = vmatpush.msra.mxu0 %v708
    %1596 = vmatpush.msra.mxu0 %v704
    %1597 = vmatpush.msra.mxu0 %v700
    %1598 = vmatpush.msra.mxu0 %v696
    %1599 = vmatpush.msra.mxu0 %v692
    %1600 = vmatpush.msra.mxu0 %v688
    %1601 = vmatpush.msra.mxu0 %v684
    %1602 = vmatpush.msra.mxu0 %v680
    %1603 = vmatmul.f32.gmra.mxu0 %v409
    %v1604 = vpop.f32.mrf.mxu0
    %v1605 = vadd.f32 %v1582, %v1604
    %1606 = vmatmul.f32.gmra.mxu0 %v417
    %v1607 = vpop.f32.mrf.mxu0
    %v1608 = vadd.f32 %v1585, %v1607
    %1609 = vdwg.mxu0
    %1610 = vmatpush.msra.mxu0 %v804
    %1611 = vmatpush.msra.mxu0 %v800
    %1612 = vmatpush.msra.mxu0 %v796
    %1613 = vmatpush.msra.mxu0 %v792
    %1614 = vmatpush.msra.mxu0 %v788
    %1615 = vmatpush.msra.mxu0 %v784
    %1616 = vmatpush.msra.mxu0 %v780
    %1617 = vmatpush.msra.mxu0 %v776
    %1618 = vmatpush.msra.mxu0 %v772
    %1619 = vmatpush.msra.mxu0 %v768
    %1620 = vmatpush.msra.mxu0 %v764
    %1621 = vmatpush.msra.mxu0 %v760
    %1622 = vmatpush.msra.mxu0 %v756
    %1623 = vmatpush.msra.mxu0 %v752
    %1624 = vmatpush.msra.mxu0 %v748
    %1625 = vmatpush.msra.mxu0 %v744
    %1626 = vmatmul.f32.gmra.mxu0 %v410
    %v1627 = vpop.f32.mrf.mxu0
    %v1628 = vadd.f32 %v1605, %v1627
    %1629 = vmatmul.f32.gmra.mxu0 %v418
    %v1630 = vpop.f32.mrf.mxu0
    %v1631 = vadd.f32 %v1608, %v1630
    %1632 = vdwg.mxu0
    %1633 = vmatpush.msra.mxu0 %v868
    %1634 = vmatpush.msra.mxu0 %v864
    %1635 = vmatpush.msra.mxu0 %v860
    %1636 = vmatpush.msra.mxu0 %v856
    %1637 = vmatpush.msra.mxu0 %v852
    %1638 = vmatpush.msra.mxu0 %v848
    %1639 = vmatpush.msra.mxu0 %v844
    %1640 = vmatpush.msra.mxu0 %v840
    %1641 = vmatpush.msra.mxu0 %v836
    %1642 = vmatpush.msra.mxu0 %v832
    %1643 = vmatpush.msra.mxu0 %v828
    %1644 = vmatpush.msra.mxu0 %v824
    %1645 = vmatpush.msra.mxu0 %v820
    %1646 = vmatpush.msra.mxu0 %v816
    %1647 = vmatpush.msra.mxu0 %v812
    %1648 = vmatpush.msra.mxu0 %v808
    %1649 = vmatmul.f32.gmra.mxu0 %v411
    %v1650 = vpop.f32.mrf.mxu0
    %v1651 = vadd.f32 %v1628, %v1650
    %1652 = vmatmul.f32.gmra.mxu0 %v419
    %v1653 = vpop.f32.mrf.mxu0
    %v1654 = vadd.f32 %v1631, %v1653
    %1655 = vdwg.mxu0
    %1656 = vmatpush.msra.mxu0 %v932
    %1657 = vmatpush.msra.mxu0 %v928
    %1658 = vmatpush.msra.mxu0 %v924
    %1659 = vmatpush.msra.mxu0 %v920
    %1660 = vmatpush.msra.mxu0 %v916
    %1661 = vmatpush.msra.mxu0 %v912
    %1662 = vmatpush.msra.mxu0 %v908
    %1663 = vmatpush.msra.mxu0 %v904
    %1664 = vmatpush.msra.mxu0 %v900
    %1665 = vmatpush.msra.mxu0 %v896
    %1666 = vmatpush.msra.mxu0 %v892
    %1667 = vmatpush.msra.mxu0 %v888
    %1668 = vmatpush.msra.mxu0 %v884
    %1669 = vmatpush.msra.mxu0 %v880
    %1670 = vmatpush.msra.mxu0 %v876
    %1671 = vmatpush.msra.mxu0 %v872
    %1672 = vmatmul.f32.gmra.mxu0 %v412
    %v1673 = vpop.f32.mrf.mxu0
    %v1674 = vadd.f32 %v1651, %v1673
    %1675 = vmatmul.f32.gmra.mxu0 %v420
    %v1676 = vpop.f32.mrf.mxu0
    %v1677 = vadd.f32 %v1654, %v1676
    %1678 = vdwg.mxu0
    %v1679 = vmax.f32 %v1122, 0.0
    %v1680 = vmax.f32 %v1306, 0.0
    %v1681 = vmax.f32 %v1490, 0.0
    %v1682 = vmax.f32 %v1674, 0.0
    %v1683 = vmax.f32 %v1125, 0.0
    %v1684 = vmax.f32 %v1309, 0.0
    %v1685 = vmax.f32 %v1493, 0.0
    %v1686 = vmax.f32 %v1677, 0.0
    %v1687 = vld [vmem:[#allocation11] sm:$0xff]
    %v1688 = vld [vmem:[#allocation11 + $0x8] sm:$0xff]
    %v1689 = vld [vmem:[#allocation11 + $0x10] sm:$0xff]
    %v1690 = vld [vmem:[#allocation11 + $0x18] sm:$0xff]
    %v1691 = vld [vmem:[#allocation11 + $0x20] sm:$0xff]
    %v1692 = vld [vmem:[#allocation11 + $0x28] sm:$0xff]
    %v1693 = vld [vmem:[#allocation11 + $0x30] sm:$0xff]
    %v1694 = vld [vmem:[#allocation11 + $0x38] sm:$0xff]
    %v1695 = vld [vmem:[#allocation11 + $0x40] sm:$0xff]
    %v1696 = vld [vmem:[#allocation11 + $0x48] sm:$0xff]
    %v1697 = vld [vmem:[#allocation11 + $0x50] sm:$0xff]
    %v1698 = vld [vmem:[#allocation11 + $0x58] sm:$0xff]
    %v1699 = vld [vmem:[#allocation11 + $0x60] sm:$0xff]
    %v1700 = vld [vmem:[#allocation11 + $0x68] sm:$0xff]
    %v1701 = vld [vmem:[#allocation11 + $0x70] sm:$0xff]
    %v1702 = vld [vmem:[#allocation11 + $0x78] sm:$0xff]
    %v1703 = vld [vmem:[#allocation11 + $0x80] sm:$0xff]
    %v1704 = vld [vmem:[#allocation11 + $0x88] sm:$0xff]
    %v1705 = vld [vmem:[#allocation11 + $0x90] sm:$0xff]
    %v1706 = vld [vmem:[#allocation11 + $0x98] sm:$0xff]
    %v1707 = vld [vmem:[#allocation11 + $0xa0] sm:$0xff]
    %v1708 = vld [vmem:[#allocation11 + $0xa8] sm:$0xff]
    %v1709 = vld [vmem:[#allocation11 + $0xb0] sm:$0xff]
    %v1710 = vld [vmem:[#allocation11 + $0xb8] sm:$0xff]
    %v1711 = vld [vmem:[#allocation11 + $0xc0] sm:$0xff]
    %v1712 = vld [vmem:[#allocation11 + $0xc8] sm:$0xff]
    %v1713 = vld [vmem:[#allocation11 + $0xd0] sm:$0xff]
    %v1714 = vld [vmem:[#allocation11 + $0xd8] sm:$0xff]
    %v1715 = vld [vmem:[#allocation11 + $0xe0] sm:$0xff]
    %v1716 = vld [vmem:[#allocation11 + $0xe8] sm:$0xff]
    %v1717 = vld [vmem:[#allocation11 + $0xf0] sm:$0xff]
    %v1718 = vld [vmem:[#allocation11 + $0xf8] sm:$0xff]
    %v1719 = vld [vmem:[#allocation11 + $0x100] sm:$0xff]
    %v1720 = vld [vmem:[#allocation11 + $0x108] sm:$0xff]
    %v1721 = vld [vmem:[#allocation11 + $0x110] sm:$0xff]
    %v1722 = vld [vmem:[#allocation11 + $0x118] sm:$0xff]
    %v1723 = vld [vmem:[#allocation11 + $0x120] sm:$0xff]
    %v1724 = vld [vmem:[#allocation11 + $0x128] sm:$0xff]
    %v1725 = vld [vmem:[#allocation11 + $0x130] sm:$0xff]
    %v1726 = vld [vmem:[#allocation11 + $0x138] sm:$0xff]
    %v1727 = vld [vmem:[#allocation11 + $0x140] sm:$0xff]
    %v1728 = vld [vmem:[#allocation11 + $0x148] sm:$0xff]
    %v1729 = vld [vmem:[#allocation11 + $0x150] sm:$0xff]
    %v1730 = vld [vmem:[#allocation11 + $0x158] sm:$0xff]
    %v1731 = vld [vmem:[#allocation11 + $0x160] sm:$0xff]
    %v1732 = vld [vmem:[#allocation11 + $0x168] sm:$0xff]
    %v1733 = vld [vmem:[#allocation11 + $0x170] sm:$0xff]
    %v1734 = vld [vmem:[#allocation11 + $0x178] sm:$0xff]
    %v1735 = vld [vmem:[#allocation11 + $0x180] sm:$0xff]
    %v1736 = vld [vmem:[#allocation11 + $0x188] sm:$0xff]
    %v1737 = vld [vmem:[#allocation11 + $0x190] sm:$0xff]
    %v1738 = vld [vmem:[#allocation11 + $0x198] sm:$0xff]
    %v1739 = vld [vmem:[#allocation11 + $0x1a0] sm:$0xff]
    %v1740 = vld [vmem:[#allocation11 + $0x1a8] sm:$0xff]
    %v1741 = vld [vmem:[#allocation11 + $0x1b0] sm:$0xff]
    %v1742 = vld [vmem:[#allocation11 + $0x1b8] sm:$0xff]
    %v1743 = vld [vmem:[#allocation11 + $0x1c0] sm:$0xff]
    %v1744 = vld [vmem:[#allocation11 + $0x1c8] sm:$0xff]
    %v1745 = vld [vmem:[#allocation11 + $0x1d0] sm:$0xff]
    %v1746 = vld [vmem:[#allocation11 + $0x1d8] sm:$0xff]
    %v1747 = vld [vmem:[#allocation11 + $0x1e0] sm:$0xff]
    %v1748 = vld [vmem:[#allocation11 + $0x1e8] sm:$0xff]
    %v1749 = vld [vmem:[#allocation11 + $0x1f0] sm:$0xff]
    %v1750 = vld [vmem:[#allocation11 + $0x1f8] sm:$0xff]
    %v1751 = vld [vmem:[#allocation13] sm:$0x1]
    %v1753 = vperm.slane %v1751, 0
    %1755 = vmatpush.msra.mxu0 %v1702
    %1756 = vmatpush.msra.mxu0 %v1701
    %1757 = vmatpush.msra.mxu0 %v1700
    %1758 = vmatpush.msra.mxu0 %v1699
    %1759 = vmatpush.msra.mxu0 %v1698
    %1760 = vmatpush.msra.mxu0 %v1697
    %1761 = vmatpush.msra.mxu0 %v1696
    %1762 = vmatpush.msra.mxu0 %v1695
    %1763 = vmatpush.msra.mxu0 %v1694
    %1764 = vmatpush.msra.mxu0 %v1693
    %1765 = vmatpush.msra.mxu0 %v1692
    %1766 = vmatpush.msra.mxu0 %v1691
    %1767 = vmatpush.msra.mxu0 %v1690
    %1768 = vmatpush.msra.mxu0 %v1689
    %1769 = vmatpush.msra.mxu0 %v1688
    %1770 = vmatpush.msra.mxu0 %v1687
    %1771 = vmatmul.f32.gmra.mxu0 %v1679
    %v1772 = vpop.f32.mrf.mxu0
    %v1773 = vadd.f32 %v1753, %v1772
    %1774 = vmatmul.f32.gmra.mxu0 %v1683
    %v1775 = vpop.f32.mrf.mxu0
    %v1776 = vadd.f32 %v1753, %v1775
    %1777 = vdwg.mxu0
    %1778 = vmatpush.msra.mxu0 %v1718
    %1779 = vmatpush.msra.mxu0 %v1717
    %1780 = vmatpush.msra.mxu0 %v1716
    %1781 = vmatpush.msra.mxu0 %v1715
    %1782 = vmatpush.msra.mxu0 %v1714
    %1783 = vmatpush.msra.mxu0 %v1713
    %1784 = vmatpush.msra.mxu0 %v1712
    %1785 = vmatpush.msra.mxu0 %v1711
    %1786 = vmatpush.msra.mxu0 %v1710
    %1787 = vmatpush.msra.mxu0 %v1709
    %1788 = vmatpush.msra.mxu0 %v1708
    %1789 = vmatpush.msra.mxu0 %v1707
    %1790 = vmatpush.msra.mxu0 %v1706
    %1791 = vmatpush.msra.mxu0 %v1705
    %1792 = vmatpush.msra.mxu0 %v1704
    %1793 = vmatpush.msra.mxu0 %v1703
    %1794 = vmatmul.f32.gmra.mxu0 %v1680
    %v1795 = vpop.f32.mrf.mxu0
    %v1796 = vadd.f32 %v1773, %v1795
    %1797 = vmatmul.f32.gmra.mxu0 %v1684
    %v1798 = vpop.f32.mrf.mxu0
    %v1799 = vadd.f32 %v1776, %v1798
    %1800 = vdwg.mxu0
    %1801 = vmatpush.msra.mxu0 %v1734
    %1802 = vmatpush.msra.mxu0 %v1733
    %1803 = vmatpush.msra.mxu0 %v1732
    %1804 = vmatpush.msra.mxu0 %v1731
    %1805 = vmatpush.msra.mxu0 %v1730
    %1806 = vmatpush.msra.mxu0 %v1729
    %1807 = vmatpush.msra.mxu0 %v1728
    %1808 = vmatpush.msra.mxu0 %v1727
    %1809 = vmatpush.msra.mxu0 %v1726
    %1810 = vmatpush.msra.mxu0 %v1725
    %1811 = vmatpush.msra.mxu0 %v1724
    %1812 = vmatpush.msra.mxu0 %v1723
    %1813 = vmatpush.msra.mxu0 %v1722
    %1814 = vmatpush.msra.mxu0 %v1721
    %1815 = vmatpush.msra.mxu0 %v1720
    %1816 = vmatpush.msra.mxu0 %v1719
    %1817 = vmatmul.f32.gmra.mxu0 %v1681
    %v1818 = vpop.f32.mrf.mxu0
    %v1819 = vadd.f32 %v1796, %v1818
    %1820 = vmatmul.f32.gmra.mxu0 %v1685
    %v1821 = vpop.f32.mrf.mxu0
    %v1822 = vadd.f32 %v1799, %v1821
    %1823 = vdwg.mxu0
    %1824 = vmatpush.msra.mxu0 %v1750
    %1825 = vmatpush.msra.mxu0 %v1749
    %1826 = vmatpush.msra.mxu0 %v1748
    %1827 = vmatpush.msra.mxu0 %v1747
    %1828 = vmatpush.msra.mxu0 %v1746
    %1829 = vmatpush.msra.mxu0 %v1745
    %1830 = vmatpush.msra.mxu0 %v1744
    %1831 = vmatpush.msra.mxu0 %v1743
    %1832 = vmatpush.msra.mxu0 %v1742
    %1833 = vmatpush.msra.mxu0 %v1741
    %1834 = vmatpush.msra.mxu0 %v1740
    %1835 = vmatpush.msra.mxu0 %v1739
    %1836 = vmatpush.msra.mxu0 %v1738
    %1837 = vmatpush.msra.mxu0 %v1737
    %1838 = vmatpush.msra.mxu0 %v1736
    %1839 = vmatpush.msra.mxu0 %v1735
    %1840 = vmatmul.f32.gmra.mxu0 %v1682
    %v1841 = vpop.f32.mrf.mxu0
    %v1842 = vadd.f32 %v1819, %v1841
    %1843 = vmatmul.f32.gmra.mxu0 %v1686
    %v1844 = vpop.f32.mrf.mxu0
    %v1845 = vadd.f32 %v1822, %v1844
    %1846 = vdwg.mxu0
    %1847 = vst [vmem:[#allocation14] sm:$0xff] %v1842
    %1848 = vst [vmem:[#allocation14 + $0x8] sm:$0xff] %v1845
    // Predicated region
    $region58: #{tpu_custom_call.1} parent=1 // pred_check
      _
    $region59: #{tpu_custom_call.1} parent=1 // pred_check_branch
      %1850 = sbr.rel (0) target = $region61
    $region60: #{tpu_custom_call.1} parent=1 // pred_region
      %1852 = vsyncadd [#allocation4], 0
      %s1853 = sshll.u32 [#allocation14], 4
      %s1854 = int_to_ptr.vmem [resolvable:$true] %s1853
      %s1855 = sshll.u32 %s7, 4
      %s1856 = int_to_ptr.hbm [resolvable:$true] %s1855
      %1861 = dma.vmem_to_hbm [thread:$0]  %s1854, 256, %s1856, [#allocation4], 128, 128, 8
    $region61: #{tpu_custom_call.1} parent=1 // pred_fallthru
      _
    // Predicated region
    $region62: #{tpu_custom_call.1} parent=1 // pred_check
      _
    $region63: #{tpu_custom_call.1} parent=1 // pred_check_branch
      %1863 = sbr.rel (0) target = $region65
    $region64: #{tpu_custom_call.1} parent=1 // pred_region
      %1865 = dma.done [#allocation4], 256
    $region65: #{tpu_custom_call.1} parent=1 // pred_fallthru
      _
    %1866 = vsyncpa [#allocation3], 1
    %1867 = vsyncpa [#allocation6], 1
    %1868 = vsyncpa [#allocation9], 1
    %1869 = vsyncpa [#allocation12], 1
    %1870 = vsyncpa [#allocation4], 1

</llo_original>
